<compile_context>
chip_gen: v7x
topology: tpu7x:2x2x1
jax: 0.10.0
libtpu: 0.0.40
codegen_flags: <defaults>
</compile_context>

<pallas_src>
import functools

import jax
import jax.numpy as jnp
from jax import lax
from jax.experimental import pallas as pl
from jax.experimental.pallas import tpu as pltpu

IMG = 28                        # MNIST spatial size (pinned by fc1 in_features = 9216)
PIX = IMG * IMG                 # 784 flat rows per sample (row = n*784 + h*28 + w)
PAD_ROWS = 64                   # tail pad: max tap offset is 2*28 + 2 = 58
C1, C2 = 32, 64                 # conv channel counts
POOL_HW = 12                    # pooled spatial size
FEAT = POOL_HW * POOL_HW * C2   # 9216
HID = 128                       # fc1 width (also the lane-dense padded fc2 width)
NCLS = 10
TAPS = [(kh, kw) for kh in range(3) for kw in range(3)]
CHUNK = 112                     # divides 784, multiple of 8: per-chunk accumulators fit in vregs
K_SPLIT = 4                     # fc1 K split: 4 x 2304 so the bf16 weight DMA pipelines


# ---------------------------------------------------------------------------
# Kernel 1: conv1 + ReLU + conv2 + ReLU + fused 2x2-pool/stride-2 subsample
# ---------------------------------------------------------------------------
def _conv_pool_kernel(x0_ref, w1_ref, b1_ref, w2_ref, b2_ref, out_ref,
                      x0b_scr, x1_scr, x2_scr, *, batch, rows, nchunks):
    f32 = jnp.float32
    bf16 = jnp.bfloat16

    # Stage 0: broadcast the single input channel across C1 lanes ONCE (hoisted out of the tap
    # loop) and fold the tail pad in-kernel (input arrives unpadded).
    def bcast_chunk(c, carry):
        r0 = pl.multiple_of(c * CHUNK, 8)
        x0b_scr[pl.ds(r0, CHUNK), :] = x0_ref[pl.ds(r0, CHUNK), :] * jnp.ones((1, C1), f32)
        return carry
    lax.fori_loop(0, nchunks, bcast_chunk, 0)
    x0b_scr[rows:rows + PAD_ROWS, :] = jnp.zeros((PAD_ROWS, C1), f32)

    # Stage 1: conv1 (1 -> 32) + ReLU. Nine shifted (CHUNK,32) VPU FMAs per row chunk; the
    # per-chunk accumulator stays in vregs (no spill between taps).
    def conv1_chunk(c, carry):
        r0 = pl.multiple_of(c * CHUNK, 8)
        acc = jnp.zeros((CHUNK, C1), f32) + b1_ref[...]
        for t, (kh, kw) in enumerate(TAPS):
            off = kh * IMG + kw
            acc = acc + x0b_scr[pl.ds(r0 + off, CHUNK), :] * w1_ref[pl.ds(t, 1), :]
        x1_scr[pl.ds(r0, CHUNK), :] = jnp.maximum(acc, 0.0)
        return carry
    lax.fori_loop(0, nchunks, conv1_chunk, 0)
    x1_scr[rows:rows + PAD_ROWS, :] = jnp.zeros((PAD_ROWS, C1), f32)

    # Stage 2: conv2 (32 -> 64) + ReLU. Nine shifted (CHUNK,32)@(32,64) bf16 MXU matmuls per
    # chunk, f32 accumulation (in-VMEM im2col via shifted row slices).
    def conv2_chunk(c, carry):
        r0 = pl.multiple_of(c * CHUNK, 8)
        acc = jnp.zeros((CHUNK, C2), f32) + b2_ref[...]
        for t, (kh, kw) in enumerate(TAPS):
            off = kh * IMG + kw
            acc = acc + jnp.dot(x1_scr[pl.ds(r0 + off, CHUNK), :].astype(bf16),
                                w2_ref[pl.ds(t * C1, C1), :],
                                preferred_element_type=f32)
        x2_scr[pl.ds(r0, CHUNK), :] = jnp.maximum(acc, 0.0)
        return carry
    lax.fori_loop(0, nchunks, conv2_chunk, 0)

    # Stage 3: fused 2x2 max-pool + stride-2 subsample. Only the 144 kept rows per sample are
    # written (bf16), in (h', w', c) order; invalid flat rows (h,w >= 24) are never read.
    for n in range(batch):
        for hp in range(POOL_HW):
            base = n * PIX + 2 * hp * IMG
            p00 = x2_scr[pl.ds(base, POOL_HW, stride=2), :]
            p01 = x2_scr[pl.ds(base + 1, POOL_HW, stride=2), :]
            p10 = x2_scr[pl.ds(base + IMG, POOL_HW, stride=2), :]
            p11 = x2_scr[pl.ds(base + IMG + 1, POOL_HW, stride=2), :]
            m = jnp.maximum(jnp.maximum(p00, p01), jnp.maximum(p10, p11))
            out_ref[n * POOL_HW + hp, :, :] = m.astype(bf16)


def conv_pool(x0, w1t, b1, w2t, b2, *, batch):
    rows = batch * PIX
    padded = rows + PAD_ROWS
    assert rows % CHUNK == 0
    nchunks = rows // CHUNK
    kernel = functools.partial(_conv_pool_kernel, batch=batch, rows=rows, nchunks=nchunks)
    return pl.pallas_call(
        kernel,
        out_shape=jax.ShapeDtypeStruct((batch * POOL_HW, POOL_HW, C2), jnp.bfloat16),
        grid=(1,),
        in_specs=[
            pl.BlockSpec((rows, 1), lambda i: (0, 0)),
            pl.BlockSpec((9, C1), lambda i: (0, 0)),
            pl.BlockSpec((1, C1), lambda i: (0, 0)),
            pl.BlockSpec((9 * C1, C2), lambda i: (0, 0)),
            pl.BlockSpec((1, C2), lambda i: (0, 0)),
        ],
        out_specs=pl.BlockSpec((batch * POOL_HW, POOL_HW, C2), lambda i: (0, 0, 0)),
        scratch_shapes=[
            pltpu.VMEM((padded, C1), jnp.float32),   # input broadcast to 32 lanes (padded)
            pltpu.VMEM((padded, C1), jnp.float32),   # conv1 activations (padded)
            pltpu.VMEM((rows, C2), jnp.float32),     # conv2 activations
        ],
        compiler_params=pltpu.CompilerParams(
            dimension_semantics=("arbitrary",),
            vmem_limit_bytes=32 * 1024 * 1024,
        ),
    )(x0, w1t, b1, w2t, b2)


# ---------------------------------------------------------------------------
# Kernel 2: fc1 (bf16 weights, K-split grid, f32 accumulate) + ReLU + fc2 (128 lane-dense)
# ---------------------------------------------------------------------------
def _fc_kernel(x_ref, w1_ref, b1_ref, w2_ref, b2_ref, o_ref, acc_ref):
    k = pl.program_id(0)

    @pl.when(k == 0)
    def _():
        acc_ref[...] = jnp.zeros_like(acc_ref)

    acc_ref[...] += jnp.dot(x_ref[...], w1_ref[...], preferred_element_type=jnp.float32)

    @pl.when(k == pl.num_programs(0) - 1)
    def _():
        h = jnp.maximum(acc_ref[...] + b1_ref[...], 0.0)
        o_ref[...] = jnp.dot(h, w2_ref[...], preferred_element_type=jnp.float32) + b2_ref[...]


def fc_stack(feats, w1, b1, w2, b2):
    n = feats.shape[0]
    kc = FEAT // K_SPLIT
    return pl.pallas_call(
        _fc_kernel,
        out_shape=jax.ShapeDtypeStruct((n, HID), jnp.float32),
        grid=(K_SPLIT,),
        in_specs=[
            pl.BlockSpec((n, kc), lambda k: (0, k)),
            pl.BlockSpec((kc, HID), lambda k: (k, 0)),
            pl.BlockSpec((1, HID), lambda k: (0, 0)),
            pl.BlockSpec((HID, HID), lambda k: (0, 0)),
            pl.BlockSpec((1, HID), lambda k: (0, 0)),
        ],
        out_specs=pl.BlockSpec((n, HID), lambda k: (0, 0)),
        scratch_shapes=[pltpu.VMEM((n, HID), jnp.float32)],
        compiler_params=pltpu.CompilerParams(
            dimension_semantics=("arbitrary",),
            vmem_limit_bytes=32 * 1024 * 1024,
        ),
    )(feats, w1, b1, w2, b2)


# ---------------------------------------------------------------------------
# Params (PyTorch layout) + one-time layout preparation (outside the hot path)
# ---------------------------------------------------------------------------
def init_params(key):
    ks = jax.random.split(key, 8)

    def u(k, shape, fan_in):
        bound = 1.0 / jnp.sqrt(float(fan_in))
        return jax.random.uniform(k, shape, jnp.float32, -bound, bound)

    return {
        "conv1_w": u(ks[0], (32, 1, 3, 3), 1 * 9),
        "conv1_b": u(ks[1], (32,), 1 * 9),
        "conv2_w": u(ks[2], (64, 32, 3, 3), 32 * 9),
        "conv2_b": u(ks[3], (64,), 32 * 9),
        "fc1_w": u(ks[4], (128, 9216), 9216),
        "fc1_b": u(ks[5], (128,), 9216),
        "fc2_w": u(ks[6], (10, 128), 128),
        "fc2_b": u(ks[7], (10,), 128),
    }


def prepare_params(p):
    """One-time weight layout prep (no per-forward transposes)."""
    # conv1 (32,1,3,3) -> (tap = kh*3+kw, cout)
    w1t = jnp.transpose(p["conv1_w"], (2, 3, 1, 0)).reshape(9, C1)
    b1 = p["conv1_b"].reshape(1, C1)
    # conv2 (64,32,3,3) -> (tap*32 + cin, cout), bf16 for single-pass MXU issue.
    w2t = jnp.transpose(p["conv2_w"], (2, 3, 1, 0)).reshape(9 * C1, C2).astype(jnp.bfloat16)
    b2 = p["conv2_b"].reshape(1, C2)
    # fc1 (128, 9216): PyTorch column order is (c, h, w); permute rows to the (h', w', c) order
    # kernel 1 emits (folds the layout change into the weight), store bf16.
    fw1 = p["fc1_w"].reshape(HID, C2, POOL_HW, POOL_HW)
    fw1 = jnp.transpose(fw1, (2, 3, 1, 0)).reshape(FEAT, HID).astype(jnp.bfloat16)
    fb1 = p["fc1_b"].reshape(1, HID)
    # fc2 (10,128) -> (128, 128): transposed + zero-padded to lane-dense 128 outputs.
    fw2 = jnp.pad(p["fc2_w"].T, ((0, 0), (0, HID - NCLS)))
    fb2 = jnp.pad(p["fc2_b"].reshape(1, NCLS), ((0, 0), (0, HID - NCLS)))
    return {"w1": w1t, "b1": b1, "w2": w2t, "b2": b2,
            "fc1_w": fw1, "fc1_b": fb1, "fc2_w": fw2, "fc2_b": fb2}


# ---------------------------------------------------------------------------
# Forward
# ---------------------------------------------------------------------------
@jax.jit
def mnist_forward(prep, x_nchw):
    n = x_nchw.shape[0]
    # NCHW with C=1 flattens directly into the flat (n*784 + h*28 + w) row space (free reshape).
    x0 = x_nchw.reshape(n * PIX, 1)
    pooled = conv_pool(x0, prep["w1"], prep["b1"], prep["w2"], prep["b2"], batch=n)
    # TODO(synk): Dropout2d(0.25) is the identity in eval mode; training-mode dropout omitted.
    feats = pooled.reshape(n, FEAT)          # free reshape at the HBM boundary, (h',w',c) order
    logits = fc_stack(feats, prep["fc1_w"], prep["fc1_b"], prep["fc2_w"], prep["fc2_b"])
    return logits[:, :NCLS]


if __name__ == "__main__":
    key = jax.random.PRNGKey(0)
    pkey, xkey = jax.random.split(key)
    params = init_params(pkey)
    prep = prepare_params(params)            # one-time layout prep, outside the jitted forward
    # fc1's in_features = 9216 pins the input to 1x28x28; small batch = 2.
    x = jax.random.normal(xkey, (2, 1, 28, 28), jnp.float32)
    out = mnist_forward(prep, x)
    out = jax.block_until_ready(out)
    assert out.shape == (2, 10) and out.dtype == jnp.float32
    print("KERNEL_OK")
</pallas_src>

<mosaic_0001>
module attributes {stable_mosaic.version = 11 : i64} {
  func.func @_conv_pool_kernel(%arg0: i32, %arg1: memref<1568x1xf32, #tpu.memory_space<vmem>>, %arg2: memref<9x32xf32, #tpu.memory_space<vmem>>, %arg3: memref<1x32xf32, #tpu.memory_space<vmem>>, %arg4: memref<288x64xbf16, #tpu.memory_space<vmem>>, %arg5: memref<1x64xf32, #tpu.memory_space<vmem>>, %arg6: memref<24x12x64xbf16, #tpu.memory_space<vmem>>, %arg7: memref<1632x32xf32, #tpu.memory_space<vmem>>, %arg8: memref<1632x32xf32, #tpu.memory_space<vmem>>, %arg9: memref<1568x64xf32, #tpu.memory_space<vmem>>) attributes {dimension_semantics = [#tpu.dimension_semantics<arbitrary>], iteration_bounds = array<i64: 1>, scalar_prefetch = 0 : i64, scratch_operands = 3 : i64, tpu.core_type = #tpu.core_type<tc>, window_params = [{pipeline_mode = #tpu.pipeline_mode<synchronous>, transform_indices = @transform_0, window_bounds = array<i64: 1568, 1>}, {pipeline_mode = #tpu.pipeline_mode<synchronous>, transform_indices = @transform_1, window_bounds = array<i64: 9, 32>}, {pipeline_mode = #tpu.pipeline_mode<synchronous>, transform_indices = @transform_2, window_bounds = array<i64: 1, 32>}, {pipeline_mode = #tpu.pipeline_mode<synchronous>, transform_indices = @transform_3, window_bounds = array<i64: 288, 64>}, {pipeline_mode = #tpu.pipeline_mode<synchronous>, transform_indices = @transform_4, window_bounds = array<i64: 1, 64>}, {pipeline_mode = #tpu.pipeline_mode<synchronous>, transform_indices = @transform_5, window_bounds = array<i64: 24, 12, 64>}]} {
    %c0_i32 = arith.constant 0 : i32
    %c14_i32 = arith.constant 14 : i32
    %0 = arith.addi %c0_i32, %c14_i32 : i32
    %c1_i32 = arith.constant 1 : i32
    scf.for %arg10 = %c0_i32 to %0 step %c1_i32  : i32 {
      %c112_i32 = arith.constant 112 : i32
      %271 = arith.muli %arg10, %c112_i32 : i32
      %272 = tpu.assume_multiple %271, 8 : i32
      %273 = arith.index_cast %272 : i32 to index
      %c0_159 = arith.constant 0 : index
      %274 = vector.load %arg1[%273, %c0_159] : memref<1568x1xf32, #tpu.memory_space<vmem>>, vector<112x1xf32>
      %cst_160 = arith.constant 1.000000e+00 : f32
      %275 = vector.broadcast %cst_160 : f32 to vector<1x32xf32>
      %276 = vector.broadcast %274 : vector<112x1xf32> to vector<112x32xf32>
      %277 = vector.broadcast %275 : vector<1x32xf32> to vector<112x32xf32>
      %278 = arith.mulf %276, %277 : vector<112x32xf32>
      %279 = arith.index_cast %272 : i32 to index
      %c0_161 = arith.constant 0 : index
      %280 = vector.load %arg7[%279, %c0_161] : memref<1632x32xf32, #tpu.memory_space<vmem>>, vector<112x32xf32>
      tpu.vector_store %arg7[%279, %c0_161], %278 {strides = array<i32>} : memref<1632x32xf32, #tpu.memory_space<vmem>>, vector<112x32xf32>,
    }
    %c14_i32_0 = arith.constant 14 : i32
    %cst = arith.constant 0.000000e+00 : f32
    %1 = vector.broadcast %cst : f32 to vector<64x32xf32>
    %c1568 = arith.constant 1568 : index
    %c0 = arith.constant 0 : index
    %2 = vector.load %arg7[%c1568, %c0] : memref<1632x32xf32, #tpu.memory_space<vmem>>, vector<64x32xf32>
    tpu.vector_store %arg7[%c1568, %c0], %1 {strides = array<i32>} : memref<1632x32xf32, #tpu.memory_space<vmem>>, vector<64x32xf32>,
    %c0_i32_1 = arith.constant 0 : i32
    %c14_i32_2 = arith.constant 14 : i32
    %3 = arith.addi %c0_i32_1, %c14_i32_2 : i32
    %c1_i32_3 = arith.constant 1 : i32
    scf.for %arg10 = %c0_i32_1 to %3 step %c1_i32_3  : i32 {
      %c112_i32 = arith.constant 112 : i32
      %271 = arith.muli %arg10, %c112_i32 : i32
      %272 = tpu.assume_multiple %271, 8 : i32
      %cst_159 = arith.constant 0.000000e+00 : f32
      %273 = vector.broadcast %cst_159 : f32 to vector<112x32xf32>
      %c0_160 = arith.constant 0 : index
      %c0_161 = arith.constant 0 : index
      %274 = vector.load %arg3[%c0_160, %c0_161] : memref<1x32xf32, #tpu.memory_space<vmem>>, vector<1x32xf32>
      %275 = vector.broadcast %274 : vector<1x32xf32> to vector<112x32xf32>
      %276 = arith.addf %273, %275 : vector<112x32xf32>
      %c0_i32_162 = arith.constant 0 : i32
      %277 = arith.addi %272, %c0_i32_162 : i32
      %278 = arith.index_cast %277 : i32 to index
      %c0_163 = arith.constant 0 : index
      %279 = vector.load %arg7[%278, %c0_163] : memref<1632x32xf32, #tpu.memory_space<vmem>>, vector<112x32xf32>
      %c0_164 = arith.constant 0 : index
      %c0_165 = arith.constant 0 : index
      %280 = vector.load %arg2[%c0_164, %c0_165] : memref<9x32xf32, #tpu.memory_space<vmem>>, vector<1x32xf32>
      %281 = vector.broadcast %280 : vector<1x32xf32> to vector<112x32xf32>
      %282 = arith.mulf %279, %281 : vector<112x32xf32>
      %283 = arith.addf %276, %282 : vector<112x32xf32>
      %c1_i32_166 = arith.constant 1 : i32
      %284 = arith.addi %272, %c1_i32_166 : i32
      %285 = arith.index_cast %284 : i32 to index
      %c0_167 = arith.constant 0 : index
      %286 = vector.load %arg7[%285, %c0_167] : memref<1632x32xf32, #tpu.memory_space<vmem>>, vector<112x32xf32>
      %c1_168 = arith.constant 1 : index
      %c0_169 = arith.constant 0 : index
      %287 = vector.load %arg2[%c1_168, %c0_169] : memref<9x32xf32, #tpu.memory_space<vmem>>, vector<1x32xf32>
      %288 = vector.broadcast %287 : vector<1x32xf32> to vector<112x32xf32>
      %289 = arith.mulf %286, %288 : vector<112x32xf32>
      %290 = arith.addf %283, %289 : vector<112x32xf32>
      %c2_i32 = arith.constant 2 : i32
      %291 = arith.addi %272, %c2_i32 : i32
      %292 = arith.index_cast %291 : i32 to index
      %c0_170 = arith.constant 0 : index
      %293 = vector.load %arg7[%292, %c0_170] : memref<1632x32xf32, #tpu.memory_space<vmem>>, vector<112x32xf32>
      %c2_171 = arith.constant 2 : index
      %c0_172 = arith.constant 0 : index
      %294 = vector.load %arg2[%c2_171, %c0_172] : memref<9x32xf32, #tpu.memory_space<vmem>>, vector<1x32xf32>
      %295 = vector.broadcast %294 : vector<1x32xf32> to vector<112x32xf32>
      %296 = arith.mulf %293, %295 : vector<112x32xf32>
      %297 = arith.addf %290, %296 : vector<112x32xf32>
      %c28_i32 = arith.constant 28 : i32
      %298 = arith.addi %272, %c28_i32 : i32
      %299 = arith.index_cast %298 : i32 to index
      %c0_173 = arith.constant 0 : index
      %300 = vector.load %arg7[%299, %c0_173] : memref<1632x32xf32, #tpu.memory_space<vmem>>, vector<112x32xf32>
      %c3_174 = arith.constant 3 : index
      %c0_175 = arith.constant 0 : index
      %301 = vector.load %arg2[%c3_174, %c0_175] : memref<9x32xf32, #tpu.memory_space<vmem>>, vector<1x32xf32>
      %302 = vector.broadcast %301 : vector<1x32xf32> to vector<112x32xf32>
      %303 = arith.mulf %300, %302 : vector<112x32xf32>
      %304 = arith.addf %297, %303 : vector<112x32xf32>
      %c29_i32 = arith.constant 29 : i32
      %305 = arith.addi %272, %c29_i32 : i32
      %306 = arith.index_cast %305 : i32 to index
      %c0_176 = arith.constant 0 : index
      %307 = vector.load %arg7[%306, %c0_176] : memref<1632x32xf32, #tpu.memory_space<vmem>>, vector<112x32xf32>
      %c4_177 = arith.constant 4 : index
      %c0_178 = arith.constant 0 : index
      %308 = vector.load %arg2[%c4_177, %c0_178] : memref<9x32xf32, #tpu.memory_space<vmem>>, vector<1x32xf32>
      %309 = vector.broadcast %308 : vector<1x32xf32> to vector<112x32xf32>
      %310 = arith.mulf %307, %309 : vector<112x32xf32>
      %311 = arith.addf %304, %310 : vector<112x32xf32>
      %c30_i32 = arith.constant 30 : i32
      %312 = arith.addi %272, %c30_i32 : i32
      %313 = arith.index_cast %312 : i32 to index
      %c0_179 = arith.constant 0 : index
      %314 = vector.load %arg7[%313, %c0_179] : memref<1632x32xf32, #tpu.memory_space<vmem>>, vector<112x32xf32>
      %c5_180 = arith.constant 5 : index
      %c0_181 = arith.constant 0 : index
      %315 = vector.load %arg2[%c5_180, %c0_181] : memref<9x32xf32, #tpu.memory_space<vmem>>, vector<1x32xf32>
      %316 = vector.broadcast %315 : vector<1x32xf32> to vector<112x32xf32>
      %317 = arith.mulf %314, %316 : vector<112x32xf32>
      %318 = arith.addf %311, %317 : vector<112x32xf32>
      %c56_i32 = arith.constant 56 : i32
      %319 = arith.addi %272, %c56_i32 : i32
      %320 = arith.index_cast %319 : i32 to index
      %c0_182 = arith.constant 0 : index
      %321 = vector.load %arg7[%320, %c0_182] : memref<1632x32xf32, #tpu.memory_space<vmem>>, vector<112x32xf32>
      %c6_183 = arith.constant 6 : index
      %c0_184 = arith.constant 0 : index
      %322 = vector.load %arg2[%c6_183, %c0_184] : memref<9x32xf32, #tpu.memory_space<vmem>>, vector<1x32xf32>
      %323 = vector.broadcast %322 : vector<1x32xf32> to vector<112x32xf32>
      %324 = arith.mulf %321, %323 : vector<112x32xf32>
      %325 = arith.addf %318, %324 : vector<112x32xf32>
      %c57_i32 = arith.constant 57 : i32
      %326 = arith.addi %272, %c57_i32 : i32
      %327 = arith.index_cast %326 : i32 to index
      %c0_185 = arith.constant 0 : index
      %328 = vector.load %arg7[%327, %c0_185] : memref<1632x32xf32, #tpu.memory_space<vmem>>, vector<112x32xf32>
      %c7_186 = arith.constant 7 : index
      %c0_187 = arith.constant 0 : index
      %329 = vector.load %arg2[%c7_186, %c0_187] : memref<9x32xf32, #tpu.memory_space<vmem>>, vector<1x32xf32>
      %330 = vector.broadcast %329 : vector<1x32xf32> to vector<112x32xf32>
      %331 = arith.mulf %328, %330 : vector<112x32xf32>
      %332 = arith.addf %325, %331 : vector<112x32xf32>
      %c58_i32 = arith.constant 58 : i32
      %333 = arith.addi %272, %c58_i32 : i32
      %334 = arith.index_cast %333 : i32 to index
      %c0_188 = arith.constant 0 : index
      %335 = vector.load %arg7[%334, %c0_188] : memref<1632x32xf32, #tpu.memory_space<vmem>>, vector<112x32xf32>
      %c8_189 = arith.constant 8 : index
      %c0_190 = arith.constant 0 : index
      %336 = vector.load %arg2[%c8_189, %c0_190] : memref<9x32xf32, #tpu.memory_space<vmem>>, vector<1x32xf32>
      %337 = vector.broadcast %336 : vector<1x32xf32> to vector<112x32xf32>
      %338 = arith.mulf %335, %337 : vector<112x32xf32>
      %339 = arith.addf %332, %338 : vector<112x32xf32>
      %cst_191 = arith.constant 0.000000e+00 : f32
      %340 = vector.broadcast %cst_191 : f32 to vector<112x32xf32>
      %341 = arith.maximumf %339, %340 : vector<112x32xf32>
      %342 = arith.index_cast %272 : i32 to index
      %c0_192 = arith.constant 0 : index
      %343 = vector.load %arg8[%342, %c0_192] : memref<1632x32xf32, #tpu.memory_space<vmem>>, vector<112x32xf32>
      tpu.vector_store %arg8[%342, %c0_192], %341 {strides = array<i32>} : memref<1632x32xf32, #tpu.memory_space<vmem>>, vector<112x32xf32>,
    }
    %c14_i32_4 = arith.constant 14 : i32
    %cst_5 = arith.constant 0.000000e+00 : f32
    %4 = vector.broadcast %cst_5 : f32 to vector<64x32xf32>
    %c1568_6 = arith.constant 1568 : index
    %c0_7 = arith.constant 0 : index
    %5 = vector.load %arg8[%c1568_6, %c0_7] : memref<1632x32xf32, #tpu.memory_space<vmem>>, vector<64x32xf32>
    tpu.vector_store %arg8[%c1568_6, %c0_7], %4 {strides = array<i32>} : memref<1632x32xf32, #tpu.memory_space<vmem>>, vector<64x32xf32>,
    %c0_i32_8 = arith.constant 0 : i32
    %c14_i32_9 = arith.constant 14 : i32
    %6 = arith.addi %c0_i32_8, %c14_i32_9 : i32
    %c1_i32_10 = arith.constant 1 : i32
    scf.for %arg10 = %c0_i32_8 to %6 step %c1_i32_10  : i32 {
      %c112_i32 = arith.constant 112 : i32
      %271 = arith.muli %arg10, %c112_i32 : i32
      %272 = tpu.assume_multiple %271, 8 : i32
      %cst_159 = arith.constant 0.000000e+00 : f32
      %273 = vector.broadcast %cst_159 : f32 to vector<112x64xf32>
      %c0_160 = arith.constant 0 : index
      %c0_161 = arith.constant 0 : index
      %274 = vector.load %arg5[%c0_160, %c0_161] : memref<1x64xf32, #tpu.memory_space<vmem>>, vector<1x64xf32>
      %275 = vector.broadcast %274 : vector<1x64xf32> to vector<112x64xf32>
      %276 = arith.addf %273, %275 : vector<112x64xf32>
      %c0_i32_162 = arith.constant 0 : i32
      %277 = arith.addi %272, %c0_i32_162 : i32
      %278 = arith.index_cast %277 : i32 to index
      %c0_163 = arith.constant 0 : index
      %279 = vector.load %arg8[%278, %c0_163] : memref<1632x32xf32, #tpu.memory_space<vmem>>, vector<112x32xf32>
      %280 = arith.truncf %279 : vector<112x32xf32> to vector<112x32xbf16>
      %c0_164 = arith.constant 0 : index
      %c0_165 = arith.constant 0 : index
      %281 = vector.load %arg4[%c0_164, %c0_165] : memref<288x64xbf16, #tpu.memory_space<vmem>>, vector<32x64xbf16>
      %cst_166 = arith.constant dense<0.000000e+00> : vector<112x64xf32>
      %282 = tpu.matmul %280, %281, %cst_166 {dimension_numbers = #tpu.dot_dimension_numbers<[1], [0], [0], [1], [0, 0, 1, 1], [], []>} : vector<112x32xbf16>, vector<32x64xbf16>, vector<112x64xf32> -> vector<112x64xf32>
      %283 = arith.addf %276, %282 : vector<112x64xf32>
      %c1_i32_167 = arith.constant 1 : i32
      %284 = arith.addi %272, %c1_i32_167 : i32
      %285 = arith.index_cast %284 : i32 to index
      %c0_168 = arith.constant 0 : index
      %286 = vector.load %arg8[%285, %c0_168] : memref<1632x32xf32, #tpu.memory_space<vmem>>, vector<112x32xf32>
      %287 = arith.truncf %286 : vector<112x32xf32> to vector<112x32xbf16>
      %c32 = arith.constant 32 : index
      %c0_169 = arith.constant 0 : index
      %288 = vector.load %arg4[%c32, %c0_169] : memref<288x64xbf16, #tpu.memory_space<vmem>>, vector<32x64xbf16>
      %cst_170 = arith.constant dense<0.000000e+00> : vector<112x64xf32>
      %289 = tpu.matmul %287, %288, %cst_170 {dimension_numbers = #tpu.dot_dimension_numbers<[1], [0], [0], [1], [0, 0, 1, 1], [], []>} : vector<112x32xbf16>, vector<32x64xbf16>, vector<112x64xf32> -> vector<112x64xf32>
      %290 = arith.addf %283, %289 : vector<112x64xf32>
      %c2_i32 = arith.constant 2 : i32
      %291 = arith.addi %272, %c2_i32 : i32
      %292 = arith.index_cast %291 : i32 to index
      %c0_171 = arith.constant 0 : index
      %293 = vector.load %arg8[%292, %c0_171] : memref<1632x32xf32, #tpu.memory_space<vmem>>, vector<112x32xf32>
      %294 = arith.truncf %293 : vector<112x32xf32> to vector<112x32xbf16>
      %c64 = arith.constant 64 : index
      %c0_172 = arith.constant 0 : index
      %295 = vector.load %arg4[%c64, %c0_172] : memref<288x64xbf16, #tpu.memory_space<vmem>>, vector<32x64xbf16>
      %cst_173 = arith.constant dense<0.000000e+00> : vector<112x64xf32>
      %296 = tpu.matmul %294, %295, %cst_173 {dimension_numbers = #tpu.dot_dimension_numbers<[1], [0], [0], [1], [0, 0, 1, 1], [], []>} : vector<112x32xbf16>, vector<32x64xbf16>, vector<112x64xf32> -> vector<112x64xf32>
      %297 = arith.addf %290, %296 : vector<112x64xf32>
      %c28_i32 = arith.constant 28 : i32
      %298 = arith.addi %272, %c28_i32 : i32
      %299 = arith.index_cast %298 : i32 to index
      %c0_174 = arith.constant 0 : index
      %300 = vector.load %arg8[%299, %c0_174] : memref<1632x32xf32, #tpu.memory_space<vmem>>, vector<112x32xf32>
      %301 = arith.truncf %300 : vector<112x32xf32> to vector<112x32xbf16>
      %c96 = arith.constant 96 : index
      %c0_175 = arith.constant 0 : index
      %302 = vector.load %arg4[%c96, %c0_175] : memref<288x64xbf16, #tpu.memory_space<vmem>>, vector<32x64xbf16>
      %cst_176 = arith.constant dense<0.000000e+00> : vector<112x64xf32>
      %303 = tpu.matmul %301, %302, %cst_176 {dimension_numbers = #tpu.dot_dimension_numbers<[1], [0], [0], [1], [0, 0, 1, 1], [], []>} : vector<112x32xbf16>, vector<32x64xbf16>, vector<112x64xf32> -> vector<112x64xf32>
      %304 = arith.addf %297, %303 : vector<112x64xf32>
      %c29_i32 = arith.constant 29 : i32
      %305 = arith.addi %272, %c29_i32 : i32
      %306 = arith.index_cast %305 : i32 to index
      %c0_177 = arith.constant 0 : index
      %307 = vector.load %arg8[%306, %c0_177] : memref<1632x32xf32, #tpu.memory_space<vmem>>, vector<112x32xf32>
      %308 = arith.truncf %307 : vector<112x32xf32> to vector<112x32xbf16>
      %c128 = arith.constant 128 : index
      %c0_178 = arith.constant 0 : index
      %309 = vector.load %arg4[%c128, %c0_178] : memref<288x64xbf16, #tpu.memory_space<vmem>>, vector<32x64xbf16>
      %cst_179 = arith.constant dense<0.000000e+00> : vector<112x64xf32>
      %310 = tpu.matmul %308, %309, %cst_179 {dimension_numbers = #tpu.dot_dimension_numbers<[1], [0], [0], [1], [0, 0, 1, 1], [], []>} : vector<112x32xbf16>, vector<32x64xbf16>, vector<112x64xf32> -> vector<112x64xf32>
      %311 = arith.addf %304, %310 : vector<112x64xf32>
      %c30_i32 = arith.constant 30 : i32
      %312 = arith.addi %272, %c30_i32 : i32
      %313 = arith.index_cast %312 : i32 to index
      %c0_180 = arith.constant 0 : index
      %314 = vector.load %arg8[%313, %c0_180] : memref<1632x32xf32, #tpu.memory_space<vmem>>, vector<112x32xf32>
      %315 = arith.truncf %314 : vector<112x32xf32> to vector<112x32xbf16>
      %c160 = arith.constant 160 : index
      %c0_181 = arith.constant 0 : index
      %316 = vector.load %arg4[%c160, %c0_181] : memref<288x64xbf16, #tpu.memory_space<vmem>>, vector<32x64xbf16>
      %cst_182 = arith.constant dense<0.000000e+00> : vector<112x64xf32>
      %317 = tpu.matmul %315, %316, %cst_182 {dimension_numbers = #tpu.dot_dimension_numbers<[1], [0], [0], [1], [0, 0, 1, 1], [], []>} : vector<112x32xbf16>, vector<32x64xbf16>, vector<112x64xf32> -> vector<112x64xf32>
      %318 = arith.addf %311, %317 : vector<112x64xf32>
      %c56_i32 = arith.constant 56 : i32
      %319 = arith.addi %272, %c56_i32 : i32
      %320 = arith.index_cast %319 : i32 to index
      %c0_183 = arith.constant 0 : index
      %321 = vector.load %arg8[%320, %c0_183] : memref<1632x32xf32, #tpu.memory_space<vmem>>, vector<112x32xf32>
      %322 = arith.truncf %321 : vector<112x32xf32> to vector<112x32xbf16>
      %c192 = arith.constant 192 : index
      %c0_184 = arith.constant 0 : index
      %323 = vector.load %arg4[%c192, %c0_184] : memref<288x64xbf16, #tpu.memory_space<vmem>>, vector<32x64xbf16>
      %cst_185 = arith.constant dense<0.000000e+00> : vector<112x64xf32>
      %324 = tpu.matmul %322, %323, %cst_185 {dimension_numbers = #tpu.dot_dimension_numbers<[1], [0], [0], [1], [0, 0, 1, 1], [], []>} : vector<112x32xbf16>, vector<32x64xbf16>, vector<112x64xf32> -> vector<112x64xf32>
      %325 = arith.addf %318, %324 : vector<112x64xf32>
      %c57_i32 = arith.constant 57 : i32
      %326 = arith.addi %272, %c57_i32 : i32
      %327 = arith.index_cast %326 : i32 to index
      %c0_186 = arith.constant 0 : index
      %328 = vector.load %arg8[%327, %c0_186] : memref<1632x32xf32, #tpu.memory_space<vmem>>, vector<112x32xf32>
      %329 = arith.truncf %328 : vector<112x32xf32> to vector<112x32xbf16>
      %c224_187 = arith.constant 224 : index
      %c0_188 = arith.constant 0 : index
      %330 = vector.load %arg4[%c224_187, %c0_188] : memref<288x64xbf16, #tpu.memory_space<vmem>>, vector<32x64xbf16>
      %cst_189 = arith.constant dense<0.000000e+00> : vector<112x64xf32>
      %331 = tpu.matmul %329, %330, %cst_189 {dimension_numbers = #tpu.dot_dimension_numbers<[1], [0], [0], [1], [0, 0, 1, 1], [], []>} : vector<112x32xbf16>, vector<32x64xbf16>, vector<112x64xf32> -> vector<112x64xf32>
      %332 = arith.addf %325, %331 : vector<112x64xf32>
      %c58_i32 = arith.constant 58 : i32
      %333 = arith.addi %272, %c58_i32 : i32
      %334 = arith.index_cast %333 : i32 to index
      %c0_190 = arith.constant 0 : index
      %335 = vector.load %arg8[%334, %c0_190] : memref<1632x32xf32, #tpu.memory_space<vmem>>, vector<112x32xf32>
      %336 = arith.truncf %335 : vector<112x32xf32> to vector<112x32xbf16>
      %c256 = arith.constant 256 : index
      %c0_191 = arith.constant 0 : index
      %337 = vector.load %arg4[%c256, %c0_191] : memref<288x64xbf16, #tpu.memory_space<vmem>>, vector<32x64xbf16>
      %cst_192 = arith.constant dense<0.000000e+00> : vector<112x64xf32>
      %338 = tpu.matmul %336, %337, %cst_192 {dimension_numbers = #tpu.dot_dimension_numbers<[1], [0], [0], [1], [0, 0, 1, 1], [], []>} : vector<112x32xbf16>, vector<32x64xbf16>, vector<112x64xf32> -> vector<112x64xf32>
      %339 = arith.addf %332, %338 : vector<112x64xf32>
      %cst_193 = arith.constant 0.000000e+00 : f32
      %340 = vector.broadcast %cst_193 : f32 to vector<112x64xf32>
      %341 = arith.maximumf %339, %340 : vector<112x64xf32>
      %342 = arith.index_cast %272 : i32 to index
      %c0_194 = arith.constant 0 : index
      %343 = vector.load %arg9[%342, %c0_194] : memref<1568x64xf32, #tpu.memory_space<vmem>>, vector<112x64xf32>
      tpu.vector_store %arg9[%342, %c0_194], %341 {strides = array<i32>} : memref<1568x64xf32, #tpu.memory_space<vmem>>, vector<112x64xf32>,
    }
    %c14_i32_11 = arith.constant 14 : i32
    %c0_12 = arith.constant 0 : index
    %c0_13 = arith.constant 0 : index
    %7 = tpu.strided_load %arg9[%c0_12, %c0_13] {strides = array<i32: 2, 1>} : memref<1568x64xf32, #tpu.memory_space<vmem>>, vector<12x64xf32>
    %c1 = arith.constant 1 : index
    %c0_14 = arith.constant 0 : index
    %8 = tpu.strided_load %arg9[%c1, %c0_14] {strides = array<i32: 2, 1>} : memref<1568x64xf32, #tpu.memory_space<vmem>>, vector<12x64xf32>
    %c28 = arith.constant 28 : index
    %c0_15 = arith.constant 0 : index
    %9 = tpu.strided_load %arg9[%c28, %c0_15] {strides = array<i32: 2, 1>} : memref<1568x64xf32, #tpu.memory_space<vmem>>, vector<12x64xf32>
    %c29 = arith.constant 29 : index
    %c0_16 = arith.constant 0 : index
    %10 = tpu.strided_load %arg9[%c29, %c0_16] {strides = array<i32: 2, 1>} : memref<1568x64xf32, #tpu.memory_space<vmem>>, vector<12x64xf32>
    %11 = arith.maximumf %7, %8 : vector<12x64xf32>
    %12 = arith.maximumf %9, %10 : vector<12x64xf32>
    %13 = arith.maximumf %11, %12 : vector<12x64xf32>
    %14 = arith.truncf %13 : vector<12x64xf32> to vector<12x64xbf16>
    %c0_17 = arith.constant 0 : index
    %c0_18 = arith.constant 0 : index
    %c0_19 = arith.constant 0 : index
    %15 = vector.load %arg6[%c0_17, %c0_18, %c0_19] : memref<24x12x64xbf16, #tpu.memory_space<vmem>>, vector<1x12x64xbf16>
    %16 = vector.shape_cast %15 : vector<1x12x64xbf16> to vector<12x64xbf16>
    %17 = vector.shape_cast %14 : vector<12x64xbf16> to vector<1x12x64xbf16>
    tpu.vector_store %arg6[%c0_17, %c0_18, %c0_19], %17 {strides = array<i32>} : memref<24x12x64xbf16, #tpu.memory_space<vmem>>, vector<1x12x64xbf16>,
    %c56 = arith.constant 56 : index
    %c0_20 = arith.constant 0 : index
    %18 = tpu.strided_load %arg9[%c56, %c0_20] {strides = array<i32: 2, 1>} : memref<1568x64xf32, #tpu.memory_space<vmem>>, vector<12x64xf32>
    %c57 = arith.constant 57 : index
    %c0_21 = arith.constant 0 : index
    %19 = tpu.strided_load %arg9[%c57, %c0_21] {strides = array<i32: 2, 1>} : memref<1568x64xf32, #tpu.memory_space<vmem>>, vector<12x64xf32>
    %c84 = arith.constant 84 : index
    %c0_22 = arith.constant 0 : index
    %20 = tpu.strided_load %arg9[%c84, %c0_22] {strides = array<i32: 2, 1>} : memref<1568x64xf32, #tpu.memory_space<vmem>>, vector<12x64xf32>
    %c85 = arith.constant 85 : index
    %c0_23 = arith.constant 0 : index
    %21 = tpu.strided_load %arg9[%c85, %c0_23] {strides = array<i32: 2, 1>} : memref<1568x64xf32, #tpu.memory_space<vmem>>, vector<12x64xf32>
    %22 = arith.maximumf %18, %19 : vector<12x64xf32>
    %23 = arith.maximumf %20, %21 : vector<12x64xf32>
    %24 = arith.maximumf %22, %23 : vector<12x64xf32>
    %25 = arith.truncf %24 : vector<12x64xf32> to vector<12x64xbf16>
    %c1_24 = arith.constant 1 : index
    %c0_25 = arith.constant 0 : index
    %c0_26 = arith.constant 0 : index
    %26 = vector.load %arg6[%c1_24, %c0_25, %c0_26] : memref<24x12x64xbf16, #tpu.memory_space<vmem>>, vector<1x12x64xbf16>
    %27 = vector.shape_cast %26 : vector<1x12x64xbf16> to vector<12x64xbf16>
    %28 = vector.shape_cast %25 : vector<12x64xbf16> to vector<1x12x64xbf16>
    tpu.vector_store %arg6[%c1_24, %c0_25, %c0_26], %28 {strides = array<i32>} : memref<24x12x64xbf16, #tpu.memory_space<vmem>>, vector<1x12x64xbf16>,
    %c112 = arith.constant 112 : index
    %c0_27 = arith.constant 0 : index
    %29 = tpu.strided_load %arg9[%c112, %c0_27] {strides = array<i32: 2, 1>} : memref<1568x64xf32, #tpu.memory_space<vmem>>, vector<12x64xf32>
    %c113 = arith.constant 113 : index
    %c0_28 = arith.constant 0 : index
    %30 = tpu.strided_load %arg9[%c113, %c0_28] {strides = array<i32: 2, 1>} : memref<1568x64xf32, #tpu.memory_space<vmem>>, vector<12x64xf32>
    %c140 = arith.constant 140 : index
    %c0_29 = arith.constant 0 : index
    %31 = tpu.strided_load %arg9[%c140, %c0_29] {strides = array<i32: 2, 1>} : memref<1568x64xf32, #tpu.memory_space<vmem>>, vector<12x64xf32>
    %c141 = arith.constant 141 : index
    %c0_30 = arith.constant 0 : index
    %32 = tpu.strided_load %arg9[%c141, %c0_30] {strides = array<i32: 2, 1>} : memref<1568x64xf32, #tpu.memory_space<vmem>>, vector<12x64xf32>
    %33 = arith.maximumf %29, %30 : vector<12x64xf32>
    %34 = arith.maximumf %31, %32 : vector<12x64xf32>
    %35 = arith.maximumf %33, %34 : vector<12x64xf32>
    %36 = arith.truncf %35 : vector<12x64xf32> to vector<12x64xbf16>
    %c2 = arith.constant 2 : index
    %c0_31 = arith.constant 0 : index
    %c0_32 = arith.constant 0 : index
    %37 = vector.load %arg6[%c2, %c0_31, %c0_32] : memref<24x12x64xbf16, #tpu.memory_space<vmem>>, vector<1x12x64xbf16>
    %38 = vector.shape_cast %37 : vector<1x12x64xbf16> to vector<12x64xbf16>
    %39 = vector.shape_cast %36 : vector<12x64xbf16> to vector<1x12x64xbf16>
    tpu.vector_store %arg6[%c2, %c0_31, %c0_32], %39 {strides = array<i32>} : memref<24x12x64xbf16, #tpu.memory_space<vmem>>, vector<1x12x64xbf16>,
    %c168 = arith.constant 168 : index
    %c0_33 = arith.constant 0 : index
    %40 = tpu.strided_load %arg9[%c168, %c0_33] {strides = array<i32: 2, 1>} : memref<1568x64xf32, #tpu.memory_space<vmem>>, vector<12x64xf32>
    %c169 = arith.constant 169 : index
    %c0_34 = arith.constant 0 : index
    %41 = tpu.strided_load %arg9[%c169, %c0_34] {strides = array<i32: 2, 1>} : memref<1568x64xf32, #tpu.memory_space<vmem>>, vector<12x64xf32>
    %c196 = arith.constant 196 : index
    %c0_35 = arith.constant 0 : index
    %42 = tpu.strided_load %arg9[%c196, %c0_35] {strides = array<i32: 2, 1>} : memref<1568x64xf32, #tpu.memory_space<vmem>>, vector<12x64xf32>
    %c197 = arith.constant 197 : index
    %c0_36 = arith.constant 0 : index
    %43 = tpu.strided_load %arg9[%c197, %c0_36] {strides = array<i32: 2, 1>} : memref<1568x64xf32, #tpu.memory_space<vmem>>, vector<12x64xf32>
    %44 = arith.maximumf %40, %41 : vector<12x64xf32>
    %45 = arith.maximumf %42, %43 : vector<12x64xf32>
    %46 = arith.maximumf %44, %45 : vector<12x64xf32>
    %47 = arith.truncf %46 : vector<12x64xf32> to vector<12x64xbf16>
    %c3 = arith.constant 3 : index
    %c0_37 = arith.constant 0 : index
    %c0_38 = arith.constant 0 : index
    %48 = vector.load %arg6[%c3, %c0_37, %c0_38] : memref<24x12x64xbf16, #tpu.memory_space<vmem>>, vector<1x12x64xbf16>
    %49 = vector.shape_cast %48 : vector<1x12x64xbf16> to vector<12x64xbf16>
    %50 = vector.shape_cast %47 : vector<12x64xbf16> to vector<1x12x64xbf16>
    tpu.vector_store %arg6[%c3, %c0_37, %c0_38], %50 {strides = array<i32>} : memref<24x12x64xbf16, #tpu.memory_space<vmem>>, vector<1x12x64xbf16>,
    %c224 = arith.constant 224 : index
    %c0_39 = arith.constant 0 : index
    %51 = tpu.strided_load %arg9[%c224, %c0_39] {strides = array<i32: 2, 1>} : memref<1568x64xf32, #tpu.memory_space<vmem>>, vector<12x64xf32>
    %c225 = arith.constant 225 : index
    %c0_40 = arith.constant 0 : index
    %52 = tpu.strided_load %arg9[%c225, %c0_40] {strides = array<i32: 2, 1>} : memref<1568x64xf32, #tpu.memory_space<vmem>>, vector<12x64xf32>
    %c252 = arith.constant 252 : index
    %c0_41 = arith.constant 0 : index
    %53 = tpu.strided_load %arg9[%c252, %c0_41] {strides = array<i32: 2, 1>} : memref<1568x64xf32, #tpu.memory_space<vmem>>, vector<12x64xf32>
    %c253 = arith.constant 253 : index
    %c0_42 = arith.constant 0 : index
    %54 = tpu.strided_load %arg9[%c253, %c0_42] {strides = array<i32: 2, 1>} : memref<1568x64xf32, #tpu.memory_space<vmem>>, vector<12x64xf32>
    %55 = arith.maximumf %51, %52 : vector<12x64xf32>
    %56 = arith.maximumf %53, %54 : vector<12x64xf32>
    %57 = arith.maximumf %55, %56 : vector<12x64xf32>
    %58 = arith.truncf %57 : vector<12x64xf32> to vector<12x64xbf16>
    %c4 = arith.constant 4 : index
    %c0_43 = arith.constant 0 : index
    %c0_44 = arith.constant 0 : index
    %59 = vector.load %arg6[%c4, %c0_43, %c0_44] : memref<24x12x64xbf16, #tpu.memory_space<vmem>>, vector<1x12x64xbf16>
    %60 = vector.shape_cast %59 : vector<1x12x64xbf16> to vector<12x64xbf16>
    %61 = vector.shape_cast %58 : vector<12x64xbf16> to vector<1x12x64xbf16>
    tpu.vector_store %arg6[%c4, %c0_43, %c0_44], %61 {strides = array<i32>} : memref<24x12x64xbf16, #tpu.memory_space<vmem>>, vector<1x12x64xbf16>,
    %c280 = arith.constant 280 : index
    %c0_45 = arith.constant 0 : index
    %62 = tpu.strided_load %arg9[%c280, %c0_45] {strides = array<i32: 2, 1>} : memref<1568x64xf32, #tpu.memory_space<vmem>>, vector<12x64xf32>
    %c281 = arith.constant 281 : index
    %c0_46 = arith.constant 0 : index
    %63 = tpu.strided_load %arg9[%c281, %c0_46] {strides = array<i32: 2, 1>} : memref<1568x64xf32, #tpu.memory_space<vmem>>, vector<12x64xf32>
    %c308 = arith.constant 308 : index
    %c0_47 = arith.constant 0 : index
    %64 = tpu.strided_load %arg9[%c308, %c0_47] {strides = array<i32: 2, 1>} : memref<1568x64xf32, #tpu.memory_space<vmem>>, vector<12x64xf32>
    %c309 = arith.constant 309 : index
    %c0_48 = arith.constant 0 : index
    %65 = tpu.strided_load %arg9[%c309, %c0_48] {strides = array<i32: 2, 1>} : memref<1568x64xf32, #tpu.memory_space<vmem>>, vector<12x64xf32>
    %66 = arith.maximumf %62, %63 : vector<12x64xf32>
    %67 = arith.maximumf %64, %65 : vector<12x64xf32>
    %68 = arith.maximumf %66, %67 : vector<12x64xf32>
    %69 = arith.truncf %68 : vector<12x64xf32> to vector<12x64xbf16>
    %c5 = arith.constant 5 : index
    %c0_49 = arith.constant 0 : index
    %c0_50 = arith.constant 0 : index
    %70 = vector.load %arg6[%c5, %c0_49, %c0_50] : memref<24x12x64xbf16, #tpu.memory_space<vmem>>, vector<1x12x64xbf16>
    %71 = vector.shape_cast %70 : vector<1x12x64xbf16> to vector<12x64xbf16>
    %72 = vector.shape_cast %69 : vector<12x64xbf16> to vector<1x12x64xbf16>
    tpu.vector_store %arg6[%c5, %c0_49, %c0_50], %72 {strides = array<i32>} : memref<24x12x64xbf16, #tpu.memory_space<vmem>>, vector<1x12x64xbf16>,
    %c336 = arith.constant 336 : index
    %c0_51 = arith.constant 0 : index
    %73 = tpu.strided_load %arg9[%c336, %c0_51] {strides = array<i32: 2, 1>} : memref<1568x64xf32, #tpu.memory_space<vmem>>, vector<12x64xf32>
    %c337 = arith.constant 337 : index
    %c0_52 = arith.constant 0 : index
    %74 = tpu.strided_load %arg9[%c337, %c0_52] {strides = array<i32: 2, 1>} : memref<1568x64xf32, #tpu.memory_space<vmem>>, vector<12x64xf32>
    %c364 = arith.constant 364 : index
    %c0_53 = arith.constant 0 : index
    %75 = tpu.strided_load %arg9[%c364, %c0_53] {strides = array<i32: 2, 1>} : memref<1568x64xf32, #tpu.memory_space<vmem>>, vector<12x64xf32>
    %c365 = arith.constant 365 : index
    %c0_54 = arith.constant 0 : index
    %76 = tpu.strided_load %arg9[%c365, %c0_54] {strides = array<i32: 2, 1>} : memref<1568x64xf32, #tpu.memory_space<vmem>>, vector<12x64xf32>
    %77 = arith.maximumf %73, %74 : vector<12x64xf32>
    %78 = arith.maximumf %75, %76 : vector<12x64xf32>
    %79 = arith.maximumf %77, %78 : vector<12x64xf32>
    %80 = arith.truncf %79 : vector<12x64xf32> to vector<12x64xbf16>
    %c6 = arith.constant 6 : index
    %c0_55 = arith.constant 0 : index
    %c0_56 = arith.constant 0 : index
    %81 = vector.load %arg6[%c6, %c0_55, %c0_56] : memref<24x12x64xbf16, #tpu.memory_space<vmem>>, vector<1x12x64xbf16>
    %82 = vector.shape_cast %81 : vector<1x12x64xbf16> to vector<12x64xbf16>
    %83 = vector.shape_cast %80 : vector<12x64xbf16> to vector<1x12x64xbf16>
    tpu.vector_store %arg6[%c6, %c0_55, %c0_56], %83 {strides = array<i32>} : memref<24x12x64xbf16, #tpu.memory_space<vmem>>, vector<1x12x64xbf16>,
    %c392 = arith.constant 392 : index
    %c0_57 = arith.constant 0 : index
    %84 = tpu.strided_load %arg9[%c392, %c0_57] {strides = array<i32: 2, 1>} : memref<1568x64xf32, #tpu.memory_space<vmem>>, vector<12x64xf32>
    %c393 = arith.constant 393 : index
    %c0_58 = arith.constant 0 : index
    %85 = tpu.strided_load %arg9[%c393, %c0_58] {strides = array<i32: 2, 1>} : memref<1568x64xf32, #tpu.memory_space<vmem>>, vector<12x64xf32>
    %c420 = arith.constant 420 : index
    %c0_59 = arith.constant 0 : index
    %86 = tpu.strided_load %arg9[%c420, %c0_59] {strides = array<i32: 2, 1>} : memref<1568x64xf32, #tpu.memory_space<vmem>>, vector<12x64xf32>
    %c421 = arith.constant 421 : index
    %c0_60 = arith.constant 0 : index
    %87 = tpu.strided_load %arg9[%c421, %c0_60] {strides = array<i32: 2, 1>} : memref<1568x64xf32, #tpu.memory_space<vmem>>, vector<12x64xf32>
    %88 = arith.maximumf %84, %85 : vector<12x64xf32>
    %89 = arith.maximumf %86, %87 : vector<12x64xf32>
    %90 = arith.maximumf %88, %89 : vector<12x64xf32>
    %91 = arith.truncf %90 : vector<12x64xf32> to vector<12x64xbf16>
    %c7 = arith.constant 7 : index
    %c0_61 = arith.constant 0 : index
    %c0_62 = arith.constant 0 : index
    %92 = vector.load %arg6[%c7, %c0_61, %c0_62] : memref<24x12x64xbf16, #tpu.memory_space<vmem>>, vector<1x12x64xbf16>
    %93 = vector.shape_cast %92 : vector<1x12x64xbf16> to vector<12x64xbf16>
    %94 = vector.shape_cast %91 : vector<12x64xbf16> to vector<1x12x64xbf16>
    tpu.vector_store %arg6[%c7, %c0_61, %c0_62], %94 {strides = array<i32>} : memref<24x12x64xbf16, #tpu.memory_space<vmem>>, vector<1x12x64xbf16>,
    %c448 = arith.constant 448 : index
    %c0_63 = arith.constant 0 : index
    %95 = tpu.strided_load %arg9[%c448, %c0_63] {strides = array<i32: 2, 1>} : memref<1568x64xf32, #tpu.memory_space<vmem>>, vector<12x64xf32>
    %c449 = arith.constant 449 : index
    %c0_64 = arith.constant 0 : index
    %96 = tpu.strided_load %arg9[%c449, %c0_64] {strides = array<i32: 2, 1>} : memref<1568x64xf32, #tpu.memory_space<vmem>>, vector<12x64xf32>
    %c476 = arith.constant 476 : index
    %c0_65 = arith.constant 0 : index
    %97 = tpu.strided_load %arg9[%c476, %c0_65] {strides = array<i32: 2, 1>} : memref<1568x64xf32, #tpu.memory_space<vmem>>, vector<12x64xf32>
    %c477 = arith.constant 477 : index
    %c0_66 = arith.constant 0 : index
    %98 = tpu.strided_load %arg9[%c477, %c0_66] {strides = array<i32: 2, 1>} : memref<1568x64xf32, #tpu.memory_space<vmem>>, vector<12x64xf32>
    %99 = arith.maximumf %95, %96 : vector<12x64xf32>
    %100 = arith.maximumf %97, %98 : vector<12x64xf32>
    %101 = arith.maximumf %99, %100 : vector<12x64xf32>
    %102 = arith.truncf %101 : vector<12x64xf32> to vector<12x64xbf16>
    %c8 = arith.constant 8 : index
    %c0_67 = arith.constant 0 : index
    %c0_68 = arith.constant 0 : index
    %103 = vector.load %arg6[%c8, %c0_67, %c0_68] : memref<24x12x64xbf16, #tpu.memory_space<vmem>>, vector<1x12x64xbf16>
    %104 = vector.shape_cast %103 : vector<1x12x64xbf16> to vector<12x64xbf16>
    %105 = vector.shape_cast %102 : vector<12x64xbf16> to vector<1x12x64xbf16>
    tpu.vector_store %arg6[%c8, %c0_67, %c0_68], %105 {strides = array<i32>} : memref<24x12x64xbf16, #tpu.memory_space<vmem>>, vector<1x12x64xbf16>,
    %c504 = arith.constant 504 : index
    %c0_69 = arith.constant 0 : index
    %106 = tpu.strided_load %arg9[%c504, %c0_69] {strides = array<i32: 2, 1>} : memref<1568x64xf32, #tpu.memory_space<vmem>>, vector<12x64xf32>
    %c505 = arith.constant 505 : index
    %c0_70 = arith.constant 0 : index
    %107 = tpu.strided_load %arg9[%c505, %c0_70] {strides = array<i32: 2, 1>} : memref<1568x64xf32, #tpu.memory_space<vmem>>, vector<12x64xf32>
    %c532 = arith.constant 532 : index
    %c0_71 = arith.constant 0 : index
    %108 = tpu.strided_load %arg9[%c532, %c0_71] {strides = array<i32: 2, 1>} : memref<1568x64xf32, #tpu.memory_space<vmem>>, vector<12x64xf32>
    %c533 = arith.constant 533 : index
    %c0_72 = arith.constant 0 : index
    %109 = tpu.strided_load %arg9[%c533, %c0_72] {strides = array<i32: 2, 1>} : memref<1568x64xf32, #tpu.memory_space<vmem>>, vector<12x64xf32>
    %110 = arith.maximumf %106, %107 : vector<12x64xf32>
    %111 = arith.maximumf %108, %109 : vector<12x64xf32>
    %112 = arith.maximumf %110, %111 : vector<12x64xf32>
    %113 = arith.truncf %112 : vector<12x64xf32> to vector<12x64xbf16>
    %c9 = arith.constant 9 : index
    %c0_73 = arith.constant 0 : index
    %c0_74 = arith.constant 0 : index
    %114 = vector.load %arg6[%c9, %c0_73, %c0_74] : memref<24x12x64xbf16, #tpu.memory_space<vmem>>, vector<1x12x64xbf16>
    %115 = vector.shape_cast %114 : vector<1x12x64xbf16> to vector<12x64xbf16>
    %116 = vector.shape_cast %113 : vector<12x64xbf16> to vector<1x12x64xbf16>
    tpu.vector_store %arg6[%c9, %c0_73, %c0_74], %116 {strides = array<i32>} : memref<24x12x64xbf16, #tpu.memory_space<vmem>>, vector<1x12x64xbf16>,
    %c560 = arith.constant 560 : index
    %c0_75 = arith.constant 0 : index
    %117 = tpu.strided_load %arg9[%c560, %c0_75] {strides = array<i32: 2, 1>} : memref<1568x64xf32, #tpu.memory_space<vmem>>, vector<12x64xf32>
    %c561 = arith.constant 561 : index
    %c0_76 = arith.constant 0 : index
    %118 = tpu.strided_load %arg9[%c561, %c0_76] {strides = array<i32: 2, 1>} : memref<1568x64xf32, #tpu.memory_space<vmem>>, vector<12x64xf32>
    %c588 = arith.constant 588 : index
    %c0_77 = arith.constant 0 : index
    %119 = tpu.strided_load %arg9[%c588, %c0_77] {strides = array<i32: 2, 1>} : memref<1568x64xf32, #tpu.memory_space<vmem>>, vector<12x64xf32>
    %c589 = arith.constant 589 : index
    %c0_78 = arith.constant 0 : index
    %120 = tpu.strided_load %arg9[%c589, %c0_78] {strides = array<i32: 2, 1>} : memref<1568x64xf32, #tpu.memory_space<vmem>>, vector<12x64xf32>
    %121 = arith.maximumf %117, %118 : vector<12x64xf32>
    %122 = arith.maximumf %119, %120 : vector<12x64xf32>
    %123 = arith.maximumf %121, %122 : vector<12x64xf32>
    %124 = arith.truncf %123 : vector<12x64xf32> to vector<12x64xbf16>
    %c10 = arith.constant 10 : index
    %c0_79 = arith.constant 0 : index
    %c0_80 = arith.constant 0 : index
    %125 = vector.load %arg6[%c10, %c0_79, %c0_80] : memref<24x12x64xbf16, #tpu.memory_space<vmem>>, vector<1x12x64xbf16>
    %126 = vector.shape_cast %125 : vector<1x12x64xbf16> to vector<12x64xbf16>
    %127 = vector.shape_cast %124 : vector<12x64xbf16> to vector<1x12x64xbf16>
    tpu.vector_store %arg6[%c10, %c0_79, %c0_80], %127 {strides = array<i32>} : memref<24x12x64xbf16, #tpu.memory_space<vmem>>, vector<1x12x64xbf16>,
    %c616 = arith.constant 616 : index
    %c0_81 = arith.constant 0 : index
    %128 = tpu.strided_load %arg9[%c616, %c0_81] {strides = array<i32: 2, 1>} : memref<1568x64xf32, #tpu.memory_space<vmem>>, vector<12x64xf32>
    %c617 = arith.constant 617 : index
    %c0_82 = arith.constant 0 : index
    %129 = tpu.strided_load %arg9[%c617, %c0_82] {strides = array<i32: 2, 1>} : memref<1568x64xf32, #tpu.memory_space<vmem>>, vector<12x64xf32>
    %c644 = arith.constant 644 : index
    %c0_83 = arith.constant 0 : index
    %130 = tpu.strided_load %arg9[%c644, %c0_83] {strides = array<i32: 2, 1>} : memref<1568x64xf32, #tpu.memory_space<vmem>>, vector<12x64xf32>
    %c645 = arith.constant 645 : index
    %c0_84 = arith.constant 0 : index
    %131 = tpu.strided_load %arg9[%c645, %c0_84] {strides = array<i32: 2, 1>} : memref<1568x64xf32, #tpu.memory_space<vmem>>, vector<12x64xf32>
    %132 = arith.maximumf %128, %129 : vector<12x64xf32>
    %133 = arith.maximumf %130, %131 : vector<12x64xf32>
    %134 = arith.maximumf %132, %133 : vector<12x64xf32>
    %135 = arith.truncf %134 : vector<12x64xf32> to vector<12x64xbf16>
    %c11 = arith.constant 11 : index
    %c0_85 = arith.constant 0 : index
    %c0_86 = arith.constant 0 : index
    %136 = vector.load %arg6[%c11, %c0_85, %c0_86] : memref<24x12x64xbf16, #tpu.memory_space<vmem>>, vector<1x12x64xbf16>
    %137 = vector.shape_cast %136 : vector<1x12x64xbf16> to vector<12x64xbf16>
    %138 = vector.shape_cast %135 : vector<12x64xbf16> to vector<1x12x64xbf16>
    tpu.vector_store %arg6[%c11, %c0_85, %c0_86], %138 {strides = array<i32>} : memref<24x12x64xbf16, #tpu.memory_space<vmem>>, vector<1x12x64xbf16>,
    %c784 = arith.constant 784 : index
    %c0_87 = arith.constant 0 : index
    %139 = tpu.strided_load %arg9[%c784, %c0_87] {strides = array<i32: 2, 1>} : memref<1568x64xf32, #tpu.memory_space<vmem>>, vector<12x64xf32>
    %c785 = arith.constant 785 : index
    %c0_88 = arith.constant 0 : index
    %140 = tpu.strided_load %arg9[%c785, %c0_88] {strides = array<i32: 2, 1>} : memref<1568x64xf32, #tpu.memory_space<vmem>>, vector<12x64xf32>
    %c812 = arith.constant 812 : index
    %c0_89 = arith.constant 0 : index
    %141 = tpu.strided_load %arg9[%c812, %c0_89] {strides = array<i32: 2, 1>} : memref<1568x64xf32, #tpu.memory_space<vmem>>, vector<12x64xf32>
    %c813 = arith.constant 813 : index
    %c0_90 = arith.constant 0 : index
    %142 = tpu.strided_load %arg9[%c813, %c0_90] {strides = array<i32: 2, 1>} : memref<1568x64xf32, #tpu.memory_space<vmem>>, vector<12x64xf32>
    %143 = arith.maximumf %139, %140 : vector<12x64xf32>
    %144 = arith.maximumf %141, %142 : vector<12x64xf32>
    %145 = arith.maximumf %143, %144 : vector<12x64xf32>
    %146 = arith.truncf %145 : vector<12x64xf32> to vector<12x64xbf16>
    %c12 = arith.constant 12 : index
    %c0_91 = arith.constant 0 : index
    %c0_92 = arith.constant 0 : index
    %147 = vector.load %arg6[%c12, %c0_91, %c0_92] : memref<24x12x64xbf16, #tpu.memory_space<vmem>>, vector<1x12x64xbf16>
    %148 = vector.shape_cast %147 : vector<1x12x64xbf16> to vector<12x64xbf16>
    %149 = vector.shape_cast %146 : vector<12x64xbf16> to vector<1x12x64xbf16>
    tpu.vector_store %arg6[%c12, %c0_91, %c0_92], %149 {strides = array<i32>} : memref<24x12x64xbf16, #tpu.memory_space<vmem>>, vector<1x12x64xbf16>,
    %c840 = arith.constant 840 : index
    %c0_93 = arith.constant 0 : index
    %150 = tpu.strided_load %arg9[%c840, %c0_93] {strides = array<i32: 2, 1>} : memref<1568x64xf32, #tpu.memory_space<vmem>>, vector<12x64xf32>
    %c841 = arith.constant 841 : index
    %c0_94 = arith.constant 0 : index
    %151 = tpu.strided_load %arg9[%c841, %c0_94] {strides = array<i32: 2, 1>} : memref<1568x64xf32, #tpu.memory_space<vmem>>, vector<12x64xf32>
    %c868 = arith.constant 868 : index
    %c0_95 = arith.constant 0 : index
    %152 = tpu.strided_load %arg9[%c868, %c0_95] {strides = array<i32: 2, 1>} : memref<1568x64xf32, #tpu.memory_space<vmem>>, vector<12x64xf32>
    %c869 = arith.constant 869 : index
    %c0_96 = arith.constant 0 : index
    %153 = tpu.strided_load %arg9[%c869, %c0_96] {strides = array<i32: 2, 1>} : memref<1568x64xf32, #tpu.memory_space<vmem>>, vector<12x64xf32>
    %154 = arith.maximumf %150, %151 : vector<12x64xf32>
    %155 = arith.maximumf %152, %153 : vector<12x64xf32>
    %156 = arith.maximumf %154, %155 : vector<12x64xf32>
    %157 = arith.truncf %156 : vector<12x64xf32> to vector<12x64xbf16>
    %c13 = arith.constant 13 : index
    %c0_97 = arith.constant 0 : index
    %c0_98 = arith.constant 0 : index
    %158 = vector.load %arg6[%c13, %c0_97, %c0_98] : memref<24x12x64xbf16, #tpu.memory_space<vmem>>, vector<1x12x64xbf16>
    %159 = vector.shape_cast %158 : vector<1x12x64xbf16> to vector<12x64xbf16>
    %160 = vector.shape_cast %157 : vector<12x64xbf16> to vector<1x12x64xbf16>
    tpu.vector_store %arg6[%c13, %c0_97, %c0_98], %160 {strides = array<i32>} : memref<24x12x64xbf16, #tpu.memory_space<vmem>>, vector<1x12x64xbf16>,
    %c896 = arith.constant 896 : index
    %c0_99 = arith.constant 0 : index
    %161 = tpu.strided_load %arg9[%c896, %c0_99] {strides = array<i32: 2, 1>} : memref<1568x64xf32, #tpu.memory_space<vmem>>, vector<12x64xf32>
    %c897 = arith.constant 897 : index
    %c0_100 = arith.constant 0 : index
    %162 = tpu.strided_load %arg9[%c897, %c0_100] {strides = array<i32: 2, 1>} : memref<1568x64xf32, #tpu.memory_space<vmem>>, vector<12x64xf32>
    %c924 = arith.constant 924 : index
    %c0_101 = arith.constant 0 : index
    %163 = tpu.strided_load %arg9[%c924, %c0_101] {strides = array<i32: 2, 1>} : memref<1568x64xf32, #tpu.memory_space<vmem>>, vector<12x64xf32>
    %c925 = arith.constant 925 : index
    %c0_102 = arith.constant 0 : index
    %164 = tpu.strided_load %arg9[%c925, %c0_102] {strides = array<i32: 2, 1>} : memref<1568x64xf32, #tpu.memory_space<vmem>>, vector<12x64xf32>
    %165 = arith.maximumf %161, %162 : vector<12x64xf32>
    %166 = arith.maximumf %163, %164 : vector<12x64xf32>
    %167 = arith.maximumf %165, %166 : vector<12x64xf32>
    %168 = arith.truncf %167 : vector<12x64xf32> to vector<12x64xbf16>
    %c14 = arith.constant 14 : index
    %c0_103 = arith.constant 0 : index
    %c0_104 = arith.constant 0 : index
    %169 = vector.load %arg6[%c14, %c0_103, %c0_104] : memref<24x12x64xbf16, #tpu.memory_space<vmem>>, vector<1x12x64xbf16>
    %170 = vector.shape_cast %169 : vector<1x12x64xbf16> to vector<12x64xbf16>
    %171 = vector.shape_cast %168 : vector<12x64xbf16> to vector<1x12x64xbf16>
    tpu.vector_store %arg6[%c14, %c0_103, %c0_104], %171 {strides = array<i32>} : memref<24x12x64xbf16, #tpu.memory_space<vmem>>, vector<1x12x64xbf16>,
    %c952 = arith.constant 952 : index
    %c0_105 = arith.constant 0 : index
    %172 = tpu.strided_load %arg9[%c952, %c0_105] {strides = array<i32: 2, 1>} : memref<1568x64xf32, #tpu.memory_space<vmem>>, vector<12x64xf32>
    %c953 = arith.constant 953 : index
    %c0_106 = arith.constant 0 : index
    %173 = tpu.strided_load %arg9[%c953, %c0_106] {strides = array<i32: 2, 1>} : memref<1568x64xf32, #tpu.memory_space<vmem>>, vector<12x64xf32>
    %c980 = arith.constant 980 : index
    %c0_107 = arith.constant 0 : index
    %174 = tpu.strided_load %arg9[%c980, %c0_107] {strides = array<i32: 2, 1>} : memref<1568x64xf32, #tpu.memory_space<vmem>>, vector<12x64xf32>
    %c981 = arith.constant 981 : index
    %c0_108 = arith.constant 0 : index
    %175 = tpu.strided_load %arg9[%c981, %c0_108] {strides = array<i32: 2, 1>} : memref<1568x64xf32, #tpu.memory_space<vmem>>, vector<12x64xf32>
    %176 = arith.maximumf %172, %173 : vector<12x64xf32>
    %177 = arith.maximumf %174, %175 : vector<12x64xf32>
    %178 = arith.maximumf %176, %177 : vector<12x64xf32>
    %179 = arith.truncf %178 : vector<12x64xf32> to vector<12x64xbf16>
    %c15 = arith.constant 15 : index
    %c0_109 = arith.constant 0 : index
    %c0_110 = arith.constant 0 : index
    %180 = vector.load %arg6[%c15, %c0_109, %c0_110] : memref<24x12x64xbf16, #tpu.memory_space<vmem>>, vector<1x12x64xbf16>
    %181 = vector.shape_cast %180 : vector<1x12x64xbf16> to vector<12x64xbf16>
    %182 = vector.shape_cast %179 : vector<12x64xbf16> to vector<1x12x64xbf16>
    tpu.vector_store %arg6[%c15, %c0_109, %c0_110], %182 {strides = array<i32>} : memref<24x12x64xbf16, #tpu.memory_space<vmem>>, vector<1x12x64xbf16>,
    %c1008 = arith.constant 1008 : index
    %c0_111 = arith.constant 0 : index
    %183 = tpu.strided_load %arg9[%c1008, %c0_111] {strides = array<i32: 2, 1>} : memref<1568x64xf32, #tpu.memory_space<vmem>>, vector<12x64xf32>
    %c1009 = arith.constant 1009 : index
    %c0_112 = arith.constant 0 : index
    %184 = tpu.strided_load %arg9[%c1009, %c0_112] {strides = array<i32: 2, 1>} : memref<1568x64xf32, #tpu.memory_space<vmem>>, vector<12x64xf32>
    %c1036 = arith.constant 1036 : index
    %c0_113 = arith.constant 0 : index
    %185 = tpu.strided_load %arg9[%c1036, %c0_113] {strides = array<i32: 2, 1>} : memref<1568x64xf32, #tpu.memory_space<vmem>>, vector<12x64xf32>
    %c1037 = arith.constant 1037 : index
    %c0_114 = arith.constant 0 : index
    %186 = tpu.strided_load %arg9[%c1037, %c0_114] {strides = array<i32: 2, 1>} : memref<1568x64xf32, #tpu.memory_space<vmem>>, vector<12x64xf32>
    %187 = arith.maximumf %183, %184 : vector<12x64xf32>
    %188 = arith.maximumf %185, %186 : vector<12x64xf32>
    %189 = arith.maximumf %187, %188 : vector<12x64xf32>
    %190 = arith.truncf %189 : vector<12x64xf32> to vector<12x64xbf16>
    %c16 = arith.constant 16 : index
    %c0_115 = arith.constant 0 : index
    %c0_116 = arith.constant 0 : index
    %191 = vector.load %arg6[%c16, %c0_115, %c0_116] : memref<24x12x64xbf16, #tpu.memory_space<vmem>>, vector<1x12x64xbf16>
    %192 = vector.shape_cast %191 : vector<1x12x64xbf16> to vector<12x64xbf16>
    %193 = vector.shape_cast %190 : vector<12x64xbf16> to vector<1x12x64xbf16>
    tpu.vector_store %arg6[%c16, %c0_115, %c0_116], %193 {strides = array<i32>} : memref<24x12x64xbf16, #tpu.memory_space<vmem>>, vector<1x12x64xbf16>,
    %c1064 = arith.constant 1064 : index
    %c0_117 = arith.constant 0 : index
    %194 = tpu.strided_load %arg9[%c1064, %c0_117] {strides = array<i32: 2, 1>} : memref<1568x64xf32, #tpu.memory_space<vmem>>, vector<12x64xf32>
    %c1065 = arith.constant 1065 : index
    %c0_118 = arith.constant 0 : index
    %195 = tpu.strided_load %arg9[%c1065, %c0_118] {strides = array<i32: 2, 1>} : memref<1568x64xf32, #tpu.memory_space<vmem>>, vector<12x64xf32>
    %c1092 = arith.constant 1092 : index
    %c0_119 = arith.constant 0 : index
    %196 = tpu.strided_load %arg9[%c1092, %c0_119] {strides = array<i32: 2, 1>} : memref<1568x64xf32, #tpu.memory_space<vmem>>, vector<12x64xf32>
    %c1093 = arith.constant 1093 : index
    %c0_120 = arith.constant 0 : index
    %197 = tpu.strided_load %arg9[%c1093, %c0_120] {strides = array<i32: 2, 1>} : memref<1568x64xf32, #tpu.memory_space<vmem>>, vector<12x64xf32>
    %198 = arith.maximumf %194, %195 : vector<12x64xf32>
    %199 = arith.maximumf %196, %197 : vector<12x64xf32>
    %200 = arith.maximumf %198, %199 : vector<12x64xf32>
    %201 = arith.truncf %200 : vector<12x64xf32> to vector<12x64xbf16>
    %c17 = arith.constant 17 : index
    %c0_121 = arith.constant 0 : index
    %c0_122 = arith.constant 0 : index
    %202 = vector.load %arg6[%c17, %c0_121, %c0_122] : memref<24x12x64xbf16, #tpu.memory_space<vmem>>, vector<1x12x64xbf16>
    %203 = vector.shape_cast %202 : vector<1x12x64xbf16> to vector<12x64xbf16>
    %204 = vector.shape_cast %201 : vector<12x64xbf16> to vector<1x12x64xbf16>
    tpu.vector_store %arg6[%c17, %c0_121, %c0_122], %204 {strides = array<i32>} : memref<24x12x64xbf16, #tpu.memory_space<vmem>>, vector<1x12x64xbf16>,
    %c1120 = arith.constant 1120 : index
    %c0_123 = arith.constant 0 : index
    %205 = tpu.strided_load %arg9[%c1120, %c0_123] {strides = array<i32: 2, 1>} : memref<1568x64xf32, #tpu.memory_space<vmem>>, vector<12x64xf32>
    %c1121 = arith.constant 1121 : index
    %c0_124 = arith.constant 0 : index
    %206 = tpu.strided_load %arg9[%c1121, %c0_124] {strides = array<i32: 2, 1>} : memref<1568x64xf32, #tpu.memory_space<vmem>>, vector<12x64xf32>
    %c1148 = arith.constant 1148 : index
    %c0_125 = arith.constant 0 : index
    %207 = tpu.strided_load %arg9[%c1148, %c0_125] {strides = array<i32: 2, 1>} : memref<1568x64xf32, #tpu.memory_space<vmem>>, vector<12x64xf32>
    %c1149 = arith.constant 1149 : index
    %c0_126 = arith.constant 0 : index
    %208 = tpu.strided_load %arg9[%c1149, %c0_126] {strides = array<i32: 2, 1>} : memref<1568x64xf32, #tpu.memory_space<vmem>>, vector<12x64xf32>
    %209 = arith.maximumf %205, %206 : vector<12x64xf32>
    %210 = arith.maximumf %207, %208 : vector<12x64xf32>
    %211 = arith.maximumf %209, %210 : vector<12x64xf32>
    %212 = arith.truncf %211 : vector<12x64xf32> to vector<12x64xbf16>
    %c18 = arith.constant 18 : index
    %c0_127 = arith.constant 0 : index
    %c0_128 = arith.constant 0 : index
    %213 = vector.load %arg6[%c18, %c0_127, %c0_128] : memref<24x12x64xbf16, #tpu.memory_space<vmem>>, vector<1x12x64xbf16>
    %214 = vector.shape_cast %213 : vector<1x12x64xbf16> to vector<12x64xbf16>
    %215 = vector.shape_cast %212 : vector<12x64xbf16> to vector<1x12x64xbf16>
    tpu.vector_store %arg6[%c18, %c0_127, %c0_128], %215 {strides = array<i32>} : memref<24x12x64xbf16, #tpu.memory_space<vmem>>, vector<1x12x64xbf16>,
    %c1176 = arith.constant 1176 : index
    %c0_129 = arith.constant 0 : index
    %216 = tpu.strided_load %arg9[%c1176, %c0_129] {strides = array<i32: 2, 1>} : memref<1568x64xf32, #tpu.memory_space<vmem>>, vector<12x64xf32>
    %c1177 = arith.constant 1177 : index
    %c0_130 = arith.constant 0 : index
    %217 = tpu.strided_load %arg9[%c1177, %c0_130] {strides = array<i32: 2, 1>} : memref<1568x64xf32, #tpu.memory_space<vmem>>, vector<12x64xf32>
    %c1204 = arith.constant 1204 : index
    %c0_131 = arith.constant 0 : index
    %218 = tpu.strided_load %arg9[%c1204, %c0_131] {strides = array<i32: 2, 1>} : memref<1568x64xf32, #tpu.memory_space<vmem>>, vector<12x64xf32>
    %c1205 = arith.constant 1205 : index
    %c0_132 = arith.constant 0 : index
    %219 = tpu.strided_load %arg9[%c1205, %c0_132] {strides = array<i32: 2, 1>} : memref<1568x64xf32, #tpu.memory_space<vmem>>, vector<12x64xf32>
    %220 = arith.maximumf %216, %217 : vector<12x64xf32>
    %221 = arith.maximumf %218, %219 : vector<12x64xf32>
    %222 = arith.maximumf %220, %221 : vector<12x64xf32>
    %223 = arith.truncf %222 : vector<12x64xf32> to vector<12x64xbf16>
    %c19 = arith.constant 19 : index
    %c0_133 = arith.constant 0 : index
    %c0_134 = arith.constant 0 : index
    %224 = vector.load %arg6[%c19, %c0_133, %c0_134] : memref<24x12x64xbf16, #tpu.memory_space<vmem>>, vector<1x12x64xbf16>
    %225 = vector.shape_cast %224 : vector<1x12x64xbf16> to vector<12x64xbf16>
    %226 = vector.shape_cast %223 : vector<12x64xbf16> to vector<1x12x64xbf16>
    tpu.vector_store %arg6[%c19, %c0_133, %c0_134], %226 {strides = array<i32>} : memref<24x12x64xbf16, #tpu.memory_space<vmem>>, vector<1x12x64xbf16>,
    %c1232 = arith.constant 1232 : index
    %c0_135 = arith.constant 0 : index
    %227 = tpu.strided_load %arg9[%c1232, %c0_135] {strides = array<i32: 2, 1>} : memref<1568x64xf32, #tpu.memory_space<vmem>>, vector<12x64xf32>
    %c1233 = arith.constant 1233 : index
    %c0_136 = arith.constant 0 : index
    %228 = tpu.strided_load %arg9[%c1233, %c0_136] {strides = array<i32: 2, 1>} : memref<1568x64xf32, #tpu.memory_space<vmem>>, vector<12x64xf32>
    %c1260 = arith.constant 1260 : index
    %c0_137 = arith.constant 0 : index
    %229 = tpu.strided_load %arg9[%c1260, %c0_137] {strides = array<i32: 2, 1>} : memref<1568x64xf32, #tpu.memory_space<vmem>>, vector<12x64xf32>
    %c1261 = arith.constant 1261 : index
    %c0_138 = arith.constant 0 : index
    %230 = tpu.strided_load %arg9[%c1261, %c0_138] {strides = array<i32: 2, 1>} : memref<1568x64xf32, #tpu.memory_space<vmem>>, vector<12x64xf32>
    %231 = arith.maximumf %227, %228 : vector<12x64xf32>
    %232 = arith.maximumf %229, %230 : vector<12x64xf32>
    %233 = arith.maximumf %231, %232 : vector<12x64xf32>
    %234 = arith.truncf %233 : vector<12x64xf32> to vector<12x64xbf16>
    %c20 = arith.constant 20 : index
    %c0_139 = arith.constant 0 : index
    %c0_140 = arith.constant 0 : index
    %235 = vector.load %arg6[%c20, %c0_139, %c0_140] : memref<24x12x64xbf16, #tpu.memory_space<vmem>>, vector<1x12x64xbf16>
    %236 = vector.shape_cast %235 : vector<1x12x64xbf16> to vector<12x64xbf16>
    %237 = vector.shape_cast %234 : vector<12x64xbf16> to vector<1x12x64xbf16>
    tpu.vector_store %arg6[%c20, %c0_139, %c0_140], %237 {strides = array<i32>} : memref<24x12x64xbf16, #tpu.memory_space<vmem>>, vector<1x12x64xbf16>,
    %c1288 = arith.constant 1288 : index
    %c0_141 = arith.constant 0 : index
    %238 = tpu.strided_load %arg9[%c1288, %c0_141] {strides = array<i32: 2, 1>} : memref<1568x64xf32, #tpu.memory_space<vmem>>, vector<12x64xf32>
    %c1289 = arith.constant 1289 : index
    %c0_142 = arith.constant 0 : index
    %239 = tpu.strided_load %arg9[%c1289, %c0_142] {strides = array<i32: 2, 1>} : memref<1568x64xf32, #tpu.memory_space<vmem>>, vector<12x64xf32>
    %c1316 = arith.constant 1316 : index
    %c0_143 = arith.constant 0 : index
    %240 = tpu.strided_load %arg9[%c1316, %c0_143] {strides = array<i32: 2, 1>} : memref<1568x64xf32, #tpu.memory_space<vmem>>, vector<12x64xf32>
    %c1317 = arith.constant 1317 : index
    %c0_144 = arith.constant 0 : index
    %241 = tpu.strided_load %arg9[%c1317, %c0_144] {strides = array<i32: 2, 1>} : memref<1568x64xf32, #tpu.memory_space<vmem>>, vector<12x64xf32>
    %242 = arith.maximumf %238, %239 : vector<12x64xf32>
    %243 = arith.maximumf %240, %241 : vector<12x64xf32>
    %244 = arith.maximumf %242, %243 : vector<12x64xf32>
    %245 = arith.truncf %244 : vector<12x64xf32> to vector<12x64xbf16>
    %c21 = arith.constant 21 : index
    %c0_145 = arith.constant 0 : index
    %c0_146 = arith.constant 0 : index
    %246 = vector.load %arg6[%c21, %c0_145, %c0_146] : memref<24x12x64xbf16, #tpu.memory_space<vmem>>, vector<1x12x64xbf16>
    %247 = vector.shape_cast %246 : vector<1x12x64xbf16> to vector<12x64xbf16>
    %248 = vector.shape_cast %245 : vector<12x64xbf16> to vector<1x12x64xbf16>
    tpu.vector_store %arg6[%c21, %c0_145, %c0_146], %248 {strides = array<i32>} : memref<24x12x64xbf16, #tpu.memory_space<vmem>>, vector<1x12x64xbf16>,
    %c1344 = arith.constant 1344 : index
    %c0_147 = arith.constant 0 : index
    %249 = tpu.strided_load %arg9[%c1344, %c0_147] {strides = array<i32: 2, 1>} : memref<1568x64xf32, #tpu.memory_space<vmem>>, vector<12x64xf32>
    %c1345 = arith.constant 1345 : index
    %c0_148 = arith.constant 0 : index
    %250 = tpu.strided_load %arg9[%c1345, %c0_148] {strides = array<i32: 2, 1>} : memref<1568x64xf32, #tpu.memory_space<vmem>>, vector<12x64xf32>
    %c1372 = arith.constant 1372 : index
    %c0_149 = arith.constant 0 : index
    %251 = tpu.strided_load %arg9[%c1372, %c0_149] {strides = array<i32: 2, 1>} : memref<1568x64xf32, #tpu.memory_space<vmem>>, vector<12x64xf32>
    %c1373 = arith.constant 1373 : index
    %c0_150 = arith.constant 0 : index
    %252 = tpu.strided_load %arg9[%c1373, %c0_150] {strides = array<i32: 2, 1>} : memref<1568x64xf32, #tpu.memory_space<vmem>>, vector<12x64xf32>
    %253 = arith.maximumf %249, %250 : vector<12x64xf32>
    %254 = arith.maximumf %251, %252 : vector<12x64xf32>
    %255 = arith.maximumf %253, %254 : vector<12x64xf32>
    %256 = arith.truncf %255 : vector<12x64xf32> to vector<12x64xbf16>
    %c22 = arith.constant 22 : index
    %c0_151 = arith.constant 0 : index
    %c0_152 = arith.constant 0 : index
    %257 = vector.load %arg6[%c22, %c0_151, %c0_152] : memref<24x12x64xbf16, #tpu.memory_space<vmem>>, vector<1x12x64xbf16>
    %258 = vector.shape_cast %257 : vector<1x12x64xbf16> to vector<12x64xbf16>
    %259 = vector.shape_cast %256 : vector<12x64xbf16> to vector<1x12x64xbf16>
    tpu.vector_store %arg6[%c22, %c0_151, %c0_152], %259 {strides = array<i32>} : memref<24x12x64xbf16, #tpu.memory_space<vmem>>, vector<1x12x64xbf16>,
    %c1400 = arith.constant 1400 : index
    %c0_153 = arith.constant 0 : index
    %260 = tpu.strided_load %arg9[%c1400, %c0_153] {strides = array<i32: 2, 1>} : memref<1568x64xf32, #tpu.memory_space<vmem>>, vector<12x64xf32>
    %c1401 = arith.constant 1401 : index
    %c0_154 = arith.constant 0 : index
    %261 = tpu.strided_load %arg9[%c1401, %c0_154] {strides = array<i32: 2, 1>} : memref<1568x64xf32, #tpu.memory_space<vmem>>, vector<12x64xf32>
    %c1428 = arith.constant 1428 : index
    %c0_155 = arith.constant 0 : index
    %262 = tpu.strided_load %arg9[%c1428, %c0_155] {strides = array<i32: 2, 1>} : memref<1568x64xf32, #tpu.memory_space<vmem>>, vector<12x64xf32>
    %c1429 = arith.constant 1429 : index
    %c0_156 = arith.constant 0 : index
    %263 = tpu.strided_load %arg9[%c1429, %c0_156] {strides = array<i32: 2, 1>} : memref<1568x64xf32, #tpu.memory_space<vmem>>, vector<12x64xf32>
    %264 = arith.maximumf %260, %261 : vector<12x64xf32>
    %265 = arith.maximumf %262, %263 : vector<12x64xf32>
    %266 = arith.maximumf %264, %265 : vector<12x64xf32>
    %267 = arith.truncf %266 : vector<12x64xf32> to vector<12x64xbf16>
    %c23 = arith.constant 23 : index
    %c0_157 = arith.constant 0 : index
    %c0_158 = arith.constant 0 : index
    %268 = vector.load %arg6[%c23, %c0_157, %c0_158] : memref<24x12x64xbf16, #tpu.memory_space<vmem>>, vector<1x12x64xbf16>
    %269 = vector.shape_cast %268 : vector<1x12x64xbf16> to vector<12x64xbf16>
    %270 = vector.shape_cast %267 : vector<12x64xbf16> to vector<1x12x64xbf16>
    tpu.vector_store %arg6[%c23, %c0_157, %c0_158], %270 {strides = array<i32>} : memref<24x12x64xbf16, #tpu.memory_space<vmem>>, vector<1x12x64xbf16>,
    return
  }
  func.func @transform_0(%arg0: i32) -> (i32, i32) {
    %c0_i32 = arith.constant 0 : i32
    %c0_i32_0 = arith.constant 0 : i32
    %c0_i32_1 = arith.constant 0 : i32
    return %c0_i32, %c0_i32_0 : i32, i32
  }
  func.func @transform_1(%arg0: i32) -> (i32, i32) {
    %c0_i32 = arith.constant 0 : i32
    %c0_i32_0 = arith.constant 0 : i32
    %c0_i32_1 = arith.constant 0 : i32
    return %c0_i32, %c0_i32_0 : i32, i32
  }
  func.func @transform_2(%arg0: i32) -> (i32, i32) {
    %c0_i32 = arith.constant 0 : i32
    %c0_i32_0 = arith.constant 0 : i32
    %c0_i32_1 = arith.constant 0 : i32
    return %c0_i32, %c0_i32_0 : i32, i32
  }
  func.func @transform_3(%arg0: i32) -> (i32, i32) {
    %c0_i32 = arith.constant 0 : i32
    %c0_i32_0 = arith.constant 0 : i32
    %c0_i32_1 = arith.constant 0 : i32
    return %c0_i32, %c0_i32_0 : i32, i32
  }
  func.func @transform_4(%arg0: i32) -> (i32, i32) {
    %c0_i32 = arith.constant 0 : i32
    %c0_i32_0 = arith.constant 0 : i32
    %c0_i32_1 = arith.constant 0 : i32
    return %c0_i32, %c0_i32_0 : i32, i32
  }
  func.func @transform_5(%arg0: i32) -> (i32, i32, i32) {
    %c0_i32 = arith.constant 0 : i32
    %c0_i32_0 = arith.constant 0 : i32
    %c0_i32_1 = arith.constant 0 : i32
    %c0_i32_2 = arith.constant 0 : i32
    return %c0_i32, %c0_i32_0, %c0_i32_1 : i32, i32, i32
  }
}

module attributes {stable_mosaic.version = 11 : i64} {
  func.func @_fc_kernel(%arg0: i32, %arg1: memref<2x2304xbf16, #tpu.memory_space<vmem>>, %arg2: memref<2304x128xbf16, #tpu.memory_space<vmem>>, %arg3: memref<1x128xf32, #tpu.memory_space<vmem>>, %arg4: memref<128x128xf32, #tpu.memory_space<vmem>>, %arg5: memref<1x128xf32, #tpu.memory_space<vmem>>, %arg6: memref<2x128xf32, #tpu.memory_space<vmem>>, %arg7: memref<2x128xf32, #tpu.memory_space<vmem>>) attributes {dimension_semantics = [#tpu.dimension_semantics<arbitrary>], iteration_bounds = array<i64: 4>, scalar_prefetch = 0 : i64, scratch_operands = 1 : i64, tpu.core_type = #tpu.core_type<tc>, window_params = [{transform_indices = @transform_0, window_bounds = array<i64: 2, 2304>}, {transform_indices = @transform_1, window_bounds = array<i64: 2304, 128>}, {pipeline_mode = #tpu.pipeline_mode<synchronous>, transform_indices = @transform_2, window_bounds = array<i64: 1, 128>}, {pipeline_mode = #tpu.pipeline_mode<synchronous>, transform_indices = @transform_3, window_bounds = array<i64: 128, 128>}, {pipeline_mode = #tpu.pipeline_mode<synchronous>, transform_indices = @transform_4, window_bounds = array<i64: 1, 128>}, {pipeline_mode = #tpu.pipeline_mode<synchronous>, transform_indices = @transform_5, window_bounds = array<i64: 2, 128>}]} {
    %c0_i32 = arith.constant 0 : i32
    %0 = arith.cmpi eq, %arg0, %c0_i32 : i32
    %1 = arith.extui %0 : i1 to i32
    %c0_i32_0 = arith.constant 0 : i32
    %2 = arith.cmpi ne, %1, %c0_i32_0 : i32
    scf.if %2 {
      %cst_9 = arith.constant 0.000000e+00 : f32
      %12 = vector.broadcast %cst_9 : f32 to vector<2x128xf32>
      %c0_10 = arith.constant 0 : index
      %c0_11 = arith.constant 0 : index
      %13 = vector.load %arg7[%c0_10, %c0_11] : memref<2x128xf32, #tpu.memory_space<vmem>>, vector<2x128xf32>
      tpu.vector_store %arg7[%c0_10, %c0_11], %12 {strides = array<i32>} : memref<2x128xf32, #tpu.memory_space<vmem>>, vector<2x128xf32>,
    } else {
    }
    %c0 = arith.constant 0 : index
    %c0_1 = arith.constant 0 : index
    %3 = vector.load %arg7[%c0, %c0_1] : memref<2x128xf32, #tpu.memory_space<vmem>>, vector<2x128xf32>
    %c0_2 = arith.constant 0 : index
    %c0_3 = arith.constant 0 : index
    %4 = vector.load %arg1[%c0_2, %c0_3] : memref<2x2304xbf16, #tpu.memory_space<vmem>>, vector<2x2304xbf16>
    %c0_4 = arith.constant 0 : index
    %c0_5 = arith.constant 0 : index
    %5 = vector.load %arg2[%c0_4, %c0_5] : memref<2304x128xbf16, #tpu.memory_space<vmem>>, vector<2304x128xbf16>
    %cst = arith.constant dense<0.000000e+00> : vector<2x128xf32>
    %6 = tpu.matmul %4, %5, %cst {dimension_numbers = #tpu.dot_dimension_numbers<[1], [0], [0], [1], [0, 0, 1, 1], [], []>} : vector<2x2304xbf16>, vector<2304x128xbf16>, vector<2x128xf32> -> vector<2x128xf32>
    %7 = arith.addf %3, %6 : vector<2x128xf32>
    %c0_6 = arith.constant 0 : index
    %c0_7 = arith.constant 0 : index
    %8 = vector.load %arg7[%c0_6, %c0_7] : memref<2x128xf32, #tpu.memory_space<vmem>>, vector<2x128xf32>
    tpu.vector_store %arg7[%c0_6, %c0_7], %7 {strides = array<i32>} : memref<2x128xf32, #tpu.memory_space<vmem>>, vector<2x128xf32>,
    %c3_i32 = arith.constant 3 : i32
    %9 = arith.cmpi eq, %arg0, %c3_i32 : i32
    %10 = arith.extui %9 : i1 to i32
    %c0_i32_8 = arith.constant 0 : i32
    %11 = arith.cmpi ne, %10, %c0_i32_8 : i32
    scf.if %11 {
      %c0_9 = arith.constant 0 : index
      %c0_10 = arith.constant 0 : index
      %12 = vector.load %arg7[%c0_9, %c0_10] : memref<2x128xf32, #tpu.memory_space<vmem>>, vector<2x128xf32>
      %c0_11 = arith.constant 0 : index
      %c0_12 = arith.constant 0 : index
      %13 = vector.load %arg3[%c0_11, %c0_12] : memref<1x128xf32, #tpu.memory_space<vmem>>, vector<1x128xf32>
      %14 = vector.broadcast %13 : vector<1x128xf32> to vector<2x128xf32>
      %15 = arith.addf %12, %14 : vector<2x128xf32>
      %cst_13 = arith.constant 0.000000e+00 : f32
      %16 = vector.broadcast %cst_13 : f32 to vector<2x128xf32>
      %17 = arith.maximumf %15, %16 : vector<2x128xf32>
      %c0_14 = arith.constant 0 : index
      %c0_15 = arith.constant 0 : index
      %18 = vector.load %arg4[%c0_14, %c0_15] : memref<128x128xf32, #tpu.memory_space<vmem>>, vector<128x128xf32>
      %cst_16 = arith.constant dense<0.000000e+00> : vector<2x128xf32>
      %19 = tpu.matmul %17, %18, %cst_16 {dimension_numbers = #tpu.dot_dimension_numbers<[1], [0], [0], [1], [0, 0, 1, 1], [], []>} : vector<2x128xf32>, vector<128x128xf32>, vector<2x128xf32> -> vector<2x128xf32>
      %c0_17 = arith.constant 0 : index
      %c0_18 = arith.constant 0 : index
      %20 = vector.load %arg5[%c0_17, %c0_18] : memref<1x128xf32, #tpu.memory_space<vmem>>, vector<1x128xf32>
      %21 = vector.broadcast %20 : vector<1x128xf32> to vector<2x128xf32>
      %22 = arith.addf %19, %21 : vector<2x128xf32>
      %c0_19 = arith.constant 0 : index
      %c0_20 = arith.constant 0 : index
      %23 = vector.load %arg6[%c0_19, %c0_20] : memref<2x128xf32, #tpu.memory_space<vmem>>, vector<2x128xf32>
      tpu.vector_store %arg6[%c0_19, %c0_20], %22 {strides = array<i32>} : memref<2x128xf32, #tpu.memory_space<vmem>>, vector<2x128xf32>,
    } else {
    }
    return
  }
  func.func @transform_0(%arg0: i32) -> (i32, i32) {
    %c0_i32 = arith.constant 0 : i32
    %c0_i32_0 = arith.constant 0 : i32
    return %c0_i32, %arg0 : i32, i32
  }
  func.func @transform_1(%arg0: i32) -> (i32, i32) {
    %c0_i32 = arith.constant 0 : i32
    %c0_i32_0 = arith.constant 0 : i32
    return %arg0, %c0_i32 : i32, i32
  }
  func.func @transform_2(%arg0: i32) -> (i32, i32) {
    %c0_i32 = arith.constant 0 : i32
    %c0_i32_0 = arith.constant 0 : i32
    %c0_i32_1 = arith.constant 0 : i32
    return %c0_i32, %c0_i32_0 : i32, i32
  }
  func.func @transform_3(%arg0: i32) -> (i32, i32) {
    %c0_i32 = arith.constant 0 : i32
    %c0_i32_0 = arith.constant 0 : i32
    %c0_i32_1 = arith.constant 0 : i32
    return %c0_i32, %c0_i32_0 : i32, i32
  }
  func.func @transform_4(%arg0: i32) -> (i32, i32) {
    %c0_i32 = arith.constant 0 : i32
    %c0_i32_0 = arith.constant 0 : i32
    %c0_i32_1 = arith.constant 0 : i32
    return %c0_i32, %c0_i32_0 : i32, i32
  }
  func.func @transform_5(%arg0: i32) -> (i32, i32) {
    %c0_i32 = arith.constant 0 : i32
    %c0_i32_0 = arith.constant 0 : i32
    %c0_i32_1 = arith.constant 0 : i32
    return %c0_i32, %c0_i32_0 : i32, i32
  }
}

</mosaic_0001>

<llo_original>
// kernel: mnist_forward.3
$region0: #{mnist_forward.3}
  #allocation0 [shape = 'u32[]', space=smem, size = 0x4, offset = 0x4, fixed_abs, tag = 'smem constant byte address 0x4 - core index']
  #allocation1 [shape = 'u32[144,128]{1,0:T(1,128)}', space=vmem, size = 0x12000, scoped, tag = 'internal scratch']
  #allocation2 [shape = 'f32[2,128]{1,0:T(2,128)}', space=vmem, size = 0x400, scoped, tag = 'scratch operand']
  %s0 = inlined_call_operand.vmem [shape: bf16[2,9216], index: 0, kind: input, shape index: {}]
  %s1 = inlined_call_operand.hbm [shape: bf16[9216,128], index: 1, kind: input, shape index: {}]
  %s2 = inlined_call_operand.hbm [shape: f32[1,128], index: 2, kind: input, shape index: {}]
  %s3 = inlined_call_operand.hbm [shape: f32[128,128], index: 3, kind: input, shape index: {}]
  %s4 = inlined_call_operand.hbm [shape: f32[1,128], index: 4, kind: input, shape index: {}]
  %s5 = inlined_call_operand.hbm [shape: f32[2,128], index: 5, kind: output, shape index: {}]
  %s6 = sld [smem:[#allocation0]]
  $region77: #{mnist_forward.3} parent=0
    _
  %s8 = ssub.s32 1, %s6
  %s9 = scalar_select 0, %s8, %s6
  $region1: #{mnist_forward.3} parent=0
    #allocation3 [shape = 'u8[1179648]{0}', space=vmem, size = 0x120000, scoped, tag = 'input window, operand 1']
    #allocation4 [shape = 's32[2]{0}', space=sflag, size = 0x8, scoped, tag = 'scoped memory for mnist_forward.3']
    #allocation5 [shape = 's32[2]{0}', space=sflag, size = 0x8, scoped, tag = 'scoped memory for mnist_forward.3']
    #allocation6 [shape = 'u8[512]{0}', space=vmem, size = 0x400, scoped, tag = 'input window, operand 2, single buffered']
    #allocation7 [shape = 's32[1]{0}', space=sflag, size = 0x4, scoped, tag = 'scoped memory for mnist_forward.3']
    #allocation8 [shape = 'u8[65536]{0}', space=vmem, size = 0x10000, scoped, tag = 'input window, operand 3, single buffered']
    #allocation9 [shape = 'u8[512]{0}', space=vmem, size = 0x400, scoped, tag = 'input window, operand 4, single buffered']
    #allocation10 [shape = 's32[1]{0}', space=sflag, size = 0x4, scoped, tag = 'scoped memory for mnist_forward.3']
    #allocation11 [shape = 'u8[1024]{0}', space=vmem, size = 0x400, scoped, tag = 'output window, operand 0, single buffered']
    %10 = vsyncpa [#allocation4], 0
    %s11 = scalar_lea.sflag [#allocation4], 1
    %12 = vsyncpa %s11, 0
    %13 = vsyncpa [#allocation7], 0
    %14 = vsyncpa [#allocation10], 0
    %15 = vsyncpa [#allocation5], 0
    loop: start=0, step=1, limit=6
    $region2: #{mnist_forward.3} parent=1 // loop_pre_header
      _
    $region3: #{mnist_forward.3} parent=1 // loop_header
      %s17 = sphi 0, %s21
      %p18 = scmp.ge.s32.totalorder %s17, 6
      %s27 = sphi 0, %s29
      %s30 = sphi 0, %s27
      %s31 = sphi 0, %s30
      %s47 = sphi 0, %s31
      %s53 = sphi 0, %s55
      %s56 = sphi 0, %s53
      %s57 = sphi 0, %s56
      %s73 = sphi 0, %s57
      %s77 = sphi 0, %s77
      %s79 = sphi 0, %s77
      %s80 = sphi 0, %s79
      %s94 = sphi 0, %s80
      %s98 = sphi 0, %s98
      %s100 = sphi 0, %s98
      %s101 = sphi 0, %s100
      %s115 = sphi 0, %s101
      %s119 = sphi 0, %s119
      %s121 = sphi 0, %s119
      %s122 = sphi 0, %s121
      %s136 = sphi 0, %s122
      %s140 = sphi 0, %s140
      %s142 = sphi 0, %s140
      %s143 = sphi 0, %s142
      %s157 = sphi 0, %s143
    $region4: #{mnist_forward.3} parent=1 // loop_header_branch
      %20 = sbr.rel (%p18) target = $region8
    $region5: #{mnist_forward.3} parent=1 // loop_body
      %s22 = ssub.s32 %s17, 1
      %s23 = ssub.s32 %s17, 2
      %s24 = sadd.s32 %s17, 1
      %s25 = ssub.s32 %s17, %s24
      %p26 = scmp.eq.s32.totalorder %s25, 0
      %s28 = sadd.s32 %s27, 1
      %s29 = scalar_select %p26, %s27, %s28
      %p32 = pneg %p26
      %p33 = scmp.eq.s32.totalorder %s17, 3
      %p34 = por %p32, %p33
      %p35 = scmp.ne.s32.totalorder %s27, %s30
      %p36 = scmp.eq.s32.totalorder %s17, 0
      %p37 = por %p35, %p36
      %p38 = scmp.ne.s32.totalorder %s27, %s30
      %p39 = scmp.eq.s32.totalorder %s22, 3
      %p40 = por %p38, %p39
      %p41 = scmp.ne.s32.totalorder %s30, %s31
      %p42 = scmp.eq.s32.totalorder %s22, 0
      %p43 = por %p41, %p42
      %p44 = scmp.ne.s32.totalorder %s30, %s31
      %p45 = scmp.eq.s32.totalorder %s23, 3
      %p46 = por %p44, %p45
      %p48 = scmp.ne.s32.totalorder %s31, %s47
      %p49 = scmp.eq.s32.totalorder %s23, 0
      %p50 = por %p48, %p49
      %s51 = ssub.s32 %s17, %s24
      %p52 = scmp.eq.s32.totalorder %s51, 0
      %s54 = sadd.s32 %s53, 1
      %s55 = scalar_select %p52, %s53, %s54
      %p58 = pneg %p52
      %p59 = scmp.eq.s32.totalorder %s17, 3
      %p60 = por %p58, %p59
      %p61 = scmp.ne.s32.totalorder %s53, %s56
      %p62 = scmp.eq.s32.totalorder %s17, 0
      %p63 = por %p61, %p62
      %p64 = scmp.ne.s32.totalorder %s53, %s56
      %p65 = scmp.eq.s32.totalorder %s22, 3
      %p66 = por %p64, %p65
      %p67 = scmp.ne.s32.totalorder %s56, %s57
      %p68 = scmp.eq.s32.totalorder %s22, 0
      %p69 = por %p67, %p68
      %p70 = scmp.ne.s32.totalorder %s56, %s57
      %p71 = scmp.eq.s32.totalorder %s23, 3
      %p72 = por %p70, %p71
      %p74 = scmp.ne.s32.totalorder %s57, %s73
      %p75 = scmp.eq.s32.totalorder %s23, 0
      %p76 = por %p74, %p75
      %s78 = sadd.s32 %s77, 1
      %p81 = scmp.eq.s32.totalorder %s17, 3
      %p82 = scmp.ne.s32.totalorder %s77, %s79
      %p83 = scmp.eq.s32.totalorder %s17, 0
      %p84 = por %p82, %p83
      %p85 = scmp.ne.s32.totalorder %s77, %s79
      %p86 = scmp.eq.s32.totalorder %s22, 3
      %p87 = por %p85, %p86
      %p88 = scmp.ne.s32.totalorder %s79, %s80
      %p89 = scmp.eq.s32.totalorder %s22, 0
      %p90 = por %p88, %p89
      %p91 = scmp.ne.s32.totalorder %s79, %s80
      %p92 = scmp.eq.s32.totalorder %s23, 3
      %p93 = por %p91, %p92
      %p95 = scmp.ne.s32.totalorder %s80, %s94
      %p96 = scmp.eq.s32.totalorder %s23, 0
      %p97 = por %p95, %p96
      %s99 = sadd.s32 %s98, 1
      %p102 = scmp.eq.s32.totalorder %s17, 3
      %p103 = scmp.ne.s32.totalorder %s98, %s100
      %p104 = scmp.eq.s32.totalorder %s17, 0
      %p105 = por %p103, %p104
      %p106 = scmp.ne.s32.totalorder %s98, %s100
      %p107 = scmp.eq.s32.totalorder %s22, 3
      %p108 = por %p106, %p107
      %p109 = scmp.ne.s32.totalorder %s100, %s101
      %p110 = scmp.eq.s32.totalorder %s22, 0
      %p111 = por %p109, %p110
      %p112 = scmp.ne.s32.totalorder %s100, %s101
      %p113 = scmp.eq.s32.totalorder %s23, 3
      %p114 = por %p112, %p113
      %p116 = scmp.ne.s32.totalorder %s101, %s115
      %p117 = scmp.eq.s32.totalorder %s23, 0
      %p118 = por %p116, %p117
      %s120 = sadd.s32 %s119, 1
      %p123 = scmp.eq.s32.totalorder %s17, 3
      %p124 = scmp.ne.s32.totalorder %s119, %s121
      %p125 = scmp.eq.s32.totalorder %s17, 0
      %p126 = por %p124, %p125
      %p127 = scmp.ne.s32.totalorder %s119, %s121
      %p128 = scmp.eq.s32.totalorder %s22, 3
      %p129 = por %p127, %p128
      %p130 = scmp.ne.s32.totalorder %s121, %s122
      %p131 = scmp.eq.s32.totalorder %s22, 0
      %p132 = por %p130, %p131
      %p133 = scmp.ne.s32.totalorder %s121, %s122
      %p134 = scmp.eq.s32.totalorder %s23, 3
      %p135 = por %p133, %p134
      %p137 = scmp.ne.s32.totalorder %s122, %s136
      %p138 = scmp.eq.s32.totalorder %s23, 0
      %p139 = por %p137, %p138
      %s141 = sadd.s32 %s140, 1
      %p144 = scmp.eq.s32.totalorder %s17, 3
      %p145 = scmp.ne.s32.totalorder %s140, %s142
      %p146 = scmp.eq.s32.totalorder %s17, 0
      %p147 = por %p145, %p146
      %p148 = scmp.ne.s32.totalorder %s140, %s142
      %p149 = scmp.eq.s32.totalorder %s22, 3
      %p150 = por %p148, %p149
      %p151 = scmp.ne.s32.totalorder %s142, %s143
      %p152 = scmp.eq.s32.totalorder %s22, 0
      %p153 = por %p151, %p152
      %p154 = scmp.ne.s32.totalorder %s142, %s143
      %p155 = scmp.eq.s32.totalorder %s23, 3
      %p156 = por %p154, %p155
      %p158 = scmp.ne.s32.totalorder %s143, %s157
      %p159 = scmp.eq.s32.totalorder %s23, 0
      %p160 = por %p158, %p159
      %p161 = scmp.le.s32.totalorder 1, %s17
      %p162 = scmp.lt.s32.totalorder %s17, 5
      %p163 = pnand %p161, %p162
      %p164 = pneg %p163
      // Predicated region
      $region9: #{mnist_forward.3} parent=5 // pred_check
        _
      $region10: #{mnist_forward.3} parent=5 // pred_check_branch
        %166 = sbr.rel (%p163) target = $region12
      $region11: #{mnist_forward.3} parent=5 // pred_region
        %s167 = ssub.s32 %s17, 1
        // Predicated region
        $region13: #{mnist_forward.3} parent=11 // pred_check
          %p168 = pneg %p90
        $region14: #{mnist_forward.3} parent=11 // pred_check_branch
          %170 = sbr.rel (%p168) target = $region16
        $region15: #{mnist_forward.3} parent=11 // pred_region
          %s172 = ssub.s32 16, 16
          %173 = vsyncadd [#allocation7], %s172
          %s175 = sshll.u32 [#allocation6], 4
          %s176 = int_to_ptr.vmem [resolvable:$true] %s175
          %178 = dma.hbm_to_vmem [thread:$0]  %s2, 16, %s176, [#allocation7]
        $region16: #{mnist_forward.3} parent=11 // pred_fallthru
          _
        // Predicated region
        $region17: #{mnist_forward.3} parent=11 // pred_check
          %p179 = pneg %p111
        $region18: #{mnist_forward.3} parent=11 // pred_check_branch
          %181 = sbr.rel (%p179) target = $region20
        $region19: #{mnist_forward.3} parent=11 // pred_region
          %s183 = ssub.s32 2048, 2048
          %184 = vsyncadd [#allocation7], %s183
          %s185 = sshll.u32 [#allocation8], 4
          %s186 = int_to_ptr.vmem [resolvable:$true] %s185
          %191 = dma.hbm_to_vmem [thread:$0]  %s3, 2048, %s186, [#allocation7], 128, 128, 8
        $region20: #{mnist_forward.3} parent=11 // pred_fallthru
          _
        // Predicated region
        $region21: #{mnist_forward.3} parent=11 // pred_check
          %p192 = pneg %p132
        $region22: #{mnist_forward.3} parent=11 // pred_check_branch
          %194 = sbr.rel (%p192) target = $region24
        $region23: #{mnist_forward.3} parent=11 // pred_region
          %s196 = ssub.s32 16, 16
          %197 = vsyncadd [#allocation10], %s196
          %s199 = sshll.u32 [#allocation9], 4
          %s200 = int_to_ptr.vmem [resolvable:$true] %s199
          %202 = dma.hbm_to_vmem [thread:$0]  %s4, 16, %s200, [#allocation10]
        $region24: #{mnist_forward.3} parent=11 // pred_fallthru
          _
      $region12: #{mnist_forward.3} parent=5 // pred_fallthru
        _
      %p203 = scmp.lt.s32.totalorder %s17, 4
      // Predicated region
      $region25: #{mnist_forward.3} parent=5 // pred_check
        %p204 = pneg %p203
      $region26: #{mnist_forward.3} parent=5 // pred_check_branch
        %206 = sbr.rel (%p204) target = $region28
      $region27: #{mnist_forward.3} parent=5 // pred_region
        // Predicated region
        $region29: #{mnist_forward.3} parent=27 // pred_check
          %p207 = pneg %p37
        $region30: #{mnist_forward.3} parent=27 // pred_check_branch
          %209 = sbr.rel (%p207) target = $region32
        $region31: #{mnist_forward.3} parent=27 // pred_region
          %s210 = smul.u32 18, %s17
          %p211 = scmp.lt.s32.totalorder %s210, 71
          %s212 = scalar_select %p211, %s210, 71
          %s213 = scalar_lea.vmem %s0, %s212
          %s214 = smul.u32 18, %s17
        $region32: #{mnist_forward.3} parent=27 // pred_fallthru
          _
        // Predicated region
        $region33: #{mnist_forward.3} parent=27 // pred_check
          %p215 = pneg %p63
        $region34: #{mnist_forward.3} parent=27 // pred_check_branch
          %217 = sbr.rel (%p215) target = $region36
        $region35: #{mnist_forward.3} parent=27 // pred_region
          %s218 = sand.u32 %s53, 1
          %s219 = scalar_lea.sflag [#allocation4], %s218
          %s220 = sand.u32 %s53, 1
          %s221 = smul.addr %s220, 1152
          %s222 = scalar_lea.vmem [#allocation3], %s221
          %s223 = smul.u32 288, %s17
          %s225 = ssub.s32 18432, 18432
          %226 = vsyncadd %s219, %s225
          %s227 = smul.addr %s223, 64
          %s228 = scalar_lea.hbm %s1, %s227
          %s229 = sshll.u32 %s222, 4
          %s230 = int_to_ptr.vmem [resolvable:$true] %s229
          %235 = dma.hbm_to_vmem [thread:$0]  %s228, 18432, %s230, %s219, 64, 64, 4
        $region36: #{mnist_forward.3} parent=27 // pred_fallthru
          _
      $region28: #{mnist_forward.3} parent=5 // pred_fallthru
        _
      %p236 = scmp.le.s32.totalorder 1, %s17
      %p237 = scmp.lt.s32.totalorder %s17, 5
      %p238 = pnand %p236, %p237
      %p239 = pneg %p238
      // Predicated region
      $region37: #{mnist_forward.3} parent=5 // pred_check
        _
      $region38: #{mnist_forward.3} parent=5 // pred_check_branch
        %241 = sbr.rel (%p238) target = $region40
      $region39: #{mnist_forward.3} parent=5 // pred_region
        %s242 = ssub.s32 %s17, 1
        %s243 = sand.u32 %s56, 1
        %s244 = scalar_lea.sflag [#allocation4], %s243
        %s245 = sand.u32 %s56, 1
        %s246 = smul.addr %s245, 1152
        %s247 = scalar_lea.vmem [#allocation3], %s246
        // Predicated region
        $region41: #{mnist_forward.3} parent=39 // pred_check
          %p248 = pneg %p69
        $region42: #{mnist_forward.3} parent=39 // pred_check_branch
          %250 = sbr.rel (%p248) target = $region44
        $region43: #{mnist_forward.3} parent=39 // pred_region
          %251 = dma.done %s244, 18432
        $region44: #{mnist_forward.3} parent=39 // pred_fallthru
          _
        // Predicated region
        $region45: #{mnist_forward.3} parent=39 // pred_check
          %p252 = pneg %p90
        $region46: #{mnist_forward.3} parent=39 // pred_check_branch
          %254 = sbr.rel (%p252) target = $region48
        $region47: #{mnist_forward.3} parent=39 // pred_region
          %255 = dma.done [#allocation7], 16
        $region48: #{mnist_forward.3} parent=39 // pred_fallthru
          _
        // Predicated region
        $region49: #{mnist_forward.3} parent=39 // pred_check
          %p256 = pneg %p111
        $region50: #{mnist_forward.3} parent=39 // pred_check_branch
          %258 = sbr.rel (%p256) target = $region52
        $region51: #{mnist_forward.3} parent=39 // pred_region
          %259 = dma.done [#allocation7], 2048
        $region52: #{mnist_forward.3} parent=39 // pred_fallthru
          _
        // Predicated region
        $region53: #{mnist_forward.3} parent=39 // pred_check
          %p260 = pneg %p132
        $region54: #{mnist_forward.3} parent=39 // pred_check_branch
          %262 = sbr.rel (%p260) target = $region56
        $region55: #{mnist_forward.3} parent=39 // pred_region
          %263 = dma.done [#allocation10], 16
        $region56: #{mnist_forward.3} parent=39 // pred_fallthru
          _
        %s264 = smul.u32 18, %s22
        %p265 = scmp.lt.s32.totalorder %s264, 71
        %s266 = scalar_select %p265, %s264, 71
        %s267 = scalar_lea.vmem %s0, %s266
        %p268 = pneg %p43
        %p269 = pneg %p40
        %s270 = sand.u32 %s56, 1
        %s271 = scalar_lea.sflag [#allocation4], %s270
        %s272 = sand.u32 %s56, 1
        %s273 = smul.addr %s272, 1152
        %s274 = scalar_lea.vmem [#allocation3], %s273
        %p275 = pneg %p69
        %p276 = pneg %p66
        %p277 = pneg %p90
        %p278 = pneg %p87
        %p279 = pneg %p111
        %p280 = pneg %p108
        %p281 = pneg %p132
        %p282 = pneg %p129
        %p283 = pneg %p153
        %p284 = pneg %p150
        %s285 = smul.u32 18, %s22
        %p286 = scmp.lt.s32.totalorder %s285, 71
        %s287 = scalar_select %p286, %s285, 71
        %s288 = scalar_lea.vmem %s0, %s287
        %s289 = smul.u32 18, %s22
        %s290 = smul.u32 288, %s22
        %p292 = scmp.eq.s32.totalorder %s22, 0
        // Predicated region
        $region57: #{mnist_forward.3} parent=39 // pred_check
          %p293 = pneg %p292
        $region58: #{mnist_forward.3} parent=39 // pred_check_branch
          %295 = sbr.rel (%p293) target = $region60
        $region59: #{mnist_forward.3} parent=39 // pred_region
          %296 = vst [vmem:[#allocation2] sm:$0x3] 0.0
        $region60: #{mnist_forward.3} parent=39 // pred_fallthru
          _
        %v297 = vld [vmem:[#allocation2] sm:$0x3]
        %v298 = vld [vmem:[%s288] sm:$0xff]
        %v299 = vld [vmem:[%s288 + $0x8] sm:$0xff]
        %v300 = vld [vmem:[%s288 + $0x10] sm:$0x3]
        %v301 = vld [vmem:[%s247] sm:$0xf]
        %v302 = vld [vmem:[%s247 + $0x4] sm:$0xf]
        %v303 = vld [vmem:[%s247 + $0x8] sm:$0xf]
        %v304 = vld [vmem:[%s247 + $0xc] sm:$0xf]
        %v305 = vld [vmem:[%s247 + $0x10] sm:$0xf]
        %v306 = vld [vmem:[%s247 + $0x14] sm:$0xf]
        %v307 = vld [vmem:[%s247 + $0x18] sm:$0xf]
        %v308 = vld [vmem:[%s247 + $0x1c] sm:$0xf]
        %v309 = vld [vmem:[%s247 + $0x20] sm:$0xf]
        %v310 = vld [vmem:[%s247 + $0x24] sm:$0xf]
        %v311 = vld [vmem:[%s247 + $0x28] sm:$0xf]
        %v312 = vld [vmem:[%s247 + $0x2c] sm:$0xf]
        %v313 = vld [vmem:[%s247 + $0x30] sm:$0xf]
        %v314 = vld [vmem:[%s247 + $0x34] sm:$0xf]
        %v315 = vld [vmem:[%s247 + $0x38] sm:$0xf]
        %v316 = vld [vmem:[%s247 + $0x3c] sm:$0xf]
        %v317 = vld [vmem:[%s247 + $0x40] sm:$0xf]
        %v318 = vld [vmem:[%s247 + $0x44] sm:$0xf]
        %v319 = vld [vmem:[%s247 + $0x48] sm:$0xf]
        %v320 = vld [vmem:[%s247 + $0x4c] sm:$0xf]
        %v321 = vld [vmem:[%s247 + $0x50] sm:$0xf]
        %v322 = vld [vmem:[%s247 + $0x54] sm:$0xf]
        %v323 = vld [vmem:[%s247 + $0x58] sm:$0xf]
        %v324 = vld [vmem:[%s247 + $0x5c] sm:$0xf]
        %v325 = vld [vmem:[%s247 + $0x60] sm:$0xf]
        %v326 = vld [vmem:[%s247 + $0x64] sm:$0xf]
        %v327 = vld [vmem:[%s247 + $0x68] sm:$0xf]
        %v328 = vld [vmem:[%s247 + $0x6c] sm:$0xf]
        %v329 = vld [vmem:[%s247 + $0x70] sm:$0xf]
        %v330 = vld [vmem:[%s247 + $0x74] sm:$0xf]
        %v331 = vld [vmem:[%s247 + $0x78] sm:$0xf]
        %v332 = vld [vmem:[%s247 + $0x7c] sm:$0xf]
        %v333 = vld [vmem:[%s247 + $0x80] sm:$0xf]
        %v334 = vld [vmem:[%s247 + $0x84] sm:$0xf]
        %v335 = vld [vmem:[%s247 + $0x88] sm:$0xf]
        %v336 = vld [vmem:[%s247 + $0x8c] sm:$0xf]
        %v337 = vld [vmem:[%s247 + $0x90] sm:$0xf]
        %v338 = vld [vmem:[%s247 + $0x94] sm:$0xf]
        %v339 = vld [vmem:[%s247 + $0x98] sm:$0xf]
        %v340 = vld [vmem:[%s247 + $0x9c] sm:$0xf]
        %v341 = vld [vmem:[%s247 + $0xa0] sm:$0xf]
        %v342 = vld [vmem:[%s247 + $0xa4] sm:$0xf]
        %v343 = vld [vmem:[%s247 + $0xa8] sm:$0xf]
        %v344 = vld [vmem:[%s247 + $0xac] sm:$0xf]
        %v345 = vld [vmem:[%s247 + $0xb0] sm:$0xf]
        %v346 = vld [vmem:[%s247 + $0xb4] sm:$0xf]
        %v347 = vld [vmem:[%s247 + $0xb8] sm:$0xf]
        %v348 = vld [vmem:[%s247 + $0xbc] sm:$0xf]
        %v349 = vld [vmem:[%s247 + $0xc0] sm:$0xf]
        %v350 = vld [vmem:[%s247 + $0xc4] sm:$0xf]
        %v351 = vld [vmem:[%s247 + $0xc8] sm:$0xf]
        %v352 = vld [vmem:[%s247 + $0xcc] sm:$0xf]
        %v353 = vld [vmem:[%s247 + $0xd0] sm:$0xf]
        %v354 = vld [vmem:[%s247 + $0xd4] sm:$0xf]
        %v355 = vld [vmem:[%s247 + $0xd8] sm:$0xf]
        %v356 = vld [vmem:[%s247 + $0xdc] sm:$0xf]
        %v357 = vld [vmem:[%s247 + $0xe0] sm:$0xf]
        %v358 = vld [vmem:[%s247 + $0xe4] sm:$0xf]
        %v359 = vld [vmem:[%s247 + $0xe8] sm:$0xf]
        %v360 = vld [vmem:[%s247 + $0xec] sm:$0xf]
        %v361 = vld [vmem:[%s247 + $0xf0] sm:$0xf]
        %v362 = vld [vmem:[%s247 + $0xf4] sm:$0xf]
        %v363 = vld [vmem:[%s247 + $0xf8] sm:$0xf]
        %v364 = vld [vmem:[%s247 + $0xfc] sm:$0xf]
        %v365 = vld [vmem:[%s247 + $0x100] sm:$0xf]
        %v366 = vld [vmem:[%s247 + $0x104] sm:$0xf]
        %v367 = vld [vmem:[%s247 + $0x108] sm:$0xf]
        %v368 = vld [vmem:[%s247 + $0x10c] sm:$0xf]
        %v369 = vld [vmem:[%s247 + $0x110] sm:$0xf]
        %v370 = vld [vmem:[%s247 + $0x114] sm:$0xf]
        %v371 = vld [vmem:[%s247 + $0x118] sm:$0xf]
        %v372 = vld [vmem:[%s247 + $0x11c] sm:$0xf]
        %v373 = vld [vmem:[%s247 + $0x120] sm:$0xf]
        %v374 = vld [vmem:[%s247 + $0x124] sm:$0xf]
        %v375 = vld [vmem:[%s247 + $0x128] sm:$0xf]
        %v376 = vld [vmem:[%s247 + $0x12c] sm:$0xf]
        %v377 = vld [vmem:[%s247 + $0x130] sm:$0xf]
        %v378 = vld [vmem:[%s247 + $0x134] sm:$0xf]
        %v379 = vld [vmem:[%s247 + $0x138] sm:$0xf]
        %v380 = vld [vmem:[%s247 + $0x13c] sm:$0xf]
        %v381 = vld [vmem:[%s247 + $0x140] sm:$0xf]
        %v382 = vld [vmem:[%s247 + $0x144] sm:$0xf]
        %v383 = vld [vmem:[%s247 + $0x148] sm:$0xf]
        %v384 = vld [vmem:[%s247 + $0x14c] sm:$0xf]
        %v385 = vld [vmem:[%s247 + $0x150] sm:$0xf]
        %v386 = vld [vmem:[%s247 + $0x154] sm:$0xf]
        %v387 = vld [vmem:[%s247 + $0x158] sm:$0xf]
        %v388 = vld [vmem:[%s247 + $0x15c] sm:$0xf]
        %v389 = vld [vmem:[%s247 + $0x160] sm:$0xf]
        %v390 = vld [vmem:[%s247 + $0x164] sm:$0xf]
        %v391 = vld [vmem:[%s247 + $0x168] sm:$0xf]
        %v392 = vld [vmem:[%s247 + $0x16c] sm:$0xf]
        %v393 = vld [vmem:[%s247 + $0x170] sm:$0xf]
        %v394 = vld [vmem:[%s247 + $0x174] sm:$0xf]
        %v395 = vld [vmem:[%s247 + $0x178] sm:$0xf]
        %v396 = vld [vmem:[%s247 + $0x17c] sm:$0xf]
        %v397 = vld [vmem:[%s247 + $0x180] sm:$0xf]
        %v398 = vld [vmem:[%s247 + $0x184] sm:$0xf]
        %v399 = vld [vmem:[%s247 + $0x188] sm:$0xf]
        %v400 = vld [vmem:[%s247 + $0x18c] sm:$0xf]
        %v401 = vld [vmem:[%s247 + $0x190] sm:$0xf]
        %v402 = vld [vmem:[%s247 + $0x194] sm:$0xf]
        %v403 = vld [vmem:[%s247 + $0x198] sm:$0xf]
        %v404 = vld [vmem:[%s247 + $0x19c] sm:$0xf]
        %v405 = vld [vmem:[%s247 + $0x1a0] sm:$0xf]
        %v406 = vld [vmem:[%s247 + $0x1a4] sm:$0xf]
        %v407 = vld [vmem:[%s247 + $0x1a8] sm:$0xf]
        %v408 = vld [vmem:[%s247 + $0x1ac] sm:$0xf]
        %v409 = vld [vmem:[%s247 + $0x1b0] sm:$0xf]
        %v410 = vld [vmem:[%s247 + $0x1b4] sm:$0xf]
        %v411 = vld [vmem:[%s247 + $0x1b8] sm:$0xf]
        %v412 = vld [vmem:[%s247 + $0x1bc] sm:$0xf]
        %v413 = vld [vmem:[%s247 + $0x1c0] sm:$0xf]
        %v414 = vld [vmem:[%s247 + $0x1c4] sm:$0xf]
        %v415 = vld [vmem:[%s247 + $0x1c8] sm:$0xf]
        %v416 = vld [vmem:[%s247 + $0x1cc] sm:$0xf]
        %v417 = vld [vmem:[%s247 + $0x1d0] sm:$0xf]
        %v418 = vld [vmem:[%s247 + $0x1d4] sm:$0xf]
        %v419 = vld [vmem:[%s247 + $0x1d8] sm:$0xf]
        %v420 = vld [vmem:[%s247 + $0x1dc] sm:$0xf]
        %v421 = vld [vmem:[%s247 + $0x1e0] sm:$0xf]
        %v422 = vld [vmem:[%s247 + $0x1e4] sm:$0xf]
        %v423 = vld [vmem:[%s247 + $0x1e8] sm:$0xf]
        %v424 = vld [vmem:[%s247 + $0x1ec] sm:$0xf]
        %v425 = vld [vmem:[%s247 + $0x1f0] sm:$0xf]
        %v426 = vld [vmem:[%s247 + $0x1f4] sm:$0xf]
        %v427 = vld [vmem:[%s247 + $0x1f8] sm:$0xf]
        %v428 = vld [vmem:[%s247 + $0x1fc] sm:$0xf]
        %v429 = vld [vmem:[%s247 + $0x200] sm:$0xf]
        %v430 = vld [vmem:[%s247 + $0x204] sm:$0xf]
        %v431 = vld [vmem:[%s247 + $0x208] sm:$0xf]
        %v432 = vld [vmem:[%s247 + $0x20c] sm:$0xf]
        %v433 = vld [vmem:[%s247 + $0x210] sm:$0xf]
        %v434 = vld [vmem:[%s247 + $0x214] sm:$0xf]
        %v435 = vld [vmem:[%s247 + $0x218] sm:$0xf]
        %v436 = vld [vmem:[%s247 + $0x21c] sm:$0xf]
        %v437 = vld [vmem:[%s247 + $0x220] sm:$0xf]
        %v438 = vld [vmem:[%s247 + $0x224] sm:$0xf]
        %v439 = vld [vmem:[%s247 + $0x228] sm:$0xf]
        %v440 = vld [vmem:[%s247 + $0x22c] sm:$0xf]
        %v441 = vld [vmem:[%s247 + $0x230] sm:$0xf]
        %v442 = vld [vmem:[%s247 + $0x234] sm:$0xf]
        %v443 = vld [vmem:[%s247 + $0x238] sm:$0xf]
        %v444 = vld [vmem:[%s247 + $0x23c] sm:$0xf]
        %v445 = vld [vmem:[%s247 + $0x240] sm:$0xf]
        %v446 = vld [vmem:[%s247 + $0x244] sm:$0xf]
        %v447 = vld [vmem:[%s247 + $0x248] sm:$0xf]
        %v448 = vld [vmem:[%s247 + $0x24c] sm:$0xf]
        %v449 = vld [vmem:[%s247 + $0x250] sm:$0xf]
        %v450 = vld [vmem:[%s247 + $0x254] sm:$0xf]
        %v451 = vld [vmem:[%s247 + $0x258] sm:$0xf]
        %v452 = vld [vmem:[%s247 + $0x25c] sm:$0xf]
        %v453 = vld [vmem:[%s247 + $0x260] sm:$0xf]
        %v454 = vld [vmem:[%s247 + $0x264] sm:$0xf]
        %v455 = vld [vmem:[%s247 + $0x268] sm:$0xf]
        %v456 = vld [vmem:[%s247 + $0x26c] sm:$0xf]
        %v457 = vld [vmem:[%s247 + $0x270] sm:$0xf]
        %v458 = vld [vmem:[%s247 + $0x274] sm:$0xf]
        %v459 = vld [vmem:[%s247 + $0x278] sm:$0xf]
        %v460 = vld [vmem:[%s247 + $0x27c] sm:$0xf]
        %v461 = vld [vmem:[%s247 + $0x280] sm:$0xf]
        %v462 = vld [vmem:[%s247 + $0x284] sm:$0xf]
        %v463 = vld [vmem:[%s247 + $0x288] sm:$0xf]
        %v464 = vld [vmem:[%s247 + $0x28c] sm:$0xf]
        %v465 = vld [vmem:[%s247 + $0x290] sm:$0xf]
        %v466 = vld [vmem:[%s247 + $0x294] sm:$0xf]
        %v467 = vld [vmem:[%s247 + $0x298] sm:$0xf]
        %v468 = vld [vmem:[%s247 + $0x29c] sm:$0xf]
        %v469 = vld [vmem:[%s247 + $0x2a0] sm:$0xf]
        %v470 = vld [vmem:[%s247 + $0x2a4] sm:$0xf]
        %v471 = vld [vmem:[%s247 + $0x2a8] sm:$0xf]
        %v472 = vld [vmem:[%s247 + $0x2ac] sm:$0xf]
        %v473 = vld [vmem:[%s247 + $0x2b0] sm:$0xf]
        %v474 = vld [vmem:[%s247 + $0x2b4] sm:$0xf]
        %v475 = vld [vmem:[%s247 + $0x2b8] sm:$0xf]
        %v476 = vld [vmem:[%s247 + $0x2bc] sm:$0xf]
        %v477 = vld [vmem:[%s247 + $0x2c0] sm:$0xf]
        %v478 = vld [vmem:[%s247 + $0x2c4] sm:$0xf]
        %v479 = vld [vmem:[%s247 + $0x2c8] sm:$0xf]
        %v480 = vld [vmem:[%s247 + $0x2cc] sm:$0xf]
        %v481 = vld [vmem:[%s247 + $0x2d0] sm:$0xf]
        %v482 = vld [vmem:[%s247 + $0x2d4] sm:$0xf]
        %v483 = vld [vmem:[%s247 + $0x2d8] sm:$0xf]
        %v484 = vld [vmem:[%s247 + $0x2dc] sm:$0xf]
        %v485 = vld [vmem:[%s247 + $0x2e0] sm:$0xf]
        %v486 = vld [vmem:[%s247 + $0x2e4] sm:$0xf]
        %v487 = vld [vmem:[%s247 + $0x2e8] sm:$0xf]
        %v488 = vld [vmem:[%s247 + $0x2ec] sm:$0xf]
        %v489 = vld [vmem:[%s247 + $0x2f0] sm:$0xf]
        %v490 = vld [vmem:[%s247 + $0x2f4] sm:$0xf]
        %v491 = vld [vmem:[%s247 + $0x2f8] sm:$0xf]
        %v492 = vld [vmem:[%s247 + $0x2fc] sm:$0xf]
        %v493 = vld [vmem:[%s247 + $0x300] sm:$0xf]
        %v494 = vld [vmem:[%s247 + $0x304] sm:$0xf]
        %v495 = vld [vmem:[%s247 + $0x308] sm:$0xf]
        %v496 = vld [vmem:[%s247 + $0x30c] sm:$0xf]
        %v497 = vld [vmem:[%s247 + $0x310] sm:$0xf]
        %v498 = vld [vmem:[%s247 + $0x314] sm:$0xf]
        %v499 = vld [vmem:[%s247 + $0x318] sm:$0xf]
        %v500 = vld [vmem:[%s247 + $0x31c] sm:$0xf]
        %v501 = vld [vmem:[%s247 + $0x320] sm:$0xf]
        %v502 = vld [vmem:[%s247 + $0x324] sm:$0xf]
        %v503 = vld [vmem:[%s247 + $0x328] sm:$0xf]
        %v504 = vld [vmem:[%s247 + $0x32c] sm:$0xf]
        %v505 = vld [vmem:[%s247 + $0x330] sm:$0xf]
        %v506 = vld [vmem:[%s247 + $0x334] sm:$0xf]
        %v507 = vld [vmem:[%s247 + $0x338] sm:$0xf]
        %v508 = vld [vmem:[%s247 + $0x33c] sm:$0xf]
        %v509 = vld [vmem:[%s247 + $0x340] sm:$0xf]
        %v510 = vld [vmem:[%s247 + $0x344] sm:$0xf]
        %v511 = vld [vmem:[%s247 + $0x348] sm:$0xf]
        %v512 = vld [vmem:[%s247 + $0x34c] sm:$0xf]
        %v513 = vld [vmem:[%s247 + $0x350] sm:$0xf]
        %v514 = vld [vmem:[%s247 + $0x354] sm:$0xf]
        %v515 = vld [vmem:[%s247 + $0x358] sm:$0xf]
        %v516 = vld [vmem:[%s247 + $0x35c] sm:$0xf]
        %v517 = vld [vmem:[%s247 + $0x360] sm:$0xf]
        %v518 = vld [vmem:[%s247 + $0x364] sm:$0xf]
        %v519 = vld [vmem:[%s247 + $0x368] sm:$0xf]
        %v520 = vld [vmem:[%s247 + $0x36c] sm:$0xf]
        %v521 = vld [vmem:[%s247 + $0x370] sm:$0xf]
        %v522 = vld [vmem:[%s247 + $0x374] sm:$0xf]
        %v523 = vld [vmem:[%s247 + $0x378] sm:$0xf]
        %v524 = vld [vmem:[%s247 + $0x37c] sm:$0xf]
        %v525 = vld [vmem:[%s247 + $0x380] sm:$0xf]
        %v526 = vld [vmem:[%s247 + $0x384] sm:$0xf]
        %v527 = vld [vmem:[%s247 + $0x388] sm:$0xf]
        %v528 = vld [vmem:[%s247 + $0x38c] sm:$0xf]
        %v529 = vld [vmem:[%s247 + $0x390] sm:$0xf]
        %v530 = vld [vmem:[%s247 + $0x394] sm:$0xf]
        %v531 = vld [vmem:[%s247 + $0x398] sm:$0xf]
        %v532 = vld [vmem:[%s247 + $0x39c] sm:$0xf]
        %v533 = vld [vmem:[%s247 + $0x3a0] sm:$0xf]
        %v534 = vld [vmem:[%s247 + $0x3a4] sm:$0xf]
        %v535 = vld [vmem:[%s247 + $0x3a8] sm:$0xf]
        %v536 = vld [vmem:[%s247 + $0x3ac] sm:$0xf]
        %v537 = vld [vmem:[%s247 + $0x3b0] sm:$0xf]
        %v538 = vld [vmem:[%s247 + $0x3b4] sm:$0xf]
        %v539 = vld [vmem:[%s247 + $0x3b8] sm:$0xf]
        %v540 = vld [vmem:[%s247 + $0x3bc] sm:$0xf]
        %v541 = vld [vmem:[%s247 + $0x3c0] sm:$0xf]
        %v542 = vld [vmem:[%s247 + $0x3c4] sm:$0xf]
        %v543 = vld [vmem:[%s247 + $0x3c8] sm:$0xf]
        %v544 = vld [vmem:[%s247 + $0x3cc] sm:$0xf]
        %v545 = vld [vmem:[%s247 + $0x3d0] sm:$0xf]
        %v546 = vld [vmem:[%s247 + $0x3d4] sm:$0xf]
        %v547 = vld [vmem:[%s247 + $0x3d8] sm:$0xf]
        %v548 = vld [vmem:[%s247 + $0x3dc] sm:$0xf]
        %v549 = vld [vmem:[%s247 + $0x3e0] sm:$0xf]
        %v550 = vld [vmem:[%s247 + $0x3e4] sm:$0xf]
        %v551 = vld [vmem:[%s247 + $0x3e8] sm:$0xf]
        %v552 = vld [vmem:[%s247 + $0x3ec] sm:$0xf]
        %v553 = vld [vmem:[%s247 + $0x3f0] sm:$0xf]
        %v554 = vld [vmem:[%s247 + $0x3f4] sm:$0xf]
        %v555 = vld [vmem:[%s247 + $0x3f8] sm:$0xf]
        %v556 = vld [vmem:[%s247 + $0x3fc] sm:$0xf]
        %v557 = vld [vmem:[%s247 + $0x400] sm:$0xf]
        %v558 = vld [vmem:[%s247 + $0x404] sm:$0xf]
        %v559 = vld [vmem:[%s247 + $0x408] sm:$0xf]
        %v560 = vld [vmem:[%s247 + $0x40c] sm:$0xf]
        %v561 = vld [vmem:[%s247 + $0x410] sm:$0xf]
        %v562 = vld [vmem:[%s247 + $0x414] sm:$0xf]
        %v563 = vld [vmem:[%s247 + $0x418] sm:$0xf]
        %v564 = vld [vmem:[%s247 + $0x41c] sm:$0xf]
        %v565 = vld [vmem:[%s247 + $0x420] sm:$0xf]
        %v566 = vld [vmem:[%s247 + $0x424] sm:$0xf]
        %v567 = vld [vmem:[%s247 + $0x428] sm:$0xf]
        %v568 = vld [vmem:[%s247 + $0x42c] sm:$0xf]
        %v569 = vld [vmem:[%s247 + $0x430] sm:$0xf]
        %v570 = vld [vmem:[%s247 + $0x434] sm:$0xf]
        %v571 = vld [vmem:[%s247 + $0x438] sm:$0xf]
        %v572 = vld [vmem:[%s247 + $0x43c] sm:$0xf]
        %v573 = vld [vmem:[%s247 + $0x440] sm:$0xf]
        %v574 = vld [vmem:[%s247 + $0x444] sm:$0xf]
        %v575 = vld [vmem:[%s247 + $0x448] sm:$0xf]
        %v576 = vld [vmem:[%s247 + $0x44c] sm:$0xf]
        %v577 = vld [vmem:[%s247 + $0x450] sm:$0xf]
        %v578 = vld [vmem:[%s247 + $0x454] sm:$0xf]
        %v579 = vld [vmem:[%s247 + $0x458] sm:$0xf]
        %v580 = vld [vmem:[%s247 + $0x45c] sm:$0xf]
        %v581 = vld [vmem:[%s247 + $0x460] sm:$0xf]
        %v582 = vld [vmem:[%s247 + $0x464] sm:$0xf]
        %v583 = vld [vmem:[%s247 + $0x468] sm:$0xf]
        %v584 = vld [vmem:[%s247 + $0x46c] sm:$0xf]
        %v585 = vld [vmem:[%s247 + $0x470] sm:$0xf]
        %v586 = vld [vmem:[%s247 + $0x474] sm:$0xf]
        %v587 = vld [vmem:[%s247 + $0x478] sm:$0xf]
        %v588 = vld [vmem:[%s247 + $0x47c] sm:$0xf]
        %v592 = vcombine.high %v298, %v298
        %v594 = vunpack.c.l.s4 1966171168
        %v595 = vunpack.c.0.s8 %v594
        %v596 = vlaneseq
        %v597 = vshrl.u32 %v596, 7
        %v598 = vsub.s32 %v595, %v597
        %v599 = vrot.slane %v298, %v598
        %v601 = vunpack.c.l.s4 1966171168
        %v602 = vunpack.c.0.s8 %v601
        %v603 = vlaneseq
        %v604 = vshrl.u32 %v603, 7
        %v605 = vsub.s32 %v602, %v604
        %v606 = vrot.slane %v592, %v605
        %v607 = vcombine.high %v599, %v599
        %v608 = vcombine.high %v606, %v606
        %v610 = vunpack.c.l.s4 1966171168
        %v611 = vunpack.c.0.s8 %v610
        %v612 = vlaneseq
        %v613 = vshrl.u32 %v612, 7
        %v614 = vsub.s32 %v611, %v613
        %v615 = vrot.slane %v599, %v614
        %v617 = vunpack.c.l.s4 1966171168
        %v618 = vunpack.c.0.s8 %v617
        %v619 = vlaneseq
        %v620 = vshrl.u32 %v619, 7
        %v621 = vsub.s32 %v618, %v620
        %v622 = vrot.slane %v606, %v621
        %v624 = vunpack.c.l.s4 1966171168
        %v625 = vunpack.c.0.s8 %v624
        %v626 = vlaneseq
        %v627 = vshrl.u32 %v626, 7
        %v628 = vsub.s32 %v625, %v627
        %v629 = vrot.slane %v607, %v628
        %v631 = vunpack.c.l.s4 1966171168
        %v632 = vunpack.c.0.s8 %v631
        %v633 = vlaneseq
        %v634 = vshrl.u32 %v633, 7
        %v635 = vsub.s32 %v632, %v634
        %v636 = vrot.slane %v608, %v635
        %v637 = vcombine.high %v615, %v615
        %v638 = vcombine.high %v622, %v622
        %v639 = vcombine.high %v629, %v629
        %v640 = vcombine.high %v636, %v636
        %v641 = vcombine.high %v299, %v299
        %v643 = vunpack.c.l.s4 1966171168
        %v644 = vunpack.c.0.s8 %v643
        %v645 = vlaneseq
        %v646 = vshrl.u32 %v645, 7
        %v647 = vsub.s32 %v644, %v646
        %v648 = vrot.slane %v299, %v647
        %v650 = vunpack.c.l.s4 1966171168
        %v651 = vunpack.c.0.s8 %v650
        %v652 = vlaneseq
        %v653 = vshrl.u32 %v652, 7
        %v654 = vsub.s32 %v651, %v653
        %v655 = vrot.slane %v641, %v654
        %v656 = vcombine.high %v648, %v648
        %v657 = vcombine.high %v655, %v655
        %v659 = vunpack.c.l.s4 1966171168
        %v660 = vunpack.c.0.s8 %v659
        %v661 = vlaneseq
        %v662 = vshrl.u32 %v661, 7
        %v663 = vsub.s32 %v660, %v662
        %v664 = vrot.slane %v648, %v663
        %v666 = vunpack.c.l.s4 1966171168
        %v667 = vunpack.c.0.s8 %v666
        %v668 = vlaneseq
        %v669 = vshrl.u32 %v668, 7
        %v670 = vsub.s32 %v667, %v669
        %v671 = vrot.slane %v655, %v670
        %v673 = vunpack.c.l.s4 1966171168
        %v674 = vunpack.c.0.s8 %v673
        %v675 = vlaneseq
        %v676 = vshrl.u32 %v675, 7
        %v677 = vsub.s32 %v674, %v676
        %v678 = vrot.slane %v656, %v677
        %v680 = vunpack.c.l.s4 1966171168
        %v681 = vunpack.c.0.s8 %v680
        %v682 = vlaneseq
        %v683 = vshrl.u32 %v682, 7
        %v684 = vsub.s32 %v681, %v683
        %v685 = vrot.slane %v657, %v684
        %v686 = vcombine.high %v664, %v664
        %v687 = vcombine.high %v671, %v671
        %v688 = vcombine.high %v678, %v678
        %v689 = vcombine.high %v685, %v685
        %v691 = vunpack.c.l.s4 1966171168
        %v692 = vunpack.c.0.s8 %v691
        %v693 = vlaneseq
        %v694 = vshrl.u32 %v693, 7
        %v695 = vsub.s32 %v692, %v694
        %v696 = vrot.slane %v300, %v695
        %v697 = vcombine.high %v696, %v696
        %v699 = vunpack.c.l.s4 1966171168
        %v700 = vunpack.c.0.s8 %v699
        %v701 = vlaneseq
        %v702 = vshrl.u32 %v701, 7
        %v703 = vsub.s32 %v700, %v702
        %v704 = vrot.slane %v696, %v703
        %v706 = vunpack.c.l.s4 1966171168
        %v707 = vunpack.c.0.s8 %v706
        %v708 = vlaneseq
        %v709 = vshrl.u32 %v708, 7
        %v710 = vsub.s32 %v707, %v709
        %v711 = vrot.slane %v697, %v710
        %v1018 = vunpack.c.l.b16 %v301
        %v1019 = vunpack.c.l.b16 %v302
        %v1020 = vunpack.c.l.b16 %v303
        %v1021 = vunpack.c.l.b16 %v304
        %v1022 = vunpack.c.l.b16 %v305
        %v1023 = vunpack.c.l.b16 %v306
        %v1024 = vunpack.c.l.b16 %v307
        %v1025 = vunpack.c.l.b16 %v308
        %v1026 = vunpack.c.l.b16 %v309
        %v1027 = vunpack.c.l.b16 %v310
        %v1028 = vunpack.c.l.b16 %v311
        %v1029 = vunpack.c.l.b16 %v312
        %v1030 = vunpack.c.l.b16 %v313
        %v1031 = vunpack.c.l.b16 %v314
        %v1032 = vunpack.c.l.b16 %v315
        %v1033 = vunpack.c.l.b16 %v316
        %v1034 = vunpack.c.l.b16 %v317
        %v1035 = vunpack.c.l.b16 %v318
        %v1036 = vunpack.c.l.b16 %v319
        %v1037 = vunpack.c.l.b16 %v320
        %v1038 = vunpack.c.l.b16 %v321
        %v1039 = vunpack.c.l.b16 %v322
        %v1040 = vunpack.c.l.b16 %v323
        %v1041 = vunpack.c.l.b16 %v324
        %v1042 = vunpack.c.l.b16 %v325
        %v1043 = vunpack.c.l.b16 %v326
        %v1044 = vunpack.c.l.b16 %v327
        %v1045 = vunpack.c.l.b16 %v328
        %v1046 = vunpack.c.l.b16 %v329
        %v1047 = vunpack.c.l.b16 %v330
        %v1048 = vunpack.c.l.b16 %v331
        %v1049 = vunpack.c.l.b16 %v332
        %v1050 = vunpack.c.l.b16 %v333
        %v1051 = vunpack.c.l.b16 %v334
        %v1052 = vunpack.c.l.b16 %v335
        %v1053 = vunpack.c.l.b16 %v336
        %v1054 = vunpack.c.l.b16 %v337
        %v1055 = vunpack.c.l.b16 %v338
        %v1056 = vunpack.c.l.b16 %v339
        %v1057 = vunpack.c.l.b16 %v340
        %v1058 = vunpack.c.l.b16 %v341
        %v1059 = vunpack.c.l.b16 %v342
        %v1060 = vunpack.c.l.b16 %v343
        %v1061 = vunpack.c.l.b16 %v344
        %v1062 = vunpack.c.l.b16 %v345
        %v1063 = vunpack.c.l.b16 %v346
        %v1064 = vunpack.c.l.b16 %v347
        %v1065 = vunpack.c.l.b16 %v348
        %v1066 = vunpack.c.l.b16 %v349
        %v1067 = vunpack.c.l.b16 %v350
        %v1068 = vunpack.c.l.b16 %v351
        %v1069 = vunpack.c.l.b16 %v352
        %v1070 = vunpack.c.l.b16 %v353
        %v1071 = vunpack.c.l.b16 %v354
        %v1072 = vunpack.c.l.b16 %v355
        %v1073 = vunpack.c.l.b16 %v356
        %v1074 = vunpack.c.l.b16 %v357
        %v1075 = vunpack.c.l.b16 %v358
        %v1076 = vunpack.c.l.b16 %v359
        %v1077 = vunpack.c.l.b16 %v360
        %v1078 = vunpack.c.l.b16 %v361
        %v1079 = vunpack.c.l.b16 %v362
        %v1080 = vunpack.c.l.b16 %v363
        %v1081 = vunpack.c.l.b16 %v364
        %v1082 = vunpack.c.l.b16 %v365
        %v1083 = vunpack.c.l.b16 %v366
        %v1084 = vunpack.c.l.b16 %v367
        %v1085 = vunpack.c.l.b16 %v368
        %v1086 = vunpack.c.l.b16 %v369
        %v1087 = vunpack.c.l.b16 %v370
        %v1088 = vunpack.c.l.b16 %v371
        %v1089 = vunpack.c.l.b16 %v372
        %v1090 = vunpack.c.l.b16 %v373
        %v1091 = vunpack.c.l.b16 %v374
        %v1092 = vunpack.c.l.b16 %v375
        %v1093 = vunpack.c.l.b16 %v376
        %v1094 = vunpack.c.l.b16 %v377
        %v1095 = vunpack.c.l.b16 %v378
        %v1096 = vunpack.c.l.b16 %v379
        %v1097 = vunpack.c.l.b16 %v380
        %v1098 = vunpack.c.l.b16 %v381
        %v1099 = vunpack.c.l.b16 %v382
        %v1100 = vunpack.c.l.b16 %v383
        %v1101 = vunpack.c.l.b16 %v384
        %v1102 = vunpack.c.l.b16 %v385
        %v1103 = vunpack.c.l.b16 %v386
        %v1104 = vunpack.c.l.b16 %v387
        %v1105 = vunpack.c.l.b16 %v388
        %v1106 = vunpack.c.l.b16 %v389
        %v1107 = vunpack.c.l.b16 %v390
        %v1108 = vunpack.c.l.b16 %v391
        %v1109 = vunpack.c.l.b16 %v392
        %v1110 = vunpack.c.l.b16 %v393
        %v1111 = vunpack.c.l.b16 %v394
        %v1112 = vunpack.c.l.b16 %v395
        %v1113 = vunpack.c.l.b16 %v396
        %v1114 = vunpack.c.l.b16 %v397
        %v1115 = vunpack.c.l.b16 %v398
        %v1116 = vunpack.c.l.b16 %v399
        %v1117 = vunpack.c.l.b16 %v400
        %v1118 = vunpack.c.l.b16 %v401
        %v1119 = vunpack.c.l.b16 %v402
        %v1120 = vunpack.c.l.b16 %v403
        %v1121 = vunpack.c.l.b16 %v404
        %v1122 = vunpack.c.l.b16 %v405
        %v1123 = vunpack.c.l.b16 %v406
        %v1124 = vunpack.c.l.b16 %v407
        %v1125 = vunpack.c.l.b16 %v408
        %v1126 = vunpack.c.l.b16 %v409
        %v1127 = vunpack.c.l.b16 %v410
        %v1128 = vunpack.c.l.b16 %v411
        %v1129 = vunpack.c.l.b16 %v412
        %v1130 = vunpack.c.l.b16 %v413
        %v1131 = vunpack.c.l.b16 %v414
        %v1132 = vunpack.c.l.b16 %v415
        %v1133 = vunpack.c.l.b16 %v416
        %v1134 = vunpack.c.l.b16 %v417
        %v1135 = vunpack.c.l.b16 %v418
        %v1136 = vunpack.c.l.b16 %v419
        %v1137 = vunpack.c.l.b16 %v420
        %v1138 = vunpack.c.l.b16 %v421
        %v1139 = vunpack.c.l.b16 %v422
        %v1140 = vunpack.c.l.b16 %v423
        %v1141 = vunpack.c.l.b16 %v424
        %v1142 = vunpack.c.l.b16 %v425
        %v1143 = vunpack.c.l.b16 %v426
        %v1144 = vunpack.c.l.b16 %v427
        %v1145 = vunpack.c.l.b16 %v428
        %v1146 = vunpack.c.l.b16 %v429
        %v1147 = vunpack.c.l.b16 %v430
        %v1148 = vunpack.c.l.b16 %v431
        %v1149 = vunpack.c.l.b16 %v432
        %v1150 = vunpack.c.l.b16 %v433
        %v1151 = vunpack.c.l.b16 %v434
        %v1152 = vunpack.c.l.b16 %v435
        %v1153 = vunpack.c.l.b16 %v436
        %v1154 = vunpack.c.l.b16 %v437
        %v1155 = vunpack.c.l.b16 %v438
        %v1156 = vunpack.c.l.b16 %v439
        %v1157 = vunpack.c.l.b16 %v440
        %v1158 = vunpack.c.l.b16 %v441
        %v1159 = vunpack.c.l.b16 %v442
        %v1160 = vunpack.c.l.b16 %v443
        %v1161 = vunpack.c.l.b16 %v444
        %v1162 = vunpack.c.l.b16 %v445
        %v1163 = vunpack.c.l.b16 %v446
        %v1164 = vunpack.c.l.b16 %v447
        %v1165 = vunpack.c.l.b16 %v448
        %v1166 = vunpack.c.l.b16 %v449
        %v1167 = vunpack.c.l.b16 %v450
        %v1168 = vunpack.c.l.b16 %v451
        %v1169 = vunpack.c.l.b16 %v452
        %v1170 = vunpack.c.l.b16 %v453
        %v1171 = vunpack.c.l.b16 %v454
        %v1172 = vunpack.c.l.b16 %v455
        %v1173 = vunpack.c.l.b16 %v456
        %v1174 = vunpack.c.l.b16 %v457
        %v1175 = vunpack.c.l.b16 %v458
        %v1176 = vunpack.c.l.b16 %v459
        %v1177 = vunpack.c.l.b16 %v460
        %v1178 = vunpack.c.l.b16 %v461
        %v1179 = vunpack.c.l.b16 %v462
        %v1180 = vunpack.c.l.b16 %v463
        %v1181 = vunpack.c.l.b16 %v464
        %v1182 = vunpack.c.l.b16 %v465
        %v1183 = vunpack.c.l.b16 %v466
        %v1184 = vunpack.c.l.b16 %v467
        %v1185 = vunpack.c.l.b16 %v468
        %v1186 = vunpack.c.l.b16 %v469
        %v1187 = vunpack.c.l.b16 %v470
        %v1188 = vunpack.c.l.b16 %v471
        %v1189 = vunpack.c.l.b16 %v472
        %v1190 = vunpack.c.l.b16 %v473
        %v1191 = vunpack.c.l.b16 %v474
        %v1192 = vunpack.c.l.b16 %v475
        %v1193 = vunpack.c.l.b16 %v476
        %v1194 = vunpack.c.l.b16 %v477
        %v1195 = vunpack.c.l.b16 %v478
        %v1196 = vunpack.c.l.b16 %v479
        %v1197 = vunpack.c.l.b16 %v480
        %v1198 = vunpack.c.l.b16 %v481
        %v1199 = vunpack.c.l.b16 %v482
        %v1200 = vunpack.c.l.b16 %v483
        %v1201 = vunpack.c.l.b16 %v484
        %v1202 = vunpack.c.l.b16 %v485
        %v1203 = vunpack.c.l.b16 %v486
        %v1204 = vunpack.c.l.b16 %v487
        %v1205 = vunpack.c.l.b16 %v488
        %v1206 = vunpack.c.l.b16 %v489
        %v1207 = vunpack.c.l.b16 %v490
        %v1208 = vunpack.c.l.b16 %v491
        %v1209 = vunpack.c.l.b16 %v492
        %v1210 = vunpack.c.l.b16 %v493
        %v1211 = vunpack.c.l.b16 %v494
        %v1212 = vunpack.c.l.b16 %v495
        %v1213 = vunpack.c.l.b16 %v496
        %v1214 = vunpack.c.l.b16 %v497
        %v1215 = vunpack.c.l.b16 %v498
        %v1216 = vunpack.c.l.b16 %v499
        %v1217 = vunpack.c.l.b16 %v500
        %v1218 = vunpack.c.l.b16 %v501
        %v1219 = vunpack.c.l.b16 %v502
        %v1220 = vunpack.c.l.b16 %v503
        %v1221 = vunpack.c.l.b16 %v504
        %v1222 = vunpack.c.l.b16 %v505
        %v1223 = vunpack.c.l.b16 %v506
        %v1224 = vunpack.c.l.b16 %v507
        %v1225 = vunpack.c.l.b16 %v508
        %v1226 = vunpack.c.l.b16 %v509
        %v1227 = vunpack.c.l.b16 %v510
        %v1228 = vunpack.c.l.b16 %v511
        %v1229 = vunpack.c.l.b16 %v512
        %v1230 = vunpack.c.l.b16 %v513
        %v1231 = vunpack.c.l.b16 %v514
        %v1232 = vunpack.c.l.b16 %v515
        %v1233 = vunpack.c.l.b16 %v516
        %v1234 = vunpack.c.l.b16 %v517
        %v1235 = vunpack.c.l.b16 %v518
        %v1236 = vunpack.c.l.b16 %v519
        %v1237 = vunpack.c.l.b16 %v520
        %v1238 = vunpack.c.l.b16 %v521
        %v1239 = vunpack.c.l.b16 %v522
        %v1240 = vunpack.c.l.b16 %v523
        %v1241 = vunpack.c.l.b16 %v524
        %v1242 = vunpack.c.l.b16 %v525
        %v1243 = vunpack.c.l.b16 %v526
        %v1244 = vunpack.c.l.b16 %v527
        %v1245 = vunpack.c.l.b16 %v528
        %v1246 = vunpack.c.l.b16 %v529
        %v1247 = vunpack.c.l.b16 %v530
        %v1248 = vunpack.c.l.b16 %v531
        %v1249 = vunpack.c.l.b16 %v532
        %v1250 = vunpack.c.l.b16 %v533
        %v1251 = vunpack.c.l.b16 %v534
        %v1252 = vunpack.c.l.b16 %v535
        %v1253 = vunpack.c.l.b16 %v536
        %v1254 = vunpack.c.l.b16 %v537
        %v1255 = vunpack.c.l.b16 %v538
        %v1256 = vunpack.c.l.b16 %v539
        %v1257 = vunpack.c.l.b16 %v540
        %v1258 = vunpack.c.l.b16 %v541
        %v1259 = vunpack.c.l.b16 %v542
        %v1260 = vunpack.c.l.b16 %v543
        %v1261 = vunpack.c.l.b16 %v544
        %v1262 = vunpack.c.l.b16 %v545
        %v1263 = vunpack.c.l.b16 %v546
        %v1264 = vunpack.c.l.b16 %v547
        %v1265 = vunpack.c.l.b16 %v548
        %v1266 = vunpack.c.l.b16 %v549
        %v1267 = vunpack.c.l.b16 %v550
        %v1268 = vunpack.c.l.b16 %v551
        %v1269 = vunpack.c.l.b16 %v552
        %v1270 = vunpack.c.l.b16 %v553
        %v1271 = vunpack.c.l.b16 %v554
        %v1272 = vunpack.c.l.b16 %v555
        %v1273 = vunpack.c.l.b16 %v556
        %v1274 = vunpack.c.l.b16 %v557
        %v1275 = vunpack.c.l.b16 %v558
        %v1276 = vunpack.c.l.b16 %v559
        %v1277 = vunpack.c.l.b16 %v560
        %v1278 = vunpack.c.l.b16 %v561
        %v1279 = vunpack.c.l.b16 %v562
        %v1280 = vunpack.c.l.b16 %v563
        %v1281 = vunpack.c.l.b16 %v564
        %v1282 = vunpack.c.l.b16 %v565
        %v1283 = vunpack.c.l.b16 %v566
        %v1284 = vunpack.c.l.b16 %v567
        %v1285 = vunpack.c.l.b16 %v568
        %v1286 = vunpack.c.l.b16 %v569
        %v1287 = vunpack.c.l.b16 %v570
        %v1288 = vunpack.c.l.b16 %v571
        %v1289 = vunpack.c.l.b16 %v572
        %v1290 = vunpack.c.l.b16 %v573
        %v1291 = vunpack.c.l.b16 %v574
        %v1292 = vunpack.c.l.b16 %v575
        %v1293 = vunpack.c.l.b16 %v576
        %v1294 = vunpack.c.l.b16 %v577
        %v1295 = vunpack.c.l.b16 %v578
        %v1296 = vunpack.c.l.b16 %v579
        %v1297 = vunpack.c.l.b16 %v580
        %v1298 = vunpack.c.l.b16 %v581
        %v1299 = vunpack.c.l.b16 %v582
        %v1300 = vunpack.c.l.b16 %v583
        %v1301 = vunpack.c.l.b16 %v584
        %v1302 = vunpack.c.l.b16 %v585
        %v1303 = vunpack.c.l.b16 %v586
        %v1304 = vunpack.c.l.b16 %v587
        %v1305 = vunpack.c.l.b16 %v588
        %v1306 = vpack.c.b16 %v1019, %v1018
        %v1307 = vpack.c.b16 %v1021, %v1020
        %v1308 = vpack.c.b16 %v1023, %v1022
        %v1309 = vpack.c.b16 %v1025, %v1024
        %v1310 = vpack.c.b16 %v1027, %v1026
        %v1311 = vpack.c.b16 %v1029, %v1028
        %v1312 = vpack.c.b16 %v1031, %v1030
        %v1313 = vpack.c.b16 %v1033, %v1032
        %v1314 = vpack.c.b16 %v1035, %v1034
        %v1315 = vpack.c.b16 %v1037, %v1036
        %v1316 = vpack.c.b16 %v1039, %v1038
        %v1317 = vpack.c.b16 %v1041, %v1040
        %v1318 = vpack.c.b16 %v1043, %v1042
        %v1319 = vpack.c.b16 %v1045, %v1044
        %v1320 = vpack.c.b16 %v1047, %v1046
        %v1321 = vpack.c.b16 %v1049, %v1048
        %v1322 = vpack.c.b16 %v1051, %v1050
        %v1323 = vpack.c.b16 %v1053, %v1052
        %v1324 = vpack.c.b16 %v1055, %v1054
        %v1325 = vpack.c.b16 %v1057, %v1056
        %v1326 = vpack.c.b16 %v1059, %v1058
        %v1327 = vpack.c.b16 %v1061, %v1060
        %v1328 = vpack.c.b16 %v1063, %v1062
        %v1329 = vpack.c.b16 %v1065, %v1064
        %v1330 = vpack.c.b16 %v1067, %v1066
        %v1331 = vpack.c.b16 %v1069, %v1068
        %v1332 = vpack.c.b16 %v1071, %v1070
        %v1333 = vpack.c.b16 %v1073, %v1072
        %v1334 = vpack.c.b16 %v1075, %v1074
        %v1335 = vpack.c.b16 %v1077, %v1076
        %v1336 = vpack.c.b16 %v1079, %v1078
        %v1337 = vpack.c.b16 %v1081, %v1080
        %v1338 = vpack.c.b16 %v1083, %v1082
        %v1339 = vpack.c.b16 %v1085, %v1084
        %v1340 = vpack.c.b16 %v1087, %v1086
        %v1341 = vpack.c.b16 %v1089, %v1088
        %v1342 = vpack.c.b16 %v1091, %v1090
        %v1343 = vpack.c.b16 %v1093, %v1092
        %v1344 = vpack.c.b16 %v1095, %v1094
        %v1345 = vpack.c.b16 %v1097, %v1096
        %v1346 = vpack.c.b16 %v1099, %v1098
        %v1347 = vpack.c.b16 %v1101, %v1100
        %v1348 = vpack.c.b16 %v1103, %v1102
        %v1349 = vpack.c.b16 %v1105, %v1104
        %v1350 = vpack.c.b16 %v1107, %v1106
        %v1351 = vpack.c.b16 %v1109, %v1108
        %v1352 = vpack.c.b16 %v1111, %v1110
        %v1353 = vpack.c.b16 %v1113, %v1112
        %v1354 = vpack.c.b16 %v1115, %v1114
        %v1355 = vpack.c.b16 %v1117, %v1116
        %v1356 = vpack.c.b16 %v1119, %v1118
        %v1357 = vpack.c.b16 %v1121, %v1120
        %v1358 = vpack.c.b16 %v1123, %v1122
        %v1359 = vpack.c.b16 %v1125, %v1124
        %v1360 = vpack.c.b16 %v1127, %v1126
        %v1361 = vpack.c.b16 %v1129, %v1128
        %v1362 = vpack.c.b16 %v1131, %v1130
        %v1363 = vpack.c.b16 %v1133, %v1132
        %v1364 = vpack.c.b16 %v1135, %v1134
        %v1365 = vpack.c.b16 %v1137, %v1136
        %v1366 = vpack.c.b16 %v1139, %v1138
        %v1367 = vpack.c.b16 %v1141, %v1140
        %v1368 = vpack.c.b16 %v1143, %v1142
        %v1369 = vpack.c.b16 %v1145, %v1144
        %v1370 = vpack.c.b16 %v1147, %v1146
        %v1371 = vpack.c.b16 %v1149, %v1148
        %v1372 = vpack.c.b16 %v1151, %v1150
        %v1373 = vpack.c.b16 %v1153, %v1152
        %v1374 = vpack.c.b16 %v1155, %v1154
        %v1375 = vpack.c.b16 %v1157, %v1156
        %v1376 = vpack.c.b16 %v1159, %v1158
        %v1377 = vpack.c.b16 %v1161, %v1160
        %v1378 = vpack.c.b16 %v1163, %v1162
        %v1379 = vpack.c.b16 %v1165, %v1164
        %v1380 = vpack.c.b16 %v1167, %v1166
        %v1381 = vpack.c.b16 %v1169, %v1168
        %v1382 = vpack.c.b16 %v1171, %v1170
        %v1383 = vpack.c.b16 %v1173, %v1172
        %v1384 = vpack.c.b16 %v1175, %v1174
        %v1385 = vpack.c.b16 %v1177, %v1176
        %v1386 = vpack.c.b16 %v1179, %v1178
        %v1387 = vpack.c.b16 %v1181, %v1180
        %v1388 = vpack.c.b16 %v1183, %v1182
        %v1389 = vpack.c.b16 %v1185, %v1184
        %v1390 = vpack.c.b16 %v1187, %v1186
        %v1391 = vpack.c.b16 %v1189, %v1188
        %v1392 = vpack.c.b16 %v1191, %v1190
        %v1393 = vpack.c.b16 %v1193, %v1192
        %v1394 = vpack.c.b16 %v1195, %v1194
        %v1395 = vpack.c.b16 %v1197, %v1196
        %v1396 = vpack.c.b16 %v1199, %v1198
        %v1397 = vpack.c.b16 %v1201, %v1200
        %v1398 = vpack.c.b16 %v1203, %v1202
        %v1399 = vpack.c.b16 %v1205, %v1204
        %v1400 = vpack.c.b16 %v1207, %v1206
        %v1401 = vpack.c.b16 %v1209, %v1208
        %v1402 = vpack.c.b16 %v1211, %v1210
        %v1403 = vpack.c.b16 %v1213, %v1212
        %v1404 = vpack.c.b16 %v1215, %v1214
        %v1405 = vpack.c.b16 %v1217, %v1216
        %v1406 = vpack.c.b16 %v1219, %v1218
        %v1407 = vpack.c.b16 %v1221, %v1220
        %v1408 = vpack.c.b16 %v1223, %v1222
        %v1409 = vpack.c.b16 %v1225, %v1224
        %v1410 = vpack.c.b16 %v1227, %v1226
        %v1411 = vpack.c.b16 %v1229, %v1228
        %v1412 = vpack.c.b16 %v1231, %v1230
        %v1413 = vpack.c.b16 %v1233, %v1232
        %v1414 = vpack.c.b16 %v1235, %v1234
        %v1415 = vpack.c.b16 %v1237, %v1236
        %v1416 = vpack.c.b16 %v1239, %v1238
        %v1417 = vpack.c.b16 %v1241, %v1240
        %v1418 = vpack.c.b16 %v1243, %v1242
        %v1419 = vpack.c.b16 %v1245, %v1244
        %v1420 = vpack.c.b16 %v1247, %v1246
        %v1421 = vpack.c.b16 %v1249, %v1248
        %v1422 = vpack.c.b16 %v1251, %v1250
        %v1423 = vpack.c.b16 %v1253, %v1252
        %v1424 = vpack.c.b16 %v1255, %v1254
        %v1425 = vpack.c.b16 %v1257, %v1256
        %v1426 = vpack.c.b16 %v1259, %v1258
        %v1427 = vpack.c.b16 %v1261, %v1260
        %v1428 = vpack.c.b16 %v1263, %v1262
        %v1429 = vpack.c.b16 %v1265, %v1264
        %v1430 = vpack.c.b16 %v1267, %v1266
        %v1431 = vpack.c.b16 %v1269, %v1268
        %v1432 = vpack.c.b16 %v1271, %v1270
        %v1433 = vpack.c.b16 %v1273, %v1272
        %v1434 = vpack.c.b16 %v1275, %v1274
        %v1435 = vpack.c.b16 %v1277, %v1276
        %v1436 = vpack.c.b16 %v1279, %v1278
        %v1437 = vpack.c.b16 %v1281, %v1280
        %v1438 = vpack.c.b16 %v1283, %v1282
        %v1439 = vpack.c.b16 %v1285, %v1284
        %v1440 = vpack.c.b16 %v1287, %v1286
        %v1441 = vpack.c.b16 %v1289, %v1288
        %v1442 = vpack.c.b16 %v1291, %v1290
        %v1443 = vpack.c.b16 %v1293, %v1292
        %v1444 = vpack.c.b16 %v1295, %v1294
        %v1445 = vpack.c.b16 %v1297, %v1296
        %v1446 = vpack.c.b16 %v1299, %v1298
        %v1447 = vpack.c.b16 %v1301, %v1300
        %v1448 = vpack.c.b16 %v1303, %v1302
        %v1449 = vpack.c.b16 %v1305, %v1304
        %1594 = vmatprep.subr.bf16.mxu0 0
        %1595 = vmatpush1.bf16.msra.mxu0 %v1306
        %1596 = vmatprep.subr.bf16.mxu0 0
        %1597 = vmatpush1.bf16.msra.mxu0 %v1307
        %1598 = vmatprep.subr.bf16.mxu0 0
        %1599 = vmatpush1.bf16.msra.mxu0 %v1308
        %1600 = vmatprep.subr.bf16.mxu0 0
        %1601 = vmatpush1.bf16.msra.mxu0 %v1309
        %1602 = vmatprep.subr.bf16.mxu0 0
        %1603 = vmatpush1.bf16.msra.mxu0 %v1310
        %1604 = vmatprep.subr.bf16.mxu0 0
        %1605 = vmatpush1.bf16.msra.mxu0 %v1311
        %1606 = vmatprep.subr.bf16.mxu0 0
        %1607 = vmatpush1.bf16.msra.mxu0 %v1312
        %1608 = vmatprep.subr.bf16.mxu0 0
        %1609 = vmatpush1.bf16.msra.mxu0 %v1313
        %1610 = vmatprep.subr.bf16.mxu0 0
        %1611 = vmatpush1.bf16.msra.mxu0 %v1314
        %1612 = vmatprep.subr.bf16.mxu0 0
        %1613 = vmatpush1.bf16.msra.mxu0 %v1315
        %1614 = vmatprep.subr.bf16.mxu0 0
        %1615 = vmatpush1.bf16.msra.mxu0 %v1316
        %1616 = vmatprep.subr.bf16.mxu0 0
        %1617 = vmatpush1.bf16.msra.mxu0 %v1317
        %1618 = vmatprep.subr.bf16.mxu0 0
        %1619 = vmatpush1.bf16.msra.mxu0 %v1318
        %1620 = vmatprep.subr.bf16.mxu0 0
        %1621 = vmatpush1.bf16.msra.mxu0 %v1319
        %1622 = vmatprep.subr.bf16.mxu0 0
        %1623 = vmatpush1.bf16.msra.mxu0 %v1320
        %1624 = vmatprep.subr.bf16.mxu0 0
        %1625 = vmatpush1.bf16.msra.mxu0 %v1321
        %1626 = vmatprep.mubr.bf16.mxu0 %v629
        %1627 = vmatmul.mubr.bf16.gmra.mrb[0].mxu0 %v615
        %v1628 = vpop.f32.mrb[0].mxu0
        %v1629 = vadd.f32 0.0, %v1628
        %v1630 = vpop.f32.mrb[0].mxu0
        %v1631 = vpop.f32.mrb[0].mxu0
        %v1632 = vpop.f32.mrb[0].mxu0
        %1633 = vdwg.mxu0
        %1634 = vmatprep.subr.bf16.mxu0 0
        %1635 = vmatpush1.bf16.msra.mxu0 %v1322
        %1636 = vmatprep.subr.bf16.mxu0 0
        %1637 = vmatpush1.bf16.msra.mxu0 %v1323
        %1638 = vmatprep.subr.bf16.mxu0 0
        %1639 = vmatpush1.bf16.msra.mxu0 %v1324
        %1640 = vmatprep.subr.bf16.mxu0 0
        %1641 = vmatpush1.bf16.msra.mxu0 %v1325
        %1642 = vmatprep.subr.bf16.mxu0 0
        %1643 = vmatpush1.bf16.msra.mxu0 %v1326
        %1644 = vmatprep.subr.bf16.mxu0 0
        %1645 = vmatpush1.bf16.msra.mxu0 %v1327
        %1646 = vmatprep.subr.bf16.mxu0 0
        %1647 = vmatpush1.bf16.msra.mxu0 %v1328
        %1648 = vmatprep.subr.bf16.mxu0 0
        %1649 = vmatpush1.bf16.msra.mxu0 %v1329
        %1650 = vmatprep.subr.bf16.mxu0 0
        %1651 = vmatpush1.bf16.msra.mxu0 %v1330
        %1652 = vmatprep.subr.bf16.mxu0 0
        %1653 = vmatpush1.bf16.msra.mxu0 %v1331
        %1654 = vmatprep.subr.bf16.mxu0 0
        %1655 = vmatpush1.bf16.msra.mxu0 %v1332
        %1656 = vmatprep.subr.bf16.mxu0 0
        %1657 = vmatpush1.bf16.msra.mxu0 %v1333
        %1658 = vmatprep.subr.bf16.mxu0 0
        %1659 = vmatpush1.bf16.msra.mxu0 %v1334
        %1660 = vmatprep.subr.bf16.mxu0 0
        %1661 = vmatpush1.bf16.msra.mxu0 %v1335
        %1662 = vmatprep.subr.bf16.mxu0 0
        %1663 = vmatpush1.bf16.msra.mxu0 %v1336
        %1664 = vmatprep.subr.bf16.mxu0 0
        %1665 = vmatpush1.bf16.msra.mxu0 %v1337
        %1666 = vmatprep.mubr.bf16.mxu0 %v639
        %1667 = vmatmul.mubr.bf16.gmra.mrb[0].mxu0 %v637
        %v1668 = vpop.f32.mrb[0].mxu0
        %v1669 = vadd.f32 %v1629, %v1668
        %v1670 = vpop.f32.mrb[0].mxu0
        %v1671 = vpop.f32.mrb[0].mxu0
        %v1672 = vpop.f32.mrb[0].mxu0
        %1673 = vdwg.mxu0
        %1674 = vmatprep.subr.bf16.mxu0 0
        %1675 = vmatpush1.bf16.msra.mxu0 %v1338
        %1676 = vmatprep.subr.bf16.mxu0 0
        %1677 = vmatpush1.bf16.msra.mxu0 %v1339
        %1678 = vmatprep.subr.bf16.mxu0 0
        %1679 = vmatpush1.bf16.msra.mxu0 %v1340
        %1680 = vmatprep.subr.bf16.mxu0 0
        %1681 = vmatpush1.bf16.msra.mxu0 %v1341
        %1682 = vmatprep.subr.bf16.mxu0 0
        %1683 = vmatpush1.bf16.msra.mxu0 %v1342
        %1684 = vmatprep.subr.bf16.mxu0 0
        %1685 = vmatpush1.bf16.msra.mxu0 %v1343
        %1686 = vmatprep.subr.bf16.mxu0 0
        %1687 = vmatpush1.bf16.msra.mxu0 %v1344
        %1688 = vmatprep.subr.bf16.mxu0 0
        %1689 = vmatpush1.bf16.msra.mxu0 %v1345
        %1690 = vmatprep.subr.bf16.mxu0 0
        %1691 = vmatpush1.bf16.msra.mxu0 %v1346
        %1692 = vmatprep.subr.bf16.mxu0 0
        %1693 = vmatpush1.bf16.msra.mxu0 %v1347
        %1694 = vmatprep.subr.bf16.mxu0 0
        %1695 = vmatpush1.bf16.msra.mxu0 %v1348
        %1696 = vmatprep.subr.bf16.mxu0 0
        %1697 = vmatpush1.bf16.msra.mxu0 %v1349
        %1698 = vmatprep.subr.bf16.mxu0 0
        %1699 = vmatpush1.bf16.msra.mxu0 %v1350
        %1700 = vmatprep.subr.bf16.mxu0 0
        %1701 = vmatpush1.bf16.msra.mxu0 %v1351
        %1702 = vmatprep.subr.bf16.mxu0 0
        %1703 = vmatpush1.bf16.msra.mxu0 %v1352
        %1704 = vmatprep.subr.bf16.mxu0 0
        %1705 = vmatpush1.bf16.msra.mxu0 %v1353
        %1706 = vmatprep.mubr.bf16.mxu0 %v636
        %1707 = vmatmul.mubr.bf16.gmra.mrb[0].mxu0 %v622
        %v1708 = vpop.f32.mrb[0].mxu0
        %v1709 = vadd.f32 %v1669, %v1708
        %v1710 = vpop.f32.mrb[0].mxu0
        %v1711 = vpop.f32.mrb[0].mxu0
        %v1712 = vpop.f32.mrb[0].mxu0
        %1713 = vdwg.mxu0
        %1714 = vmatprep.subr.bf16.mxu0 0
        %1715 = vmatpush1.bf16.msra.mxu0 %v1354
        %1716 = vmatprep.subr.bf16.mxu0 0
        %1717 = vmatpush1.bf16.msra.mxu0 %v1355
        %1718 = vmatprep.subr.bf16.mxu0 0
        %1719 = vmatpush1.bf16.msra.mxu0 %v1356
        %1720 = vmatprep.subr.bf16.mxu0 0
        %1721 = vmatpush1.bf16.msra.mxu0 %v1357
        %1722 = vmatprep.subr.bf16.mxu0 0
        %1723 = vmatpush1.bf16.msra.mxu0 %v1358
        %1724 = vmatprep.subr.bf16.mxu0 0
        %1725 = vmatpush1.bf16.msra.mxu0 %v1359
        %1726 = vmatprep.subr.bf16.mxu0 0
        %1727 = vmatpush1.bf16.msra.mxu0 %v1360
        %1728 = vmatprep.subr.bf16.mxu0 0
        %1729 = vmatpush1.bf16.msra.mxu0 %v1361
        %1730 = vmatprep.subr.bf16.mxu0 0
        %1731 = vmatpush1.bf16.msra.mxu0 %v1362
        %1732 = vmatprep.subr.bf16.mxu0 0
        %1733 = vmatpush1.bf16.msra.mxu0 %v1363
        %1734 = vmatprep.subr.bf16.mxu0 0
        %1735 = vmatpush1.bf16.msra.mxu0 %v1364
        %1736 = vmatprep.subr.bf16.mxu0 0
        %1737 = vmatpush1.bf16.msra.mxu0 %v1365
        %1738 = vmatprep.subr.bf16.mxu0 0
        %1739 = vmatpush1.bf16.msra.mxu0 %v1366
        %1740 = vmatprep.subr.bf16.mxu0 0
        %1741 = vmatpush1.bf16.msra.mxu0 %v1367
        %1742 = vmatprep.subr.bf16.mxu0 0
        %1743 = vmatpush1.bf16.msra.mxu0 %v1368
        %1744 = vmatprep.subr.bf16.mxu0 0
        %1745 = vmatpush1.bf16.msra.mxu0 %v1369
        %1746 = vmatprep.mubr.bf16.mxu0 %v640
        %1747 = vmatmul.mubr.bf16.gmra.mrb[0].mxu0 %v638
        %v1748 = vpop.f32.mrb[0].mxu0
        %v1749 = vadd.f32 %v1709, %v1748
        %v1750 = vpop.f32.mrb[0].mxu0
        %v1751 = vpop.f32.mrb[0].mxu0
        %v1752 = vpop.f32.mrb[0].mxu0
        %1753 = vdwg.mxu0
        %1754 = vmatprep.subr.bf16.mxu0 0
        %1755 = vmatpush1.bf16.msra.mxu0 %v1370
        %1756 = vmatprep.subr.bf16.mxu0 0
        %1757 = vmatpush1.bf16.msra.mxu0 %v1371
        %1758 = vmatprep.subr.bf16.mxu0 0
        %1759 = vmatpush1.bf16.msra.mxu0 %v1372
        %1760 = vmatprep.subr.bf16.mxu0 0
        %1761 = vmatpush1.bf16.msra.mxu0 %v1373
        %1762 = vmatprep.subr.bf16.mxu0 0
        %1763 = vmatpush1.bf16.msra.mxu0 %v1374
        %1764 = vmatprep.subr.bf16.mxu0 0
        %1765 = vmatpush1.bf16.msra.mxu0 %v1375
        %1766 = vmatprep.subr.bf16.mxu0 0
        %1767 = vmatpush1.bf16.msra.mxu0 %v1376
        %1768 = vmatprep.subr.bf16.mxu0 0
        %1769 = vmatpush1.bf16.msra.mxu0 %v1377
        %1770 = vmatprep.subr.bf16.mxu0 0
        %1771 = vmatpush1.bf16.msra.mxu0 %v1378
        %1772 = vmatprep.subr.bf16.mxu0 0
        %1773 = vmatpush1.bf16.msra.mxu0 %v1379
        %1774 = vmatprep.subr.bf16.mxu0 0
        %1775 = vmatpush1.bf16.msra.mxu0 %v1380
        %1776 = vmatprep.subr.bf16.mxu0 0
        %1777 = vmatpush1.bf16.msra.mxu0 %v1381
        %1778 = vmatprep.subr.bf16.mxu0 0
        %1779 = vmatpush1.bf16.msra.mxu0 %v1382
        %1780 = vmatprep.subr.bf16.mxu0 0
        %1781 = vmatpush1.bf16.msra.mxu0 %v1383
        %1782 = vmatprep.subr.bf16.mxu0 0
        %1783 = vmatpush1.bf16.msra.mxu0 %v1384
        %1784 = vmatprep.subr.bf16.mxu0 0
        %1785 = vmatpush1.bf16.msra.mxu0 %v1385
        %1786 = vmatprep.mubr.bf16.mxu0 %v678
        %1787 = vmatmul.mubr.bf16.gmra.mrb[0].mxu0 %v664
        %v1788 = vpop.f32.mrb[0].mxu0
        %v1789 = vadd.f32 %v1749, %v1788
        %v1790 = vpop.f32.mrb[0].mxu0
        %v1791 = vpop.f32.mrb[0].mxu0
        %v1792 = vpop.f32.mrb[0].mxu0
        %1793 = vdwg.mxu0
        %1794 = vmatprep.subr.bf16.mxu0 0
        %1795 = vmatpush1.bf16.msra.mxu0 %v1386
        %1796 = vmatprep.subr.bf16.mxu0 0
        %1797 = vmatpush1.bf16.msra.mxu0 %v1387
        %1798 = vmatprep.subr.bf16.mxu0 0
        %1799 = vmatpush1.bf16.msra.mxu0 %v1388
        %1800 = vmatprep.subr.bf16.mxu0 0
        %1801 = vmatpush1.bf16.msra.mxu0 %v1389
        %1802 = vmatprep.subr.bf16.mxu0 0
        %1803 = vmatpush1.bf16.msra.mxu0 %v1390
        %1804 = vmatprep.subr.bf16.mxu0 0
        %1805 = vmatpush1.bf16.msra.mxu0 %v1391
        %1806 = vmatprep.subr.bf16.mxu0 0
        %1807 = vmatpush1.bf16.msra.mxu0 %v1392
        %1808 = vmatprep.subr.bf16.mxu0 0
        %1809 = vmatpush1.bf16.msra.mxu0 %v1393
        %1810 = vmatprep.subr.bf16.mxu0 0
        %1811 = vmatpush1.bf16.msra.mxu0 %v1394
        %1812 = vmatprep.subr.bf16.mxu0 0
        %1813 = vmatpush1.bf16.msra.mxu0 %v1395
        %1814 = vmatprep.subr.bf16.mxu0 0
        %1815 = vmatpush1.bf16.msra.mxu0 %v1396
        %1816 = vmatprep.subr.bf16.mxu0 0
        %1817 = vmatpush1.bf16.msra.mxu0 %v1397
        %1818 = vmatprep.subr.bf16.mxu0 0
        %1819 = vmatpush1.bf16.msra.mxu0 %v1398
        %1820 = vmatprep.subr.bf16.mxu0 0
        %1821 = vmatpush1.bf16.msra.mxu0 %v1399
        %1822 = vmatprep.subr.bf16.mxu0 0
        %1823 = vmatpush1.bf16.msra.mxu0 %v1400
        %1824 = vmatprep.subr.bf16.mxu0 0
        %1825 = vmatpush1.bf16.msra.mxu0 %v1401
        %1826 = vmatprep.mubr.bf16.mxu0 %v688
        %1827 = vmatmul.mubr.bf16.gmra.mrb[0].mxu0 %v686
        %v1828 = vpop.f32.mrb[0].mxu0
        %v1829 = vadd.f32 %v1789, %v1828
        %v1830 = vpop.f32.mrb[0].mxu0
        %v1831 = vpop.f32.mrb[0].mxu0
        %v1832 = vpop.f32.mrb[0].mxu0
        %1833 = vdwg.mxu0
        %1834 = vmatprep.subr.bf16.mxu0 0
        %1835 = vmatpush1.bf16.msra.mxu0 %v1402
        %1836 = vmatprep.subr.bf16.mxu0 0
        %1837 = vmatpush1.bf16.msra.mxu0 %v1403
        %1838 = vmatprep.subr.bf16.mxu0 0
        %1839 = vmatpush1.bf16.msra.mxu0 %v1404
        %1840 = vmatprep.subr.bf16.mxu0 0
        %1841 = vmatpush1.bf16.msra.mxu0 %v1405
        %1842 = vmatprep.subr.bf16.mxu0 0
        %1843 = vmatpush1.bf16.msra.mxu0 %v1406
        %1844 = vmatprep.subr.bf16.mxu0 0
        %1845 = vmatpush1.bf16.msra.mxu0 %v1407
        %1846 = vmatprep.subr.bf16.mxu0 0
        %1847 = vmatpush1.bf16.msra.mxu0 %v1408
        %1848 = vmatprep.subr.bf16.mxu0 0
        %1849 = vmatpush1.bf16.msra.mxu0 %v1409
        %1850 = vmatprep.subr.bf16.mxu0 0
        %1851 = vmatpush1.bf16.msra.mxu0 %v1410
        %1852 = vmatprep.subr.bf16.mxu0 0
        %1853 = vmatpush1.bf16.msra.mxu0 %v1411
        %1854 = vmatprep.subr.bf16.mxu0 0
        %1855 = vmatpush1.bf16.msra.mxu0 %v1412
        %1856 = vmatprep.subr.bf16.mxu0 0
        %1857 = vmatpush1.bf16.msra.mxu0 %v1413
        %1858 = vmatprep.subr.bf16.mxu0 0
        %1859 = vmatpush1.bf16.msra.mxu0 %v1414
        %1860 = vmatprep.subr.bf16.mxu0 0
        %1861 = vmatpush1.bf16.msra.mxu0 %v1415
        %1862 = vmatprep.subr.bf16.mxu0 0
        %1863 = vmatpush1.bf16.msra.mxu0 %v1416
        %1864 = vmatprep.subr.bf16.mxu0 0
        %1865 = vmatpush1.bf16.msra.mxu0 %v1417
        %1866 = vmatprep.mubr.bf16.mxu0 %v685
        %1867 = vmatmul.mubr.bf16.gmra.mrb[0].mxu0 %v671
        %v1868 = vpop.f32.mrb[0].mxu0
        %v1869 = vadd.f32 %v1829, %v1868
        %v1870 = vpop.f32.mrb[0].mxu0
        %v1871 = vpop.f32.mrb[0].mxu0
        %v1872 = vpop.f32.mrb[0].mxu0
        %1873 = vdwg.mxu0
        %1874 = vmatprep.subr.bf16.mxu0 0
        %1875 = vmatpush1.bf16.msra.mxu0 %v1418
        %1876 = vmatprep.subr.bf16.mxu0 0
        %1877 = vmatpush1.bf16.msra.mxu0 %v1419
        %1878 = vmatprep.subr.bf16.mxu0 0
        %1879 = vmatpush1.bf16.msra.mxu0 %v1420
        %1880 = vmatprep.subr.bf16.mxu0 0
        %1881 = vmatpush1.bf16.msra.mxu0 %v1421
        %1882 = vmatprep.subr.bf16.mxu0 0
        %1883 = vmatpush1.bf16.msra.mxu0 %v1422
        %1884 = vmatprep.subr.bf16.mxu0 0
        %1885 = vmatpush1.bf16.msra.mxu0 %v1423
        %1886 = vmatprep.subr.bf16.mxu0 0
        %1887 = vmatpush1.bf16.msra.mxu0 %v1424
        %1888 = vmatprep.subr.bf16.mxu0 0
        %1889 = vmatpush1.bf16.msra.mxu0 %v1425
        %1890 = vmatprep.subr.bf16.mxu0 0
        %1891 = vmatpush1.bf16.msra.mxu0 %v1426
        %1892 = vmatprep.subr.bf16.mxu0 0
        %1893 = vmatpush1.bf16.msra.mxu0 %v1427
        %1894 = vmatprep.subr.bf16.mxu0 0
        %1895 = vmatpush1.bf16.msra.mxu0 %v1428
        %1896 = vmatprep.subr.bf16.mxu0 0
        %1897 = vmatpush1.bf16.msra.mxu0 %v1429
        %1898 = vmatprep.subr.bf16.mxu0 0
        %1899 = vmatpush1.bf16.msra.mxu0 %v1430
        %1900 = vmatprep.subr.bf16.mxu0 0
        %1901 = vmatpush1.bf16.msra.mxu0 %v1431
        %1902 = vmatprep.subr.bf16.mxu0 0
        %1903 = vmatpush1.bf16.msra.mxu0 %v1432
        %1904 = vmatprep.subr.bf16.mxu0 0
        %1905 = vmatpush1.bf16.msra.mxu0 %v1433
        %1906 = vmatprep.mubr.bf16.mxu0 %v689
        %1907 = vmatmul.mubr.bf16.gmra.mrb[0].mxu0 %v687
        %v1908 = vpop.f32.mrb[0].mxu0
        %v1909 = vadd.f32 %v1869, %v1908
        %v1910 = vpop.f32.mrb[0].mxu0
        %v1911 = vpop.f32.mrb[0].mxu0
        %v1912 = vpop.f32.mrb[0].mxu0
        %1913 = vdwg.mxu0
        %1914 = vmatprep.subr.bf16.mxu0 0
        %1915 = vmatpush1.bf16.msra.mxu0 %v1434
        %1916 = vmatprep.subr.bf16.mxu0 0
        %1917 = vmatpush1.bf16.msra.mxu0 %v1435
        %1918 = vmatprep.subr.bf16.mxu0 0
        %1919 = vmatpush1.bf16.msra.mxu0 %v1436
        %1920 = vmatprep.subr.bf16.mxu0 0
        %1921 = vmatpush1.bf16.msra.mxu0 %v1437
        %1922 = vmatprep.subr.bf16.mxu0 0
        %1923 = vmatpush1.bf16.msra.mxu0 %v1438
        %1924 = vmatprep.subr.bf16.mxu0 0
        %1925 = vmatpush1.bf16.msra.mxu0 %v1439
        %1926 = vmatprep.subr.bf16.mxu0 0
        %1927 = vmatpush1.bf16.msra.mxu0 %v1440
        %1928 = vmatprep.subr.bf16.mxu0 0
        %1929 = vmatpush1.bf16.msra.mxu0 %v1441
        %1930 = vmatprep.subr.bf16.mxu0 0
        %1931 = vmatpush1.bf16.msra.mxu0 %v1442
        %1932 = vmatprep.subr.bf16.mxu0 0
        %1933 = vmatpush1.bf16.msra.mxu0 %v1443
        %1934 = vmatprep.subr.bf16.mxu0 0
        %1935 = vmatpush1.bf16.msra.mxu0 %v1444
        %1936 = vmatprep.subr.bf16.mxu0 0
        %1937 = vmatpush1.bf16.msra.mxu0 %v1445
        %1938 = vmatprep.subr.bf16.mxu0 0
        %1939 = vmatpush1.bf16.msra.mxu0 %v1446
        %1940 = vmatprep.subr.bf16.mxu0 0
        %1941 = vmatpush1.bf16.msra.mxu0 %v1447
        %1942 = vmatprep.subr.bf16.mxu0 0
        %1943 = vmatpush1.bf16.msra.mxu0 %v1448
        %1944 = vmatprep.subr.bf16.mxu0 0
        %1945 = vmatpush1.bf16.msra.mxu0 %v1449
        %1946 = vmatprep.mubr.bf16.mxu0 %v711
        %1947 = vmatmul.mubr.bf16.gmra.mrb[0].mxu0 %v704
        %v1948 = vpop.f32.mrb[0].mxu0
        %v1949 = vadd.f32 %v1909, %v1948
        %v1950 = vpop.f32.mrb[0].mxu0
        %v1951 = vpop.f32.mrb[0].mxu0
        %v1952 = vpop.f32.mrb[0].mxu0
        %1953 = vdwg.mxu0
        %v1954 = vadd.f32 %v297, %v1949
        %1955 = vst [vmem:[#allocation2] sm:$0x3] %v1954
        %p1956 = scmp.eq.s32.totalorder %s22, 3
        // Predicated region
        $region61: #{mnist_forward.3} parent=39 // pred_check
          %p1957 = pneg %p1956
        $region62: #{mnist_forward.3} parent=39 // pred_check_branch
          %1959 = sbr.rel (%p1957) target = $region64
        $region63: #{mnist_forward.3} parent=39 // pred_region
          %v1960 = vld [vmem:[#allocation2] sm:$0x3]
          %v1961 = vld [vmem:[#allocation6] sm:$0x1]
          %v1963 = vlaneseq
          %v1964 = vshrl.u32 %v1963, 7
          %v1965 = vsub.s32 0, %v1964
          %v1966 = vrot.slane %v1961, %v1965
          %v1968 = vadd.f32 %v1960, %v1966
          %v1969 = vmax.f32 %v1968, 0.0
          %v1970 = vld [vmem:[#allocation8] sm:$0xff]
          %v1971 = vld [vmem:[#allocation8 + $0x8] sm:$0xff]
          %v1972 = vld [vmem:[#allocation8 + $0x10] sm:$0xff]
          %v1973 = vld [vmem:[#allocation8 + $0x18] sm:$0xff]
          %v1974 = vld [vmem:[#allocation8 + $0x20] sm:$0xff]
          %v1975 = vld [vmem:[#allocation8 + $0x28] sm:$0xff]
          %v1976 = vld [vmem:[#allocation8 + $0x30] sm:$0xff]
          %v1977 = vld [vmem:[#allocation8 + $0x38] sm:$0xff]
          %v1978 = vld [vmem:[#allocation8 + $0x40] sm:$0xff]
          %v1979 = vld [vmem:[#allocation8 + $0x48] sm:$0xff]
          %v1980 = vld [vmem:[#allocation8 + $0x50] sm:$0xff]
          %v1981 = vld [vmem:[#allocation8 + $0x58] sm:$0xff]
          %v1982 = vld [vmem:[#allocation8 + $0x60] sm:$0xff]
          %v1983 = vld [vmem:[#allocation8 + $0x68] sm:$0xff]
          %v1984 = vld [vmem:[#allocation8 + $0x70] sm:$0xff]
          %v1985 = vld [vmem:[#allocation8 + $0x78] sm:$0xff]
          %v1986 = vld [vmem:[#allocation9] sm:$0x1]
          %v1988 = vlaneseq
          %v1989 = vshrl.u32 %v1988, 7
          %v1990 = vsub.s32 0, %v1989
          %v1991 = vrot.slane %v1986, %v1990
          %1993 = vmatprep.subr.mxu0 0.0
          %1994 = vmatpush1.msra.mxu0 %v1970
          %1995 = vmatprep.subr.mxu0 0.0
          %1996 = vmatpush1.msra.mxu0 %v1971
          %1997 = vmatprep.subr.mxu0 0.0
          %1998 = vmatpush1.msra.mxu0 %v1972
          %1999 = vmatprep.subr.mxu0 0.0
          %2000 = vmatpush1.msra.mxu0 %v1973
          %2001 = vmatprep.subr.mxu0 0.0
          %2002 = vmatpush1.msra.mxu0 %v1974
          %2003 = vmatprep.subr.mxu0 0.0
          %2004 = vmatpush1.msra.mxu0 %v1975
          %2005 = vmatprep.subr.mxu0 0.0
          %2006 = vmatpush1.msra.mxu0 %v1976
          %2007 = vmatprep.subr.mxu0 0.0
          %2008 = vmatpush1.msra.mxu0 %v1977
          %2009 = vmatprep.subr.mxu0 0.0
          %2010 = vmatpush1.msra.mxu0 %v1978
          %2011 = vmatprep.subr.mxu0 0.0
          %2012 = vmatpush1.msra.mxu0 %v1979
          %2013 = vmatprep.subr.mxu0 0.0
          %2014 = vmatpush1.msra.mxu0 %v1980
          %2015 = vmatprep.subr.mxu0 0.0
          %2016 = vmatpush1.msra.mxu0 %v1981
          %2017 = vmatprep.subr.mxu0 0.0
          %2018 = vmatpush1.msra.mxu0 %v1982
          %2019 = vmatprep.subr.mxu0 0.0
          %2020 = vmatpush1.msra.mxu0 %v1983
          %2021 = vmatprep.subr.mxu0 0.0
          %2022 = vmatpush1.msra.mxu0 %v1984
          %2023 = vmatprep.subr.mxu0 0.0
          %2024 = vmatpush1.msra.mxu0 %v1985
          %2025 = vmatprep.subr.mxu0 0.0
          %2026 = vmatpush1.msra.mxu0 0.0
          %2027 = vmatprep.subr.mxu0 0.0
          %2028 = vmatpush1.msra.mxu0 0.0
          %2029 = vmatprep.subr.mxu0 0.0
          %2030 = vmatpush1.msra.mxu0 0.0
          %2031 = vmatprep.subr.mxu0 0.0
          %2032 = vmatpush1.msra.mxu0 0.0
          %2033 = vmatprep.subr.mxu0 0.0
          %2034 = vmatpush1.msra.mxu0 0.0
          %2035 = vmatprep.subr.mxu0 0.0
          %2036 = vmatpush1.msra.mxu0 0.0
          %2037 = vmatprep.subr.mxu0 0.0
          %2038 = vmatpush1.msra.mxu0 0.0
          %2039 = vmatprep.subr.mxu0 0.0
          %2040 = vmatpush1.msra.mxu0 0.0
          %2041 = vmatprep.subr.mxu0 0.0
          %2042 = vmatpush1.msra.mxu0 0.0
          %2043 = vmatprep.subr.mxu0 0.0
          %2044 = vmatpush1.msra.mxu0 0.0
          %2045 = vmatprep.subr.mxu0 0.0
          %2046 = vmatpush1.msra.mxu0 0.0
          %2047 = vmatprep.subr.mxu0 0.0
          %2048 = vmatpush1.msra.mxu0 0.0
          %2049 = vmatprep.subr.mxu0 0.0
          %2050 = vmatpush1.msra.mxu0 0.0
          %2051 = vmatprep.subr.mxu0 0.0
          %2052 = vmatpush1.msra.mxu0 0.0
          %2053 = vmatprep.subr.mxu0 0.0
          %2054 = vmatpush1.msra.mxu0 0.0
          %2055 = vmatprep.subr.mxu0 0.0
          %2056 = vmatpush1.msra.mxu0 0.0
          %2057 = vmatprep.mubr.f32.mxu0 0.0
          %2058 = vmatmul.mubr.f32.gmra.mrb[0].mxu0 %v1969
          %v2059 = vpop.f32.mrb[0].mxu0
          %v2060 = vadd.f32 %v1991, %v2059
          %v2061 = vpop.f32.mrb[0].mxu0
          %2062 = vdwg.mxu0
          %2063 = vst [vmem:[#allocation11] sm:$0x3] %v2060
        $region64: #{mnist_forward.3} parent=39 // pred_fallthru
          _
        // Predicated region
        $region65: #{mnist_forward.3} parent=39 // pred_check
          %p2064 = pneg %p150
        $region66: #{mnist_forward.3} parent=39 // pred_check_branch
          %2066 = sbr.rel (%p2064) target = $region68
        $region67: #{mnist_forward.3} parent=39 // pred_region
          %s2068 = ssub.s32 32, 32
          %2069 = vsyncadd [#allocation5], %s2068
          %s2071 = sshll.u32 [#allocation11], 4
          %s2072 = int_to_ptr.vmem [resolvable:$true] %s2071
          %2074 = dma.vmem_to_hbm [thread:$0]  %s2072, 32, %s5, [#allocation5]
        $region68: #{mnist_forward.3} parent=39 // pred_fallthru
          _
        // Predicated region
        $region69: #{mnist_forward.3} parent=39 // pred_check
          %p2075 = pneg %p150
        $region70: #{mnist_forward.3} parent=39 // pred_check_branch
          %2077 = sbr.rel (%p2075) target = $region72
        $region71: #{mnist_forward.3} parent=39 // pred_region
          %2078 = dma.done [#allocation5], 32
        $region72: #{mnist_forward.3} parent=39 // pred_fallthru
          _
      $region40: #{mnist_forward.3} parent=5 // pred_fallthru
        _
      %p2079 = scmp.le.s32.totalorder 2, %s17
      // Predicated region
      $region73: #{mnist_forward.3} parent=5 // pred_check
        %p2080 = pneg %p2079
      $region74: #{mnist_forward.3} parent=5 // pred_check_branch
        %2082 = sbr.rel (%p2080) target = $region76
      $region75: #{mnist_forward.3} parent=5 // pred_region
        %s2083 = ssub.s32 %s17, 2
      $region76: #{mnist_forward.3} parent=5 // pred_fallthru
        _
    $region6: #{mnist_forward.3} parent=1 // loop_footer
      %s21 = sadd.s32 1, %s17
    $region7: #{mnist_forward.3} parent=1 // loop_footer_branch
      %16 = sbr.rel target = $region3
    $region8: #{mnist_forward.3} parent=1 // loop_exit
      _
    %2084 = vsyncpa [#allocation4], 1
    %s2085 = scalar_lea.sflag [#allocation4], 1
    %2086 = vsyncpa %s2085, 1
    %2087 = vsyncpa [#allocation7], 1
    %2088 = vsyncpa [#allocation10], 1
    %2089 = vsyncpa [#allocation5], 1
    %s2090 = scalar_lea.sflag [#allocation5], 1
    %2091 = vsyncpa %s2090, 1

// kernel: mnist_forward.2
$region0: #{mnist_forward.2}
  #allocation0 [shape = 'u32[]', space=smem, size = 0x4, offset = 0x4, fixed_abs, tag = 'smem constant byte address 0x4 - core index']
  #allocation1 [shape = 'u32[144,128]{1,0:T(1,128)}', space=vmem, size = 0x12000, scoped, tag = 'internal scratch']
  #allocation2 [shape = 'f32[1632,32]{1,0:T(8,128)}', space=vmem, size = 0xcc000, scoped, tag = 'scratch operand']
  #allocation3 [shape = 'f32[1632,32]{1,0:T(8,128)}', space=vmem, size = 0xcc000, scoped, tag = 'scratch operand']
  #allocation4 [shape = 'f32[1568,64]{1,0:T(8,128)}', space=vmem, size = 0xc4000, scoped, tag = 'scratch operand']
  %s0 = inlined_call_operand.vmem [shape: f32[1568,1], index: 0, kind: input, shape index: {}]
  %s1 = inlined_call_operand.hbm [shape: f32[9,32], index: 1, kind: input, shape index: {}]
  %s2 = inlined_call_operand.hbm [shape: f32[1,32], index: 2, kind: input, shape index: {}]
  %s3 = inlined_call_operand.vmem [shape: bf16[288,64], index: 3, kind: input, shape index: {}]
  %s4 = inlined_call_operand.hbm [shape: f32[1,64], index: 4, kind: input, shape index: {}]
  %s5 = inlined_call_operand.vmem [shape: bf16[24,12,64], index: 5, kind: output, shape index: {}]
  %s6 = sld [smem:[#allocation0]]
  $region63: #{mnist_forward.2} parent=0
    _
  %s8 = ssub.s32 1, %s6
  %s9 = scalar_select 0, %s8, %s6
  $region1: #{mnist_forward.2} parent=0
    #allocation5 [shape = 'u8[8192]{0}', space=vmem, size = 0x2000, scoped, tag = 'input window, operand 1, single buffered']
    #allocation6 [shape = 's32[1]{0}', space=sflag, size = 0x4, scoped, tag = 'scoped memory for mnist_forward.2']
    #allocation7 [shape = 'u8[512]{0}', space=vmem, size = 0x400, scoped, tag = 'input window, operand 2, single buffered']
    #allocation8 [shape = 's32[1]{0}', space=sflag, size = 0x4, scoped, tag = 'scoped memory for mnist_forward.2']
    #allocation9 [shape = 'u8[512]{0}', space=vmem, size = 0x400, scoped, tag = 'input window, operand 4, single buffered']
    %10 = vsyncpa [#allocation6], 0
    %11 = vsyncpa [#allocation8], 0
    // Predicated region
    $region2: #{mnist_forward.2} parent=1 // pred_check
      _
    $region3: #{mnist_forward.2} parent=1 // pred_check_branch
      %13 = sbr.rel (0) target = $region5
    $region4: #{mnist_forward.2} parent=1 // pred_region
      _
    $region5: #{mnist_forward.2} parent=1 // pred_fallthru
      _
    // Predicated region
    $region6: #{mnist_forward.2} parent=1 // pred_check
      _
    $region7: #{mnist_forward.2} parent=1 // pred_check_branch
      %15 = sbr.rel (0) target = $region9
    $region8: #{mnist_forward.2} parent=1 // pred_region
      %s17 = ssub.s32 256, 256
      %18 = vsyncadd [#allocation6], %s17
      %s19 = sshll.u32 [#allocation5], 4
      %s20 = int_to_ptr.vmem [resolvable:$true] %s19
      %25 = dma.hbm_to_vmem [thread:$0]  %s1, 256, %s20, [#allocation6], 128, 128, 8
    $region9: #{mnist_forward.2} parent=1 // pred_fallthru
      _
    // Predicated region
    $region10: #{mnist_forward.2} parent=1 // pred_check
      _
    $region11: #{mnist_forward.2} parent=1 // pred_check_branch
      %27 = sbr.rel (0) target = $region13
    $region12: #{mnist_forward.2} parent=1 // pred_region
      %s29 = ssub.s32 16, 16
      %30 = vsyncadd [#allocation8], %s29
      %s32 = sshll.u32 [#allocation7], 4
      %s33 = int_to_ptr.vmem [resolvable:$true] %s32
      %35 = dma.hbm_to_vmem [thread:$0]  %s2, 16, %s33, [#allocation8]
    $region13: #{mnist_forward.2} parent=1 // pred_fallthru
      _
    // Predicated region
    $region14: #{mnist_forward.2} parent=1 // pred_check
      _
    $region15: #{mnist_forward.2} parent=1 // pred_check_branch
      %37 = sbr.rel (0) target = $region17
    $region16: #{mnist_forward.2} parent=1 // pred_region
      _
    $region17: #{mnist_forward.2} parent=1 // pred_fallthru
      _
    // Predicated region
    $region18: #{mnist_forward.2} parent=1 // pred_check
      _
    $region19: #{mnist_forward.2} parent=1 // pred_check_branch
      %39 = sbr.rel (0) target = $region21
    $region20: #{mnist_forward.2} parent=1 // pred_region
      %s41 = ssub.s32 16, 16
      %42 = vsyncadd [#allocation8], %s41
      %s44 = sshll.u32 [#allocation9], 4
      %s45 = int_to_ptr.vmem [resolvable:$true] %s44
      %47 = dma.hbm_to_vmem [thread:$0]  %s4, 16, %s45, [#allocation8]
    $region21: #{mnist_forward.2} parent=1 // pred_fallthru
      _
    // Predicated region
    $region22: #{mnist_forward.2} parent=1 // pred_check
      _
    $region23: #{mnist_forward.2} parent=1 // pred_check_branch
      %49 = sbr.rel (0) target = $region25
    $region24: #{mnist_forward.2} parent=1 // pred_region
      %50 = dma.done [#allocation6], 256
    $region25: #{mnist_forward.2} parent=1 // pred_fallthru
      _
    // Predicated region
    $region26: #{mnist_forward.2} parent=1 // pred_check
      _
    $region27: #{mnist_forward.2} parent=1 // pred_check_branch
      %52 = sbr.rel (0) target = $region29
    $region28: #{mnist_forward.2} parent=1 // pred_region
      %53 = dma.done [#allocation8], 16
    $region29: #{mnist_forward.2} parent=1 // pred_fallthru
      _
    // Predicated region
    $region30: #{mnist_forward.2} parent=1 // pred_check
      _
    $region31: #{mnist_forward.2} parent=1 // pred_check_branch
      %55 = sbr.rel (0) target = $region33
    $region32: #{mnist_forward.2} parent=1 // pred_region
      %56 = dma.done [#allocation8], 16
    $region33: #{mnist_forward.2} parent=1 // pred_fallthru
      _
    loop: start=0, step=1, limit=14
    $region34: #{mnist_forward.2} parent=1 // loop_pre_header
      _
    $region35: #{mnist_forward.2} parent=1 // loop_header
      %s59 = sphi 0, %s63
      %p60 = scmp.ge.s32.totalorder %s59, 14
    $region36: #{mnist_forward.2} parent=1 // loop_header_branch
      %62 = sbr.rel (%p60) target = $region40
    $region37: #{mnist_forward.2} parent=1 // loop_body
      %s64 = smul.u32 %s59, 112
      %s65 = scalar_lea.vmem %s0, %s64
      %v66 = vld [vmem:[%s65] sm:$0xff]
      %v67 = vld [vmem:[%s65 + $0x8] sm:$0xff]
      %v68 = vld [vmem:[%s65 + $0x10] sm:$0xff]
      %v69 = vld [vmem:[%s65 + $0x18] sm:$0xff]
      %v70 = vld [vmem:[%s65 + $0x20] sm:$0xff]
      %v71 = vld [vmem:[%s65 + $0x28] sm:$0xff]
      %v72 = vld [vmem:[%s65 + $0x30] sm:$0xff]
      %v73 = vld [vmem:[%s65 + $0x38] sm:$0xff]
      %v74 = vld [vmem:[%s65 + $0x40] sm:$0xff]
      %v75 = vld [vmem:[%s65 + $0x48] sm:$0xff]
      %v76 = vld [vmem:[%s65 + $0x50] sm:$0xff]
      %v77 = vld [vmem:[%s65 + $0x58] sm:$0xff]
      %v78 = vld [vmem:[%s65 + $0x60] sm:$0xff]
      %v79 = vld [vmem:[%s65 + $0x68] sm:$0xff]
      %81 = vset.pattern.permute.xlu0 0
      %82 = vperm.xlu0 %81, %v66
      %v83 = vpop.permute.xlu0 %82
      %86 = vset.pattern.permute.xlu0 0
      %87 = vperm.xlu0 %86, %v67
      %v88 = vpop.permute.xlu0 %87
      %91 = vset.pattern.permute.xlu0 0
      %92 = vperm.xlu0 %91, %v68
      %v93 = vpop.permute.xlu0 %92
      %96 = vset.pattern.permute.xlu0 0
      %97 = vperm.xlu0 %96, %v69
      %v98 = vpop.permute.xlu0 %97
      %101 = vset.pattern.permute.xlu0 0
      %102 = vperm.xlu0 %101, %v70
      %v103 = vpop.permute.xlu0 %102
      %106 = vset.pattern.permute.xlu0 0
      %107 = vperm.xlu0 %106, %v71
      %v108 = vpop.permute.xlu0 %107
      %111 = vset.pattern.permute.xlu0 0
      %112 = vperm.xlu0 %111, %v72
      %v113 = vpop.permute.xlu0 %112
      %116 = vset.pattern.permute.xlu0 0
      %117 = vperm.xlu0 %116, %v73
      %v118 = vpop.permute.xlu0 %117
      %121 = vset.pattern.permute.xlu0 0
      %122 = vperm.xlu0 %121, %v74
      %v123 = vpop.permute.xlu0 %122
      %126 = vset.pattern.permute.xlu0 0
      %127 = vperm.xlu0 %126, %v75
      %v128 = vpop.permute.xlu0 %127
      %131 = vset.pattern.permute.xlu0 0
      %132 = vperm.xlu0 %131, %v76
      %v133 = vpop.permute.xlu0 %132
      %136 = vset.pattern.permute.xlu0 0
      %137 = vperm.xlu0 %136, %v77
      %v138 = vpop.permute.xlu0 %137
      %141 = vset.pattern.permute.xlu0 0
      %142 = vperm.xlu0 %141, %v78
      %v143 = vpop.permute.xlu0 %142
      %146 = vset.pattern.permute.xlu0 0
      %147 = vperm.xlu0 %146, %v79
      %v148 = vpop.permute.xlu0 %147
      %s150 = scalar_lea.vmem [#allocation2], %s64
      %vm151 = vcmask 261120
      %152 = vst.msk [vmem:[%s150] sm:$0xff] %vm151, %v83
      %153 = vst.msk [vmem:[%s150 + $0x8] sm:$0xff] %vm151, %v88
      %154 = vst.msk [vmem:[%s150 + $0x10] sm:$0xff] %vm151, %v93
      %155 = vst.msk [vmem:[%s150 + $0x18] sm:$0xff] %vm151, %v98
      %156 = vst.msk [vmem:[%s150 + $0x20] sm:$0xff] %vm151, %v103
      %157 = vst.msk [vmem:[%s150 + $0x28] sm:$0xff] %vm151, %v108
      %158 = vst.msk [vmem:[%s150 + $0x30] sm:$0xff] %vm151, %v113
      %159 = vst.msk [vmem:[%s150 + $0x38] sm:$0xff] %vm151, %v118
      %160 = vst.msk [vmem:[%s150 + $0x40] sm:$0xff] %vm151, %v123
      %161 = vst.msk [vmem:[%s150 + $0x48] sm:$0xff] %vm151, %v128
      %162 = vst.msk [vmem:[%s150 + $0x50] sm:$0xff] %vm151, %v133
      %163 = vst.msk [vmem:[%s150 + $0x58] sm:$0xff] %vm151, %v138
      %164 = vst.msk [vmem:[%s150 + $0x60] sm:$0xff] %vm151, %v143
      %165 = vst.msk [vmem:[%s150 + $0x68] sm:$0xff] %vm151, %v148
    $region38: #{mnist_forward.2} parent=1 // loop_footer
      %s63 = sadd.s32 1, %s59
    $region39: #{mnist_forward.2} parent=1 // loop_footer_branch
      %58 = sbr.rel target = $region35
    $region40: #{mnist_forward.2} parent=1 // loop_exit
      _
    %vm166 = vcmask 261120
    %167 = vst.msk [vmem:[#allocation2 + $0x620] sm:$0xff] %vm166, 0.0
    %168 = vst.msk [vmem:[#allocation2 + $0x628] sm:$0xff] %vm166, 0.0
    %169 = vst.msk [vmem:[#allocation2 + $0x630] sm:$0xff] %vm166, 0.0
    %170 = vst.msk [vmem:[#allocation2 + $0x638] sm:$0xff] %vm166, 0.0
    %171 = vst.msk [vmem:[#allocation2 + $0x640] sm:$0xff] %vm166, 0.0
    %172 = vst.msk [vmem:[#allocation2 + $0x648] sm:$0xff] %vm166, 0.0
    %173 = vst.msk [vmem:[#allocation2 + $0x650] sm:$0xff] %vm166, 0.0
    %174 = vst.msk [vmem:[#allocation2 + $0x658] sm:$0xff] %vm166, 0.0
    loop: start=0, step=1, limit=14
    $region41: #{mnist_forward.2} parent=1 // loop_pre_header
      _
    $region42: #{mnist_forward.2} parent=1 // loop_header
      %s176 = sphi 0, %s180
      %p177 = scmp.ge.s32.totalorder %s176, 14
    $region43: #{mnist_forward.2} parent=1 // loop_header_branch
      %179 = sbr.rel (%p177) target = $region47
    $region44: #{mnist_forward.2} parent=1 // loop_body
      %s181 = smul.u32 %s176, 112
      %v182 = vld [vmem:[#allocation7] sm:$0x1]
      %v184 = vlaneseq
      %v185 = vshrl.u32 %v184, 7
      %v186 = vsub.s32 0, %v185
      %v187 = vrot.slane %v182, %v186
      %v189 = vadd.f32 %v187, 0.0
      %s190 = scalar_lea.vmem [#allocation2], %s181
      %v191 = vld [vmem:[%s190] sm:$0xff]
      %v192 = vld [vmem:[%s190 + $0x8] sm:$0xff]
      %v193 = vld [vmem:[%s190 + $0x10] sm:$0xff]
      %v194 = vld [vmem:[%s190 + $0x18] sm:$0xff]
      %v195 = vld [vmem:[%s190 + $0x20] sm:$0xff]
      %v196 = vld [vmem:[%s190 + $0x28] sm:$0xff]
      %v197 = vld [vmem:[%s190 + $0x30] sm:$0xff]
      %v198 = vld [vmem:[%s190 + $0x38] sm:$0xff]
      %v199 = vld [vmem:[%s190 + $0x40] sm:$0xff]
      %v200 = vld [vmem:[%s190 + $0x48] sm:$0xff]
      %v201 = vld [vmem:[%s190 + $0x50] sm:$0xff]
      %v202 = vld [vmem:[%s190 + $0x58] sm:$0xff]
      %v203 = vld [vmem:[%s190 + $0x60] sm:$0xff]
      %v204 = vld [vmem:[%s190 + $0x68] sm:$0xff]
      %v205 = vld [vmem:[#allocation5] sm:$0x1]
      %v206 = vlaneseq
      %v207 = vshrl.u32 %v206, 7
      %v208 = vsub.s32 0, %v207
      %v209 = vrot.slane %v205, %v208
      %v210 = vmul.f32 %v191, %v209
      %v211 = vmul.f32 %v192, %v209
      %v212 = vmul.f32 %v193, %v209
      %v213 = vmul.f32 %v194, %v209
      %v214 = vmul.f32 %v195, %v209
      %v215 = vmul.f32 %v196, %v209
      %v216 = vmul.f32 %v197, %v209
      %v217 = vmul.f32 %v198, %v209
      %v218 = vmul.f32 %v199, %v209
      %v219 = vmul.f32 %v200, %v209
      %v220 = vmul.f32 %v201, %v209
      %v221 = vmul.f32 %v202, %v209
      %v222 = vmul.f32 %v203, %v209
      %v223 = vmul.f32 %v204, %v209
      %v224 = vadd.f32 %v189, %v210
      %v225 = vadd.f32 %v189, %v211
      %v226 = vadd.f32 %v189, %v212
      %v227 = vadd.f32 %v189, %v213
      %v228 = vadd.f32 %v189, %v214
      %v229 = vadd.f32 %v189, %v215
      %v230 = vadd.f32 %v189, %v216
      %v231 = vadd.f32 %v189, %v217
      %v232 = vadd.f32 %v189, %v218
      %v233 = vadd.f32 %v189, %v219
      %v234 = vadd.f32 %v189, %v220
      %v235 = vadd.f32 %v189, %v221
      %v236 = vadd.f32 %v189, %v222
      %v237 = vadd.f32 %v189, %v223
      %s238 = sadd.s32 %s181, 1
      %s239 = scalar_lea.vmem [#allocation2], %s238
      %v240 = vld [vmem:[%s239] sm:$0xff]
      %v241 = vld [vmem:[%s239 + $0x8] sm:$0xff]
      %v242 = vld [vmem:[%s239 + $0x10] sm:$0xff]
      %v243 = vld [vmem:[%s239 + $0x18] sm:$0xff]
      %v244 = vld [vmem:[%s239 + $0x20] sm:$0xff]
      %v245 = vld [vmem:[%s239 + $0x28] sm:$0xff]
      %v246 = vld [vmem:[%s239 + $0x30] sm:$0xff]
      %v247 = vld [vmem:[%s239 + $0x38] sm:$0xff]
      %v248 = vld [vmem:[%s239 + $0x40] sm:$0xff]
      %v249 = vld [vmem:[%s239 + $0x48] sm:$0xff]
      %v250 = vld [vmem:[%s239 + $0x50] sm:$0xff]
      %v251 = vld [vmem:[%s239 + $0x58] sm:$0xff]
      %v252 = vld [vmem:[%s239 + $0x60] sm:$0xff]
      %v253 = vld [vmem:[%s239 + $0x68] sm:$0xff]
      %v254 = vld [vmem:[#allocation5 + $0x1] sm:$0x1]
      %v255 = vlaneseq
      %v256 = vshrl.u32 %v255, 7
      %v257 = vsub.s32 0, %v256
      %v258 = vrot.slane %v254, %v257
      %v259 = vmul.f32 %v240, %v258
      %v260 = vmul.f32 %v241, %v258
      %v261 = vmul.f32 %v242, %v258
      %v262 = vmul.f32 %v243, %v258
      %v263 = vmul.f32 %v244, %v258
      %v264 = vmul.f32 %v245, %v258
      %v265 = vmul.f32 %v246, %v258
      %v266 = vmul.f32 %v247, %v258
      %v267 = vmul.f32 %v248, %v258
      %v268 = vmul.f32 %v249, %v258
      %v269 = vmul.f32 %v250, %v258
      %v270 = vmul.f32 %v251, %v258
      %v271 = vmul.f32 %v252, %v258
      %v272 = vmul.f32 %v253, %v258
      %v273 = vadd.f32 %v224, %v259
      %v274 = vadd.f32 %v225, %v260
      %v275 = vadd.f32 %v226, %v261
      %v276 = vadd.f32 %v227, %v262
      %v277 = vadd.f32 %v228, %v263
      %v278 = vadd.f32 %v229, %v264
      %v279 = vadd.f32 %v230, %v265
      %v280 = vadd.f32 %v231, %v266
      %v281 = vadd.f32 %v232, %v267
      %v282 = vadd.f32 %v233, %v268
      %v283 = vadd.f32 %v234, %v269
      %v284 = vadd.f32 %v235, %v270
      %v285 = vadd.f32 %v236, %v271
      %v286 = vadd.f32 %v237, %v272
      %s287 = sadd.s32 %s181, 2
      %s288 = scalar_lea.vmem [#allocation2], %s287
      %v289 = vld [vmem:[%s288] sm:$0xff]
      %v290 = vld [vmem:[%s288 + $0x8] sm:$0xff]
      %v291 = vld [vmem:[%s288 + $0x10] sm:$0xff]
      %v292 = vld [vmem:[%s288 + $0x18] sm:$0xff]
      %v293 = vld [vmem:[%s288 + $0x20] sm:$0xff]
      %v294 = vld [vmem:[%s288 + $0x28] sm:$0xff]
      %v295 = vld [vmem:[%s288 + $0x30] sm:$0xff]
      %v296 = vld [vmem:[%s288 + $0x38] sm:$0xff]
      %v297 = vld [vmem:[%s288 + $0x40] sm:$0xff]
      %v298 = vld [vmem:[%s288 + $0x48] sm:$0xff]
      %v299 = vld [vmem:[%s288 + $0x50] sm:$0xff]
      %v300 = vld [vmem:[%s288 + $0x58] sm:$0xff]
      %v301 = vld [vmem:[%s288 + $0x60] sm:$0xff]
      %v302 = vld [vmem:[%s288 + $0x68] sm:$0xff]
      %v303 = vld [vmem:[#allocation5 + $0x2] sm:$0x1]
      %v304 = vlaneseq
      %v305 = vshrl.u32 %v304, 7
      %v306 = vsub.s32 0, %v305
      %v307 = vrot.slane %v303, %v306
      %v308 = vmul.f32 %v289, %v307
      %v309 = vmul.f32 %v290, %v307
      %v310 = vmul.f32 %v291, %v307
      %v311 = vmul.f32 %v292, %v307
      %v312 = vmul.f32 %v293, %v307
      %v313 = vmul.f32 %v294, %v307
      %v314 = vmul.f32 %v295, %v307
      %v315 = vmul.f32 %v296, %v307
      %v316 = vmul.f32 %v297, %v307
      %v317 = vmul.f32 %v298, %v307
      %v318 = vmul.f32 %v299, %v307
      %v319 = vmul.f32 %v300, %v307
      %v320 = vmul.f32 %v301, %v307
      %v321 = vmul.f32 %v302, %v307
      %v322 = vadd.f32 %v273, %v308
      %v323 = vadd.f32 %v274, %v309
      %v324 = vadd.f32 %v275, %v310
      %v325 = vadd.f32 %v276, %v311
      %v326 = vadd.f32 %v277, %v312
      %v327 = vadd.f32 %v278, %v313
      %v328 = vadd.f32 %v279, %v314
      %v329 = vadd.f32 %v280, %v315
      %v330 = vadd.f32 %v281, %v316
      %v331 = vadd.f32 %v282, %v317
      %v332 = vadd.f32 %v283, %v318
      %v333 = vadd.f32 %v284, %v319
      %v334 = vadd.f32 %v285, %v320
      %v335 = vadd.f32 %v286, %v321
      %s336 = sadd.s32 %s181, 28
      %s337 = scalar_lea.vmem [#allocation2], %s336
      %v338 = vld [vmem:[%s337] sm:$0xff]
      %v339 = vld [vmem:[%s337 + $0x8] sm:$0xff]
      %v340 = vld [vmem:[%s337 + $0x10] sm:$0xff]
      %v341 = vld [vmem:[%s337 + $0x18] sm:$0xff]
      %v342 = vld [vmem:[%s337 + $0x20] sm:$0xff]
      %v343 = vld [vmem:[%s337 + $0x28] sm:$0xff]
      %v344 = vld [vmem:[%s337 + $0x30] sm:$0xff]
      %v345 = vld [vmem:[%s337 + $0x38] sm:$0xff]
      %v346 = vld [vmem:[%s337 + $0x40] sm:$0xff]
      %v347 = vld [vmem:[%s337 + $0x48] sm:$0xff]
      %v348 = vld [vmem:[%s337 + $0x50] sm:$0xff]
      %v349 = vld [vmem:[%s337 + $0x58] sm:$0xff]
      %v350 = vld [vmem:[%s337 + $0x60] sm:$0xff]
      %v351 = vld [vmem:[%s337 + $0x68] sm:$0xff]
      %v352 = vld [vmem:[#allocation5 + $0x3] sm:$0x1]
      %v353 = vlaneseq
      %v354 = vshrl.u32 %v353, 7
      %v355 = vsub.s32 0, %v354
      %v356 = vrot.slane %v352, %v355
      %v357 = vmul.f32 %v338, %v356
      %v358 = vmul.f32 %v339, %v356
      %v359 = vmul.f32 %v340, %v356
      %v360 = vmul.f32 %v341, %v356
      %v361 = vmul.f32 %v342, %v356
      %v362 = vmul.f32 %v343, %v356
      %v363 = vmul.f32 %v344, %v356
      %v364 = vmul.f32 %v345, %v356
      %v365 = vmul.f32 %v346, %v356
      %v366 = vmul.f32 %v347, %v356
      %v367 = vmul.f32 %v348, %v356
      %v368 = vmul.f32 %v349, %v356
      %v369 = vmul.f32 %v350, %v356
      %v370 = vmul.f32 %v351, %v356
      %v371 = vadd.f32 %v322, %v357
      %v372 = vadd.f32 %v323, %v358
      %v373 = vadd.f32 %v324, %v359
      %v374 = vadd.f32 %v325, %v360
      %v375 = vadd.f32 %v326, %v361
      %v376 = vadd.f32 %v327, %v362
      %v377 = vadd.f32 %v328, %v363
      %v378 = vadd.f32 %v329, %v364
      %v379 = vadd.f32 %v330, %v365
      %v380 = vadd.f32 %v331, %v366
      %v381 = vadd.f32 %v332, %v367
      %v382 = vadd.f32 %v333, %v368
      %v383 = vadd.f32 %v334, %v369
      %v384 = vadd.f32 %v335, %v370
      %s385 = sadd.s32 %s181, 29
      %s386 = scalar_lea.vmem [#allocation2], %s385
      %v387 = vld [vmem:[%s386] sm:$0xff]
      %v388 = vld [vmem:[%s386 + $0x8] sm:$0xff]
      %v389 = vld [vmem:[%s386 + $0x10] sm:$0xff]
      %v390 = vld [vmem:[%s386 + $0x18] sm:$0xff]
      %v391 = vld [vmem:[%s386 + $0x20] sm:$0xff]
      %v392 = vld [vmem:[%s386 + $0x28] sm:$0xff]
      %v393 = vld [vmem:[%s386 + $0x30] sm:$0xff]
      %v394 = vld [vmem:[%s386 + $0x38] sm:$0xff]
      %v395 = vld [vmem:[%s386 + $0x40] sm:$0xff]
      %v396 = vld [vmem:[%s386 + $0x48] sm:$0xff]
      %v397 = vld [vmem:[%s386 + $0x50] sm:$0xff]
      %v398 = vld [vmem:[%s386 + $0x58] sm:$0xff]
      %v399 = vld [vmem:[%s386 + $0x60] sm:$0xff]
      %v400 = vld [vmem:[%s386 + $0x68] sm:$0xff]
      %v401 = vld [vmem:[#allocation5 + $0x4] sm:$0x1]
      %v402 = vlaneseq
      %v403 = vshrl.u32 %v402, 7
      %v404 = vsub.s32 0, %v403
      %v405 = vrot.slane %v401, %v404
      %v406 = vmul.f32 %v387, %v405
      %v407 = vmul.f32 %v388, %v405
      %v408 = vmul.f32 %v389, %v405
      %v409 = vmul.f32 %v390, %v405
      %v410 = vmul.f32 %v391, %v405
      %v411 = vmul.f32 %v392, %v405
      %v412 = vmul.f32 %v393, %v405
      %v413 = vmul.f32 %v394, %v405
      %v414 = vmul.f32 %v395, %v405
      %v415 = vmul.f32 %v396, %v405
      %v416 = vmul.f32 %v397, %v405
      %v417 = vmul.f32 %v398, %v405
      %v418 = vmul.f32 %v399, %v405
      %v419 = vmul.f32 %v400, %v405
      %v420 = vadd.f32 %v371, %v406
      %v421 = vadd.f32 %v372, %v407
      %v422 = vadd.f32 %v373, %v408
      %v423 = vadd.f32 %v374, %v409
      %v424 = vadd.f32 %v375, %v410
      %v425 = vadd.f32 %v376, %v411
      %v426 = vadd.f32 %v377, %v412
      %v427 = vadd.f32 %v378, %v413
      %v428 = vadd.f32 %v379, %v414
      %v429 = vadd.f32 %v380, %v415
      %v430 = vadd.f32 %v381, %v416
      %v431 = vadd.f32 %v382, %v417
      %v432 = vadd.f32 %v383, %v418
      %v433 = vadd.f32 %v384, %v419
      %s434 = sadd.s32 %s181, 30
      %s435 = scalar_lea.vmem [#allocation2], %s434
      %v436 = vld [vmem:[%s435] sm:$0xff]
      %v437 = vld [vmem:[%s435 + $0x8] sm:$0xff]
      %v438 = vld [vmem:[%s435 + $0x10] sm:$0xff]
      %v439 = vld [vmem:[%s435 + $0x18] sm:$0xff]
      %v440 = vld [vmem:[%s435 + $0x20] sm:$0xff]
      %v441 = vld [vmem:[%s435 + $0x28] sm:$0xff]
      %v442 = vld [vmem:[%s435 + $0x30] sm:$0xff]
      %v443 = vld [vmem:[%s435 + $0x38] sm:$0xff]
      %v444 = vld [vmem:[%s435 + $0x40] sm:$0xff]
      %v445 = vld [vmem:[%s435 + $0x48] sm:$0xff]
      %v446 = vld [vmem:[%s435 + $0x50] sm:$0xff]
      %v447 = vld [vmem:[%s435 + $0x58] sm:$0xff]
      %v448 = vld [vmem:[%s435 + $0x60] sm:$0xff]
      %v449 = vld [vmem:[%s435 + $0x68] sm:$0xff]
      %v450 = vld [vmem:[#allocation5 + $0x5] sm:$0x1]
      %v451 = vlaneseq
      %v452 = vshrl.u32 %v451, 7
      %v453 = vsub.s32 0, %v452
      %v454 = vrot.slane %v450, %v453
      %v455 = vmul.f32 %v436, %v454
      %v456 = vmul.f32 %v437, %v454
      %v457 = vmul.f32 %v438, %v454
      %v458 = vmul.f32 %v439, %v454
      %v459 = vmul.f32 %v440, %v454
      %v460 = vmul.f32 %v441, %v454
      %v461 = vmul.f32 %v442, %v454
      %v462 = vmul.f32 %v443, %v454
      %v463 = vmul.f32 %v444, %v454
      %v464 = vmul.f32 %v445, %v454
      %v465 = vmul.f32 %v446, %v454
      %v466 = vmul.f32 %v447, %v454
      %v467 = vmul.f32 %v448, %v454
      %v468 = vmul.f32 %v449, %v454
      %v469 = vadd.f32 %v420, %v455
      %v470 = vadd.f32 %v421, %v456
      %v471 = vadd.f32 %v422, %v457
      %v472 = vadd.f32 %v423, %v458
      %v473 = vadd.f32 %v424, %v459
      %v474 = vadd.f32 %v425, %v460
      %v475 = vadd.f32 %v426, %v461
      %v476 = vadd.f32 %v427, %v462
      %v477 = vadd.f32 %v428, %v463
      %v478 = vadd.f32 %v429, %v464
      %v479 = vadd.f32 %v430, %v465
      %v480 = vadd.f32 %v431, %v466
      %v481 = vadd.f32 %v432, %v467
      %v482 = vadd.f32 %v433, %v468
      %s483 = sadd.s32 %s181, 56
      %s484 = scalar_lea.vmem [#allocation2], %s483
      %v485 = vld [vmem:[%s484] sm:$0xff]
      %v486 = vld [vmem:[%s484 + $0x8] sm:$0xff]
      %v487 = vld [vmem:[%s484 + $0x10] sm:$0xff]
      %v488 = vld [vmem:[%s484 + $0x18] sm:$0xff]
      %v489 = vld [vmem:[%s484 + $0x20] sm:$0xff]
      %v490 = vld [vmem:[%s484 + $0x28] sm:$0xff]
      %v491 = vld [vmem:[%s484 + $0x30] sm:$0xff]
      %v492 = vld [vmem:[%s484 + $0x38] sm:$0xff]
      %v493 = vld [vmem:[%s484 + $0x40] sm:$0xff]
      %v494 = vld [vmem:[%s484 + $0x48] sm:$0xff]
      %v495 = vld [vmem:[%s484 + $0x50] sm:$0xff]
      %v496 = vld [vmem:[%s484 + $0x58] sm:$0xff]
      %v497 = vld [vmem:[%s484 + $0x60] sm:$0xff]
      %v498 = vld [vmem:[%s484 + $0x68] sm:$0xff]
      %v499 = vld [vmem:[#allocation5 + $0x6] sm:$0x1]
      %v500 = vlaneseq
      %v501 = vshrl.u32 %v500, 7
      %v502 = vsub.s32 0, %v501
      %v503 = vrot.slane %v499, %v502
      %v504 = vmul.f32 %v485, %v503
      %v505 = vmul.f32 %v486, %v503
      %v506 = vmul.f32 %v487, %v503
      %v507 = vmul.f32 %v488, %v503
      %v508 = vmul.f32 %v489, %v503
      %v509 = vmul.f32 %v490, %v503
      %v510 = vmul.f32 %v491, %v503
      %v511 = vmul.f32 %v492, %v503
      %v512 = vmul.f32 %v493, %v503
      %v513 = vmul.f32 %v494, %v503
      %v514 = vmul.f32 %v495, %v503
      %v515 = vmul.f32 %v496, %v503
      %v516 = vmul.f32 %v497, %v503
      %v517 = vmul.f32 %v498, %v503
      %v518 = vadd.f32 %v469, %v504
      %v519 = vadd.f32 %v470, %v505
      %v520 = vadd.f32 %v471, %v506
      %v521 = vadd.f32 %v472, %v507
      %v522 = vadd.f32 %v473, %v508
      %v523 = vadd.f32 %v474, %v509
      %v524 = vadd.f32 %v475, %v510
      %v525 = vadd.f32 %v476, %v511
      %v526 = vadd.f32 %v477, %v512
      %v527 = vadd.f32 %v478, %v513
      %v528 = vadd.f32 %v479, %v514
      %v529 = vadd.f32 %v480, %v515
      %v530 = vadd.f32 %v481, %v516
      %v531 = vadd.f32 %v482, %v517
      %s532 = sadd.s32 %s181, 57
      %s533 = scalar_lea.vmem [#allocation2], %s532
      %v534 = vld [vmem:[%s533] sm:$0xff]
      %v535 = vld [vmem:[%s533 + $0x8] sm:$0xff]
      %v536 = vld [vmem:[%s533 + $0x10] sm:$0xff]
      %v537 = vld [vmem:[%s533 + $0x18] sm:$0xff]
      %v538 = vld [vmem:[%s533 + $0x20] sm:$0xff]
      %v539 = vld [vmem:[%s533 + $0x28] sm:$0xff]
      %v540 = vld [vmem:[%s533 + $0x30] sm:$0xff]
      %v541 = vld [vmem:[%s533 + $0x38] sm:$0xff]
      %v542 = vld [vmem:[%s533 + $0x40] sm:$0xff]
      %v543 = vld [vmem:[%s533 + $0x48] sm:$0xff]
      %v544 = vld [vmem:[%s533 + $0x50] sm:$0xff]
      %v545 = vld [vmem:[%s533 + $0x58] sm:$0xff]
      %v546 = vld [vmem:[%s533 + $0x60] sm:$0xff]
      %v547 = vld [vmem:[%s533 + $0x68] sm:$0xff]
      %v548 = vld [vmem:[#allocation5 + $0x7] sm:$0x1]
      %v549 = vlaneseq
      %v550 = vshrl.u32 %v549, 7
      %v551 = vsub.s32 0, %v550
      %v552 = vrot.slane %v548, %v551
      %v553 = vmul.f32 %v534, %v552
      %v554 = vmul.f32 %v535, %v552
      %v555 = vmul.f32 %v536, %v552
      %v556 = vmul.f32 %v537, %v552
      %v557 = vmul.f32 %v538, %v552
      %v558 = vmul.f32 %v539, %v552
      %v559 = vmul.f32 %v540, %v552
      %v560 = vmul.f32 %v541, %v552
      %v561 = vmul.f32 %v542, %v552
      %v562 = vmul.f32 %v543, %v552
      %v563 = vmul.f32 %v544, %v552
      %v564 = vmul.f32 %v545, %v552
      %v565 = vmul.f32 %v546, %v552
      %v566 = vmul.f32 %v547, %v552
      %v567 = vadd.f32 %v518, %v553
      %v568 = vadd.f32 %v519, %v554
      %v569 = vadd.f32 %v520, %v555
      %v570 = vadd.f32 %v521, %v556
      %v571 = vadd.f32 %v522, %v557
      %v572 = vadd.f32 %v523, %v558
      %v573 = vadd.f32 %v524, %v559
      %v574 = vadd.f32 %v525, %v560
      %v575 = vadd.f32 %v526, %v561
      %v576 = vadd.f32 %v527, %v562
      %v577 = vadd.f32 %v528, %v563
      %v578 = vadd.f32 %v529, %v564
      %v579 = vadd.f32 %v530, %v565
      %v580 = vadd.f32 %v531, %v566
      %s581 = sadd.s32 %s181, 58
      %s582 = scalar_lea.vmem [#allocation2], %s581
      %v583 = vld [vmem:[%s582] sm:$0xff]
      %v584 = vld [vmem:[%s582 + $0x8] sm:$0xff]
      %v585 = vld [vmem:[%s582 + $0x10] sm:$0xff]
      %v586 = vld [vmem:[%s582 + $0x18] sm:$0xff]
      %v587 = vld [vmem:[%s582 + $0x20] sm:$0xff]
      %v588 = vld [vmem:[%s582 + $0x28] sm:$0xff]
      %v589 = vld [vmem:[%s582 + $0x30] sm:$0xff]
      %v590 = vld [vmem:[%s582 + $0x38] sm:$0xff]
      %v591 = vld [vmem:[%s582 + $0x40] sm:$0xff]
      %v592 = vld [vmem:[%s582 + $0x48] sm:$0xff]
      %v593 = vld [vmem:[%s582 + $0x50] sm:$0xff]
      %v594 = vld [vmem:[%s582 + $0x58] sm:$0xff]
      %v595 = vld [vmem:[%s582 + $0x60] sm:$0xff]
      %v596 = vld [vmem:[%s582 + $0x68] sm:$0xff]
      %v597 = vld [vmem:[#allocation5 + $0x8] sm:$0x1]
      %v598 = vlaneseq
      %v599 = vshrl.u32 %v598, 7
      %v600 = vsub.s32 0, %v599
      %v601 = vrot.slane %v597, %v600
      %v602 = vmul.f32 %v583, %v601
      %v603 = vmul.f32 %v584, %v601
      %v604 = vmul.f32 %v585, %v601
      %v605 = vmul.f32 %v586, %v601
      %v606 = vmul.f32 %v587, %v601
      %v607 = vmul.f32 %v588, %v601
      %v608 = vmul.f32 %v589, %v601
      %v609 = vmul.f32 %v590, %v601
      %v610 = vmul.f32 %v591, %v601
      %v611 = vmul.f32 %v592, %v601
      %v612 = vmul.f32 %v593, %v601
      %v613 = vmul.f32 %v594, %v601
      %v614 = vmul.f32 %v595, %v601
      %v615 = vmul.f32 %v596, %v601
      %v616 = vadd.f32 %v567, %v602
      %v617 = vadd.f32 %v568, %v603
      %v618 = vadd.f32 %v569, %v604
      %v619 = vadd.f32 %v570, %v605
      %v620 = vadd.f32 %v571, %v606
      %v621 = vadd.f32 %v572, %v607
      %v622 = vadd.f32 %v573, %v608
      %v623 = vadd.f32 %v574, %v609
      %v624 = vadd.f32 %v575, %v610
      %v625 = vadd.f32 %v576, %v611
      %v626 = vadd.f32 %v577, %v612
      %v627 = vadd.f32 %v578, %v613
      %v628 = vadd.f32 %v579, %v614
      %v629 = vadd.f32 %v580, %v615
      %v630 = vmax.f32 %v616, 0.0
      %v631 = vmax.f32 %v617, 0.0
      %v632 = vmax.f32 %v618, 0.0
      %v633 = vmax.f32 %v619, 0.0
      %v634 = vmax.f32 %v620, 0.0
      %v635 = vmax.f32 %v621, 0.0
      %v636 = vmax.f32 %v622, 0.0
      %v637 = vmax.f32 %v623, 0.0
      %v638 = vmax.f32 %v624, 0.0
      %v639 = vmax.f32 %v625, 0.0
      %v640 = vmax.f32 %v626, 0.0
      %v641 = vmax.f32 %v627, 0.0
      %v642 = vmax.f32 %v628, 0.0
      %v643 = vmax.f32 %v629, 0.0
      %s644 = scalar_lea.vmem [#allocation3], %s181
      %645 = vst.msk [vmem:[%s644] sm:$0xff] %vm166, %v630
      %646 = vst.msk [vmem:[%s644 + $0x8] sm:$0xff] %vm166, %v631
      %647 = vst.msk [vmem:[%s644 + $0x10] sm:$0xff] %vm166, %v632
      %648 = vst.msk [vmem:[%s644 + $0x18] sm:$0xff] %vm166, %v633
      %649 = vst.msk [vmem:[%s644 + $0x20] sm:$0xff] %vm166, %v634
      %650 = vst.msk [vmem:[%s644 + $0x28] sm:$0xff] %vm166, %v635
      %651 = vst.msk [vmem:[%s644 + $0x30] sm:$0xff] %vm166, %v636
      %652 = vst.msk [vmem:[%s644 + $0x38] sm:$0xff] %vm166, %v637
      %653 = vst.msk [vmem:[%s644 + $0x40] sm:$0xff] %vm166, %v638
      %654 = vst.msk [vmem:[%s644 + $0x48] sm:$0xff] %vm166, %v639
      %655 = vst.msk [vmem:[%s644 + $0x50] sm:$0xff] %vm166, %v640
      %656 = vst.msk [vmem:[%s644 + $0x58] sm:$0xff] %vm166, %v641
      %657 = vst.msk [vmem:[%s644 + $0x60] sm:$0xff] %vm166, %v642
      %658 = vst.msk [vmem:[%s644 + $0x68] sm:$0xff] %vm166, %v643
    $region45: #{mnist_forward.2} parent=1 // loop_footer
      %s180 = sadd.s32 1, %s176
    $region46: #{mnist_forward.2} parent=1 // loop_footer_branch
      %175 = sbr.rel target = $region42
    $region47: #{mnist_forward.2} parent=1 // loop_exit
      _
    %659 = vst.msk [vmem:[#allocation3 + $0x620] sm:$0xff] %vm166, 0.0
    %660 = vst.msk [vmem:[#allocation3 + $0x628] sm:$0xff] %vm166, 0.0
    %661 = vst.msk [vmem:[#allocation3 + $0x630] sm:$0xff] %vm166, 0.0
    %662 = vst.msk [vmem:[#allocation3 + $0x638] sm:$0xff] %vm166, 0.0
    %663 = vst.msk [vmem:[#allocation3 + $0x640] sm:$0xff] %vm166, 0.0
    %664 = vst.msk [vmem:[#allocation3 + $0x648] sm:$0xff] %vm166, 0.0
    %665 = vst.msk [vmem:[#allocation3 + $0x650] sm:$0xff] %vm166, 0.0
    %666 = vst.msk [vmem:[#allocation3 + $0x658] sm:$0xff] %vm166, 0.0
    loop: start=0, step=1, limit=14
    $region48: #{mnist_forward.2} parent=1 // loop_pre_header
      _
    $region49: #{mnist_forward.2} parent=1 // loop_header
      %s668 = sphi 0, %s672
      %p669 = scmp.ge.s32.totalorder %s668, 14
    $region50: #{mnist_forward.2} parent=1 // loop_header_branch
      %671 = sbr.rel (%p669) target = $region54
    $region51: #{mnist_forward.2} parent=1 // loop_body
      %s673 = smul.u32 %s668, 112
      %v674 = vld [vmem:[#allocation9] sm:$0x1]
      %v676 = vlaneseq
      %v677 = vshrl.u32 %v676, 7
      %v678 = vsub.s32 0, %v677
      %v679 = vrot.slane %v674, %v678
      %v681 = vadd.f32 %v679, 0.0
      %s682 = scalar_lea.vmem [#allocation3], %s673
      %v683 = vld [vmem:[%s682] sm:$0xff]
      %v684 = vld [vmem:[%s682 + $0x8] sm:$0xff]
      %v685 = vld [vmem:[%s682 + $0x10] sm:$0xff]
      %v686 = vld [vmem:[%s682 + $0x18] sm:$0xff]
      %v687 = vld [vmem:[%s682 + $0x20] sm:$0xff]
      %v688 = vld [vmem:[%s682 + $0x28] sm:$0xff]
      %v689 = vld [vmem:[%s682 + $0x30] sm:$0xff]
      %v690 = vld [vmem:[%s682 + $0x38] sm:$0xff]
      %v691 = vld [vmem:[%s682 + $0x40] sm:$0xff]
      %v692 = vld [vmem:[%s682 + $0x48] sm:$0xff]
      %v693 = vld [vmem:[%s682 + $0x50] sm:$0xff]
      %v694 = vld [vmem:[%s682 + $0x58] sm:$0xff]
      %v695 = vld [vmem:[%s682 + $0x60] sm:$0xff]
      %v696 = vld [vmem:[%s682 + $0x68] sm:$0xff]
      %v697 = vpack.c.bf16 %v684, %v683
      %v698 = vpack.c.bf16 %v686, %v685
      %v699 = vpack.c.bf16 %v688, %v687
      %v700 = vpack.c.bf16 %v690, %v689
      %v701 = vpack.c.bf16 %v692, %v691
      %v702 = vpack.c.bf16 %v694, %v693
      %v703 = vpack.c.bf16 %v696, %v695
      %v704 = vld [vmem:[%s3] sm:$0xf]
      %v705 = vld [vmem:[%s3 + $0x4] sm:$0xf]
      %v706 = vld [vmem:[%s3 + $0x8] sm:$0xf]
      %v707 = vld [vmem:[%s3 + $0xc] sm:$0xf]
      %v712 = vunpack.c.l.b16 %v704
      %v713 = vunpack.c.l.b16 %v705
      %v714 = vunpack.c.l.b16 %v706
      %v715 = vunpack.c.l.b16 %v707
      %v716 = vpack.c.b16 %v713, %v712
      %v717 = vpack.c.b16 %v715, %v714
      %v721 = vsel %vm166, %v697, 0
      %v724 = vsel %vm166, %v698, 0
      %v727 = vsel %vm166, %v699, 0
      %v730 = vsel %vm166, %v700, 0
      %v733 = vsel %vm166, %v701, 0
      %v736 = vsel %vm166, %v702, 0
      %v739 = vsel %vm166, %v703, 0
      %741 = vmatprep.subr.bf16.mxu0 0
      %742 = vmatpush1.bf16.msra.mxu0 %v716
      %743 = vmatprep.subr.bf16.mxu0 0
      %744 = vmatpush1.bf16.msra.mxu0 %v717
      %745 = vmatprep.subr.bf16.mxu0 0
      %746 = vmatpush1.bf16.msra.mxu0 0
      %747 = vmatprep.subr.bf16.mxu0 0
      %748 = vmatpush1.bf16.msra.mxu0 0
      %749 = vmatprep.subr.bf16.mxu0 0
      %750 = vmatpush1.bf16.msra.mxu0 0
      %751 = vmatprep.subr.bf16.mxu0 0
      %752 = vmatpush1.bf16.msra.mxu0 0
      %753 = vmatprep.subr.bf16.mxu0 0
      %754 = vmatpush1.bf16.msra.mxu0 0
      %755 = vmatprep.subr.bf16.mxu0 0
      %756 = vmatpush1.bf16.msra.mxu0 0
      %757 = vmatprep.subr.bf16.mxu0 0
      %758 = vmatpush1.bf16.msra.mxu0 0
      %759 = vmatprep.subr.bf16.mxu0 0
      %760 = vmatpush1.bf16.msra.mxu0 0
      %761 = vmatprep.subr.bf16.mxu0 0
      %762 = vmatpush1.bf16.msra.mxu0 0
      %763 = vmatprep.subr.bf16.mxu0 0
      %764 = vmatpush1.bf16.msra.mxu0 0
      %765 = vmatprep.subr.bf16.mxu0 0
      %766 = vmatpush1.bf16.msra.mxu0 0
      %767 = vmatprep.subr.bf16.mxu0 0
      %768 = vmatpush1.bf16.msra.mxu0 0
      %769 = vmatprep.subr.bf16.mxu0 0
      %770 = vmatpush1.bf16.msra.mxu0 0
      %771 = vmatprep.subr.bf16.mxu0 0
      %772 = vmatpush1.bf16.msra.mxu0 0
      %773 = vmatprep.mubr.bf16.mxu0 0
      %774 = vmatmul.mubr.bf16.gmra.mrb[0].mxu0 %v721
      %v775 = vpop.f32.mrb[0].mxu0
      %v776 = vadd.f32 0.0, %v775
      %v777 = vpop.f32.mrb[0].mxu0
      %v778 = vpop.f32.mrb[0].mxu0
      %v779 = vadd.f32 0.0, %v778
      %v780 = vpop.f32.mrb[0].mxu0
      %781 = vmatprep.mubr.bf16.mxu0 0
      %782 = vmatmul.mubr.bf16.gmra.mrb[0].mxu0 %v724
      %v783 = vpop.f32.mrb[0].mxu0
      %v784 = vadd.f32 0.0, %v783
      %v785 = vpop.f32.mrb[0].mxu0
      %v786 = vpop.f32.mrb[0].mxu0
      %v787 = vadd.f32 0.0, %v786
      %v788 = vpop.f32.mrb[0].mxu0
      %789 = vmatprep.mubr.bf16.mxu0 0
      %790 = vmatmul.mubr.bf16.gmra.mrb[0].mxu0 %v727
      %v791 = vpop.f32.mrb[0].mxu0
      %v792 = vadd.f32 0.0, %v791
      %v793 = vpop.f32.mrb[0].mxu0
      %v794 = vpop.f32.mrb[0].mxu0
      %v795 = vadd.f32 0.0, %v794
      %v796 = vpop.f32.mrb[0].mxu0
      %797 = vmatprep.mubr.bf16.mxu0 0
      %798 = vmatmul.mubr.bf16.gmra.mrb[0].mxu0 %v730
      %v799 = vpop.f32.mrb[0].mxu0
      %v800 = vadd.f32 0.0, %v799
      %v801 = vpop.f32.mrb[0].mxu0
      %v802 = vpop.f32.mrb[0].mxu0
      %v803 = vadd.f32 0.0, %v802
      %v804 = vpop.f32.mrb[0].mxu0
      %805 = vmatprep.mubr.bf16.mxu0 0
      %806 = vmatmul.mubr.bf16.gmra.mrb[0].mxu0 %v733
      %v807 = vpop.f32.mrb[0].mxu0
      %v808 = vadd.f32 0.0, %v807
      %v809 = vpop.f32.mrb[0].mxu0
      %v810 = vpop.f32.mrb[0].mxu0
      %v811 = vadd.f32 0.0, %v810
      %v812 = vpop.f32.mrb[0].mxu0
      %813 = vmatprep.mubr.bf16.mxu0 0
      %814 = vmatmul.mubr.bf16.gmra.mrb[0].mxu0 %v736
      %v815 = vpop.f32.mrb[0].mxu0
      %v816 = vadd.f32 0.0, %v815
      %v817 = vpop.f32.mrb[0].mxu0
      %v818 = vpop.f32.mrb[0].mxu0
      %v819 = vadd.f32 0.0, %v818
      %v820 = vpop.f32.mrb[0].mxu0
      %821 = vmatprep.mubr.bf16.mxu0 0
      %822 = vmatmul.mubr.bf16.gmra.mrb[0].mxu0 %v739
      %v823 = vpop.f32.mrb[0].mxu0
      %v824 = vadd.f32 0.0, %v823
      %v825 = vpop.f32.mrb[0].mxu0
      %v826 = vpop.f32.mrb[0].mxu0
      %v827 = vadd.f32 0.0, %v826
      %v828 = vpop.f32.mrb[0].mxu0
      %829 = vdwg.mxu0
      %v830 = vadd.f32 %v681, %v776
      %v831 = vadd.f32 %v681, %v779
      %v832 = vadd.f32 %v681, %v784
      %v833 = vadd.f32 %v681, %v787
      %v834 = vadd.f32 %v681, %v792
      %v835 = vadd.f32 %v681, %v795
      %v836 = vadd.f32 %v681, %v800
      %v837 = vadd.f32 %v681, %v803
      %v838 = vadd.f32 %v681, %v808
      %v839 = vadd.f32 %v681, %v811
      %v840 = vadd.f32 %v681, %v816
      %v841 = vadd.f32 %v681, %v819
      %v842 = vadd.f32 %v681, %v824
      %v843 = vadd.f32 %v681, %v827
      %s844 = sadd.s32 %s673, 1
      %s845 = scalar_lea.vmem [#allocation3], %s844
      %v846 = vld [vmem:[%s845] sm:$0xff]
      %v847 = vld [vmem:[%s845 + $0x8] sm:$0xff]
      %v848 = vld [vmem:[%s845 + $0x10] sm:$0xff]
      %v849 = vld [vmem:[%s845 + $0x18] sm:$0xff]
      %v850 = vld [vmem:[%s845 + $0x20] sm:$0xff]
      %v851 = vld [vmem:[%s845 + $0x28] sm:$0xff]
      %v852 = vld [vmem:[%s845 + $0x30] sm:$0xff]
      %v853 = vld [vmem:[%s845 + $0x38] sm:$0xff]
      %v854 = vld [vmem:[%s845 + $0x40] sm:$0xff]
      %v855 = vld [vmem:[%s845 + $0x48] sm:$0xff]
      %v856 = vld [vmem:[%s845 + $0x50] sm:$0xff]
      %v857 = vld [vmem:[%s845 + $0x58] sm:$0xff]
      %v858 = vld [vmem:[%s845 + $0x60] sm:$0xff]
      %v859 = vld [vmem:[%s845 + $0x68] sm:$0xff]
      %v860 = vpack.c.bf16 %v847, %v846
      %v861 = vpack.c.bf16 %v849, %v848
      %v862 = vpack.c.bf16 %v851, %v850
      %v863 = vpack.c.bf16 %v853, %v852
      %v864 = vpack.c.bf16 %v855, %v854
      %v865 = vpack.c.bf16 %v857, %v856
      %v866 = vpack.c.bf16 %v859, %v858
      %v867 = vld [vmem:[%s3 + $0x10] sm:$0xf]
      %v868 = vld [vmem:[%s3 + $0x14] sm:$0xf]
      %v869 = vld [vmem:[%s3 + $0x18] sm:$0xf]
      %v870 = vld [vmem:[%s3 + $0x1c] sm:$0xf]
      %v875 = vunpack.c.l.b16 %v867
      %v876 = vunpack.c.l.b16 %v868
      %v877 = vunpack.c.l.b16 %v869
      %v878 = vunpack.c.l.b16 %v870
      %v879 = vpack.c.b16 %v876, %v875
      %v880 = vpack.c.b16 %v878, %v877
      %v884 = vsel %vm166, %v860, 0
      %v887 = vsel %vm166, %v861, 0
      %v890 = vsel %vm166, %v862, 0
      %v893 = vsel %vm166, %v863, 0
      %v896 = vsel %vm166, %v864, 0
      %v899 = vsel %vm166, %v865, 0
      %v902 = vsel %vm166, %v866, 0
      %904 = vmatprep.subr.bf16.mxu0 0
      %905 = vmatpush1.bf16.msra.mxu0 %v879
      %906 = vmatprep.subr.bf16.mxu0 0
      %907 = vmatpush1.bf16.msra.mxu0 %v880
      %908 = vmatprep.subr.bf16.mxu0 0
      %909 = vmatpush1.bf16.msra.mxu0 0
      %910 = vmatprep.subr.bf16.mxu0 0
      %911 = vmatpush1.bf16.msra.mxu0 0
      %912 = vmatprep.subr.bf16.mxu0 0
      %913 = vmatpush1.bf16.msra.mxu0 0
      %914 = vmatprep.subr.bf16.mxu0 0
      %915 = vmatpush1.bf16.msra.mxu0 0
      %916 = vmatprep.subr.bf16.mxu0 0
      %917 = vmatpush1.bf16.msra.mxu0 0
      %918 = vmatprep.subr.bf16.mxu0 0
      %919 = vmatpush1.bf16.msra.mxu0 0
      %920 = vmatprep.subr.bf16.mxu0 0
      %921 = vmatpush1.bf16.msra.mxu0 0
      %922 = vmatprep.subr.bf16.mxu0 0
      %923 = vmatpush1.bf16.msra.mxu0 0
      %924 = vmatprep.subr.bf16.mxu0 0
      %925 = vmatpush1.bf16.msra.mxu0 0
      %926 = vmatprep.subr.bf16.mxu0 0
      %927 = vmatpush1.bf16.msra.mxu0 0
      %928 = vmatprep.subr.bf16.mxu0 0
      %929 = vmatpush1.bf16.msra.mxu0 0
      %930 = vmatprep.subr.bf16.mxu0 0
      %931 = vmatpush1.bf16.msra.mxu0 0
      %932 = vmatprep.subr.bf16.mxu0 0
      %933 = vmatpush1.bf16.msra.mxu0 0
      %934 = vmatprep.subr.bf16.mxu0 0
      %935 = vmatpush1.bf16.msra.mxu0 0
      %936 = vmatprep.mubr.bf16.mxu0 0
      %937 = vmatmul.mubr.bf16.gmra.mrb[0].mxu0 %v884
      %v938 = vpop.f32.mrb[0].mxu0
      %v939 = vadd.f32 0.0, %v938
      %v940 = vpop.f32.mrb[0].mxu0
      %v941 = vpop.f32.mrb[0].mxu0
      %v942 = vadd.f32 0.0, %v941
      %v943 = vpop.f32.mrb[0].mxu0
      %944 = vmatprep.mubr.bf16.mxu0 0
      %945 = vmatmul.mubr.bf16.gmra.mrb[0].mxu0 %v887
      %v946 = vpop.f32.mrb[0].mxu0
      %v947 = vadd.f32 0.0, %v946
      %v948 = vpop.f32.mrb[0].mxu0
      %v949 = vpop.f32.mrb[0].mxu0
      %v950 = vadd.f32 0.0, %v949
      %v951 = vpop.f32.mrb[0].mxu0
      %952 = vmatprep.mubr.bf16.mxu0 0
      %953 = vmatmul.mubr.bf16.gmra.mrb[0].mxu0 %v890
      %v954 = vpop.f32.mrb[0].mxu0
      %v955 = vadd.f32 0.0, %v954
      %v956 = vpop.f32.mrb[0].mxu0
      %v957 = vpop.f32.mrb[0].mxu0
      %v958 = vadd.f32 0.0, %v957
      %v959 = vpop.f32.mrb[0].mxu0
      %960 = vmatprep.mubr.bf16.mxu0 0
      %961 = vmatmul.mubr.bf16.gmra.mrb[0].mxu0 %v893
      %v962 = vpop.f32.mrb[0].mxu0
      %v963 = vadd.f32 0.0, %v962
      %v964 = vpop.f32.mrb[0].mxu0
      %v965 = vpop.f32.mrb[0].mxu0
      %v966 = vadd.f32 0.0, %v965
      %v967 = vpop.f32.mrb[0].mxu0
      %968 = vmatprep.mubr.bf16.mxu0 0
      %969 = vmatmul.mubr.bf16.gmra.mrb[0].mxu0 %v896
      %v970 = vpop.f32.mrb[0].mxu0
      %v971 = vadd.f32 0.0, %v970
      %v972 = vpop.f32.mrb[0].mxu0
      %v973 = vpop.f32.mrb[0].mxu0
      %v974 = vadd.f32 0.0, %v973
      %v975 = vpop.f32.mrb[0].mxu0
      %976 = vmatprep.mubr.bf16.mxu0 0
      %977 = vmatmul.mubr.bf16.gmra.mrb[0].mxu0 %v899
      %v978 = vpop.f32.mrb[0].mxu0
      %v979 = vadd.f32 0.0, %v978
      %v980 = vpop.f32.mrb[0].mxu0
      %v981 = vpop.f32.mrb[0].mxu0
      %v982 = vadd.f32 0.0, %v981
      %v983 = vpop.f32.mrb[0].mxu0
      %984 = vmatprep.mubr.bf16.mxu0 0
      %985 = vmatmul.mubr.bf16.gmra.mrb[0].mxu0 %v902
      %v986 = vpop.f32.mrb[0].mxu0
      %v987 = vadd.f32 0.0, %v986
      %v988 = vpop.f32.mrb[0].mxu0
      %v989 = vpop.f32.mrb[0].mxu0
      %v990 = vadd.f32 0.0, %v989
      %v991 = vpop.f32.mrb[0].mxu0
      %992 = vdwg.mxu0
      %v993 = vadd.f32 %v830, %v939
      %v994 = vadd.f32 %v831, %v942
      %v995 = vadd.f32 %v832, %v947
      %v996 = vadd.f32 %v833, %v950
      %v997 = vadd.f32 %v834, %v955
      %v998 = vadd.f32 %v835, %v958
      %v999 = vadd.f32 %v836, %v963
      %v1000 = vadd.f32 %v837, %v966
      %v1001 = vadd.f32 %v838, %v971
      %v1002 = vadd.f32 %v839, %v974
      %v1003 = vadd.f32 %v840, %v979
      %v1004 = vadd.f32 %v841, %v982
      %v1005 = vadd.f32 %v842, %v987
      %v1006 = vadd.f32 %v843, %v990
      %s1007 = sadd.s32 %s673, 2
      %s1008 = scalar_lea.vmem [#allocation3], %s1007
      %v1009 = vld [vmem:[%s1008] sm:$0xff]
      %v1010 = vld [vmem:[%s1008 + $0x8] sm:$0xff]
      %v1011 = vld [vmem:[%s1008 + $0x10] sm:$0xff]
      %v1012 = vld [vmem:[%s1008 + $0x18] sm:$0xff]
      %v1013 = vld [vmem:[%s1008 + $0x20] sm:$0xff]
      %v1014 = vld [vmem:[%s1008 + $0x28] sm:$0xff]
      %v1015 = vld [vmem:[%s1008 + $0x30] sm:$0xff]
      %v1016 = vld [vmem:[%s1008 + $0x38] sm:$0xff]
      %v1017 = vld [vmem:[%s1008 + $0x40] sm:$0xff]
      %v1018 = vld [vmem:[%s1008 + $0x48] sm:$0xff]
      %v1019 = vld [vmem:[%s1008 + $0x50] sm:$0xff]
      %v1020 = vld [vmem:[%s1008 + $0x58] sm:$0xff]
      %v1021 = vld [vmem:[%s1008 + $0x60] sm:$0xff]
      %v1022 = vld [vmem:[%s1008 + $0x68] sm:$0xff]
      %v1023 = vpack.c.bf16 %v1010, %v1009
      %v1024 = vpack.c.bf16 %v1012, %v1011
      %v1025 = vpack.c.bf16 %v1014, %v1013
      %v1026 = vpack.c.bf16 %v1016, %v1015
      %v1027 = vpack.c.bf16 %v1018, %v1017
      %v1028 = vpack.c.bf16 %v1020, %v1019
      %v1029 = vpack.c.bf16 %v1022, %v1021
      %v1030 = vld [vmem:[%s3 + $0x20] sm:$0xf]
      %v1031 = vld [vmem:[%s3 + $0x24] sm:$0xf]
      %v1032 = vld [vmem:[%s3 + $0x28] sm:$0xf]
      %v1033 = vld [vmem:[%s3 + $0x2c] sm:$0xf]
      %v1038 = vunpack.c.l.b16 %v1030
      %v1039 = vunpack.c.l.b16 %v1031
      %v1040 = vunpack.c.l.b16 %v1032
      %v1041 = vunpack.c.l.b16 %v1033
      %v1042 = vpack.c.b16 %v1039, %v1038
      %v1043 = vpack.c.b16 %v1041, %v1040
      %v1047 = vsel %vm166, %v1023, 0
      %v1050 = vsel %vm166, %v1024, 0
      %v1053 = vsel %vm166, %v1025, 0
      %v1056 = vsel %vm166, %v1026, 0
      %v1059 = vsel %vm166, %v1027, 0
      %v1062 = vsel %vm166, %v1028, 0
      %v1065 = vsel %vm166, %v1029, 0
      %1067 = vmatprep.subr.bf16.mxu0 0
      %1068 = vmatpush1.bf16.msra.mxu0 %v1042
      %1069 = vmatprep.subr.bf16.mxu0 0
      %1070 = vmatpush1.bf16.msra.mxu0 %v1043
      %1071 = vmatprep.subr.bf16.mxu0 0
      %1072 = vmatpush1.bf16.msra.mxu0 0
      %1073 = vmatprep.subr.bf16.mxu0 0
      %1074 = vmatpush1.bf16.msra.mxu0 0
      %1075 = vmatprep.subr.bf16.mxu0 0
      %1076 = vmatpush1.bf16.msra.mxu0 0
      %1077 = vmatprep.subr.bf16.mxu0 0
      %1078 = vmatpush1.bf16.msra.mxu0 0
      %1079 = vmatprep.subr.bf16.mxu0 0
      %1080 = vmatpush1.bf16.msra.mxu0 0
      %1081 = vmatprep.subr.bf16.mxu0 0
      %1082 = vmatpush1.bf16.msra.mxu0 0
      %1083 = vmatprep.subr.bf16.mxu0 0
      %1084 = vmatpush1.bf16.msra.mxu0 0
      %1085 = vmatprep.subr.bf16.mxu0 0
      %1086 = vmatpush1.bf16.msra.mxu0 0
      %1087 = vmatprep.subr.bf16.mxu0 0
      %1088 = vmatpush1.bf16.msra.mxu0 0
      %1089 = vmatprep.subr.bf16.mxu0 0
      %1090 = vmatpush1.bf16.msra.mxu0 0
      %1091 = vmatprep.subr.bf16.mxu0 0
      %1092 = vmatpush1.bf16.msra.mxu0 0
      %1093 = vmatprep.subr.bf16.mxu0 0
      %1094 = vmatpush1.bf16.msra.mxu0 0
      %1095 = vmatprep.subr.bf16.mxu0 0
      %1096 = vmatpush1.bf16.msra.mxu0 0
      %1097 = vmatprep.subr.bf16.mxu0 0
      %1098 = vmatpush1.bf16.msra.mxu0 0
      %1099 = vmatprep.mubr.bf16.mxu0 0
      %1100 = vmatmul.mubr.bf16.gmra.mrb[0].mxu0 %v1047
      %v1101 = vpop.f32.mrb[0].mxu0
      %v1102 = vadd.f32 0.0, %v1101
      %v1103 = vpop.f32.mrb[0].mxu0
      %v1104 = vpop.f32.mrb[0].mxu0
      %v1105 = vadd.f32 0.0, %v1104
      %v1106 = vpop.f32.mrb[0].mxu0
      %1107 = vmatprep.mubr.bf16.mxu0 0
      %1108 = vmatmul.mubr.bf16.gmra.mrb[0].mxu0 %v1050
      %v1109 = vpop.f32.mrb[0].mxu0
      %v1110 = vadd.f32 0.0, %v1109
      %v1111 = vpop.f32.mrb[0].mxu0
      %v1112 = vpop.f32.mrb[0].mxu0
      %v1113 = vadd.f32 0.0, %v1112
      %v1114 = vpop.f32.mrb[0].mxu0
      %1115 = vmatprep.mubr.bf16.mxu0 0
      %1116 = vmatmul.mubr.bf16.gmra.mrb[0].mxu0 %v1053
      %v1117 = vpop.f32.mrb[0].mxu0
      %v1118 = vadd.f32 0.0, %v1117
      %v1119 = vpop.f32.mrb[0].mxu0
      %v1120 = vpop.f32.mrb[0].mxu0
      %v1121 = vadd.f32 0.0, %v1120
      %v1122 = vpop.f32.mrb[0].mxu0
      %1123 = vmatprep.mubr.bf16.mxu0 0
      %1124 = vmatmul.mubr.bf16.gmra.mrb[0].mxu0 %v1056
      %v1125 = vpop.f32.mrb[0].mxu0
      %v1126 = vadd.f32 0.0, %v1125
      %v1127 = vpop.f32.mrb[0].mxu0
      %v1128 = vpop.f32.mrb[0].mxu0
      %v1129 = vadd.f32 0.0, %v1128
      %v1130 = vpop.f32.mrb[0].mxu0
      %1131 = vmatprep.mubr.bf16.mxu0 0
      %1132 = vmatmul.mubr.bf16.gmra.mrb[0].mxu0 %v1059
      %v1133 = vpop.f32.mrb[0].mxu0
      %v1134 = vadd.f32 0.0, %v1133
      %v1135 = vpop.f32.mrb[0].mxu0
      %v1136 = vpop.f32.mrb[0].mxu0
      %v1137 = vadd.f32 0.0, %v1136
      %v1138 = vpop.f32.mrb[0].mxu0
      %1139 = vmatprep.mubr.bf16.mxu0 0
      %1140 = vmatmul.mubr.bf16.gmra.mrb[0].mxu0 %v1062
      %v1141 = vpop.f32.mrb[0].mxu0
      %v1142 = vadd.f32 0.0, %v1141
      %v1143 = vpop.f32.mrb[0].mxu0
      %v1144 = vpop.f32.mrb[0].mxu0
      %v1145 = vadd.f32 0.0, %v1144
      %v1146 = vpop.f32.mrb[0].mxu0
      %1147 = vmatprep.mubr.bf16.mxu0 0
      %1148 = vmatmul.mubr.bf16.gmra.mrb[0].mxu0 %v1065
      %v1149 = vpop.f32.mrb[0].mxu0
      %v1150 = vadd.f32 0.0, %v1149
      %v1151 = vpop.f32.mrb[0].mxu0
      %v1152 = vpop.f32.mrb[0].mxu0
      %v1153 = vadd.f32 0.0, %v1152
      %v1154 = vpop.f32.mrb[0].mxu0
      %1155 = vdwg.mxu0
      %v1156 = vadd.f32 %v993, %v1102
      %v1157 = vadd.f32 %v994, %v1105
      %v1158 = vadd.f32 %v995, %v1110
      %v1159 = vadd.f32 %v996, %v1113
      %v1160 = vadd.f32 %v997, %v1118
      %v1161 = vadd.f32 %v998, %v1121
      %v1162 = vadd.f32 %v999, %v1126
      %v1163 = vadd.f32 %v1000, %v1129
      %v1164 = vadd.f32 %v1001, %v1134
      %v1165 = vadd.f32 %v1002, %v1137
      %v1166 = vadd.f32 %v1003, %v1142
      %v1167 = vadd.f32 %v1004, %v1145
      %v1168 = vadd.f32 %v1005, %v1150
      %v1169 = vadd.f32 %v1006, %v1153
      %s1170 = sadd.s32 %s673, 28
      %s1171 = scalar_lea.vmem [#allocation3], %s1170
      %v1172 = vld [vmem:[%s1171] sm:$0xff]
      %v1173 = vld [vmem:[%s1171 + $0x8] sm:$0xff]
      %v1174 = vld [vmem:[%s1171 + $0x10] sm:$0xff]
      %v1175 = vld [vmem:[%s1171 + $0x18] sm:$0xff]
      %v1176 = vld [vmem:[%s1171 + $0x20] sm:$0xff]
      %v1177 = vld [vmem:[%s1171 + $0x28] sm:$0xff]
      %v1178 = vld [vmem:[%s1171 + $0x30] sm:$0xff]
      %v1179 = vld [vmem:[%s1171 + $0x38] sm:$0xff]
      %v1180 = vld [vmem:[%s1171 + $0x40] sm:$0xff]
      %v1181 = vld [vmem:[%s1171 + $0x48] sm:$0xff]
      %v1182 = vld [vmem:[%s1171 + $0x50] sm:$0xff]
      %v1183 = vld [vmem:[%s1171 + $0x58] sm:$0xff]
      %v1184 = vld [vmem:[%s1171 + $0x60] sm:$0xff]
      %v1185 = vld [vmem:[%s1171 + $0x68] sm:$0xff]
      %v1186 = vpack.c.bf16 %v1173, %v1172
      %v1187 = vpack.c.bf16 %v1175, %v1174
      %v1188 = vpack.c.bf16 %v1177, %v1176
      %v1189 = vpack.c.bf16 %v1179, %v1178
      %v1190 = vpack.c.bf16 %v1181, %v1180
      %v1191 = vpack.c.bf16 %v1183, %v1182
      %v1192 = vpack.c.bf16 %v1185, %v1184
      %v1193 = vld [vmem:[%s3 + $0x30] sm:$0xf]
      %v1194 = vld [vmem:[%s3 + $0x34] sm:$0xf]
      %v1195 = vld [vmem:[%s3 + $0x38] sm:$0xf]
      %v1196 = vld [vmem:[%s3 + $0x3c] sm:$0xf]
      %v1201 = vunpack.c.l.b16 %v1193
      %v1202 = vunpack.c.l.b16 %v1194
      %v1203 = vunpack.c.l.b16 %v1195
      %v1204 = vunpack.c.l.b16 %v1196
      %v1205 = vpack.c.b16 %v1202, %v1201
      %v1206 = vpack.c.b16 %v1204, %v1203
      %v1210 = vsel %vm166, %v1186, 0
      %v1213 = vsel %vm166, %v1187, 0
      %v1216 = vsel %vm166, %v1188, 0
      %v1219 = vsel %vm166, %v1189, 0
      %v1222 = vsel %vm166, %v1190, 0
      %v1225 = vsel %vm166, %v1191, 0
      %v1228 = vsel %vm166, %v1192, 0
      %1230 = vmatprep.subr.bf16.mxu0 0
      %1231 = vmatpush1.bf16.msra.mxu0 %v1205
      %1232 = vmatprep.subr.bf16.mxu0 0
      %1233 = vmatpush1.bf16.msra.mxu0 %v1206
      %1234 = vmatprep.subr.bf16.mxu0 0
      %1235 = vmatpush1.bf16.msra.mxu0 0
      %1236 = vmatprep.subr.bf16.mxu0 0
      %1237 = vmatpush1.bf16.msra.mxu0 0
      %1238 = vmatprep.subr.bf16.mxu0 0
      %1239 = vmatpush1.bf16.msra.mxu0 0
      %1240 = vmatprep.subr.bf16.mxu0 0
      %1241 = vmatpush1.bf16.msra.mxu0 0
      %1242 = vmatprep.subr.bf16.mxu0 0
      %1243 = vmatpush1.bf16.msra.mxu0 0
      %1244 = vmatprep.subr.bf16.mxu0 0
      %1245 = vmatpush1.bf16.msra.mxu0 0
      %1246 = vmatprep.subr.bf16.mxu0 0
      %1247 = vmatpush1.bf16.msra.mxu0 0
      %1248 = vmatprep.subr.bf16.mxu0 0
      %1249 = vmatpush1.bf16.msra.mxu0 0
      %1250 = vmatprep.subr.bf16.mxu0 0
      %1251 = vmatpush1.bf16.msra.mxu0 0
      %1252 = vmatprep.subr.bf16.mxu0 0
      %1253 = vmatpush1.bf16.msra.mxu0 0
      %1254 = vmatprep.subr.bf16.mxu0 0
      %1255 = vmatpush1.bf16.msra.mxu0 0
      %1256 = vmatprep.subr.bf16.mxu0 0
      %1257 = vmatpush1.bf16.msra.mxu0 0
      %1258 = vmatprep.subr.bf16.mxu0 0
      %1259 = vmatpush1.bf16.msra.mxu0 0
      %1260 = vmatprep.subr.bf16.mxu0 0
      %1261 = vmatpush1.bf16.msra.mxu0 0
      %1262 = vmatprep.mubr.bf16.mxu0 0
      %1263 = vmatmul.mubr.bf16.gmra.mrb[0].mxu0 %v1210
      %v1264 = vpop.f32.mrb[0].mxu0
      %v1265 = vadd.f32 0.0, %v1264
      %v1266 = vpop.f32.mrb[0].mxu0
      %v1267 = vpop.f32.mrb[0].mxu0
      %v1268 = vadd.f32 0.0, %v1267
      %v1269 = vpop.f32.mrb[0].mxu0
      %1270 = vmatprep.mubr.bf16.mxu0 0
      %1271 = vmatmul.mubr.bf16.gmra.mrb[0].mxu0 %v1213
      %v1272 = vpop.f32.mrb[0].mxu0
      %v1273 = vadd.f32 0.0, %v1272
      %v1274 = vpop.f32.mrb[0].mxu0
      %v1275 = vpop.f32.mrb[0].mxu0
      %v1276 = vadd.f32 0.0, %v1275
      %v1277 = vpop.f32.mrb[0].mxu0
      %1278 = vmatprep.mubr.bf16.mxu0 0
      %1279 = vmatmul.mubr.bf16.gmra.mrb[0].mxu0 %v1216
      %v1280 = vpop.f32.mrb[0].mxu0
      %v1281 = vadd.f32 0.0, %v1280
      %v1282 = vpop.f32.mrb[0].mxu0
      %v1283 = vpop.f32.mrb[0].mxu0
      %v1284 = vadd.f32 0.0, %v1283
      %v1285 = vpop.f32.mrb[0].mxu0
      %1286 = vmatprep.mubr.bf16.mxu0 0
      %1287 = vmatmul.mubr.bf16.gmra.mrb[0].mxu0 %v1219
      %v1288 = vpop.f32.mrb[0].mxu0
      %v1289 = vadd.f32 0.0, %v1288
      %v1290 = vpop.f32.mrb[0].mxu0
      %v1291 = vpop.f32.mrb[0].mxu0
      %v1292 = vadd.f32 0.0, %v1291
      %v1293 = vpop.f32.mrb[0].mxu0
      %1294 = vmatprep.mubr.bf16.mxu0 0
      %1295 = vmatmul.mubr.bf16.gmra.mrb[0].mxu0 %v1222
      %v1296 = vpop.f32.mrb[0].mxu0
      %v1297 = vadd.f32 0.0, %v1296
      %v1298 = vpop.f32.mrb[0].mxu0
      %v1299 = vpop.f32.mrb[0].mxu0
      %v1300 = vadd.f32 0.0, %v1299
      %v1301 = vpop.f32.mrb[0].mxu0
      %1302 = vmatprep.mubr.bf16.mxu0 0
      %1303 = vmatmul.mubr.bf16.gmra.mrb[0].mxu0 %v1225
      %v1304 = vpop.f32.mrb[0].mxu0
      %v1305 = vadd.f32 0.0, %v1304
      %v1306 = vpop.f32.mrb[0].mxu0
      %v1307 = vpop.f32.mrb[0].mxu0
      %v1308 = vadd.f32 0.0, %v1307
      %v1309 = vpop.f32.mrb[0].mxu0
      %1310 = vmatprep.mubr.bf16.mxu0 0
      %1311 = vmatmul.mubr.bf16.gmra.mrb[0].mxu0 %v1228
      %v1312 = vpop.f32.mrb[0].mxu0
      %v1313 = vadd.f32 0.0, %v1312
      %v1314 = vpop.f32.mrb[0].mxu0
      %v1315 = vpop.f32.mrb[0].mxu0
      %v1316 = vadd.f32 0.0, %v1315
      %v1317 = vpop.f32.mrb[0].mxu0
      %1318 = vdwg.mxu0
      %v1319 = vadd.f32 %v1156, %v1265
      %v1320 = vadd.f32 %v1157, %v1268
      %v1321 = vadd.f32 %v1158, %v1273
      %v1322 = vadd.f32 %v1159, %v1276
      %v1323 = vadd.f32 %v1160, %v1281
      %v1324 = vadd.f32 %v1161, %v1284
      %v1325 = vadd.f32 %v1162, %v1289
      %v1326 = vadd.f32 %v1163, %v1292
      %v1327 = vadd.f32 %v1164, %v1297
      %v1328 = vadd.f32 %v1165, %v1300
      %v1329 = vadd.f32 %v1166, %v1305
      %v1330 = vadd.f32 %v1167, %v1308
      %v1331 = vadd.f32 %v1168, %v1313
      %v1332 = vadd.f32 %v1169, %v1316
      %s1333 = sadd.s32 %s673, 29
      %s1334 = scalar_lea.vmem [#allocation3], %s1333
      %v1335 = vld [vmem:[%s1334] sm:$0xff]
      %v1336 = vld [vmem:[%s1334 + $0x8] sm:$0xff]
      %v1337 = vld [vmem:[%s1334 + $0x10] sm:$0xff]
      %v1338 = vld [vmem:[%s1334 + $0x18] sm:$0xff]
      %v1339 = vld [vmem:[%s1334 + $0x20] sm:$0xff]
      %v1340 = vld [vmem:[%s1334 + $0x28] sm:$0xff]
      %v1341 = vld [vmem:[%s1334 + $0x30] sm:$0xff]
      %v1342 = vld [vmem:[%s1334 + $0x38] sm:$0xff]
      %v1343 = vld [vmem:[%s1334 + $0x40] sm:$0xff]
      %v1344 = vld [vmem:[%s1334 + $0x48] sm:$0xff]
      %v1345 = vld [vmem:[%s1334 + $0x50] sm:$0xff]
      %v1346 = vld [vmem:[%s1334 + $0x58] sm:$0xff]
      %v1347 = vld [vmem:[%s1334 + $0x60] sm:$0xff]
      %v1348 = vld [vmem:[%s1334 + $0x68] sm:$0xff]
      %v1349 = vpack.c.bf16 %v1336, %v1335
      %v1350 = vpack.c.bf16 %v1338, %v1337
      %v1351 = vpack.c.bf16 %v1340, %v1339
      %v1352 = vpack.c.bf16 %v1342, %v1341
      %v1353 = vpack.c.bf16 %v1344, %v1343
      %v1354 = vpack.c.bf16 %v1346, %v1345
      %v1355 = vpack.c.bf16 %v1348, %v1347
      %v1356 = vld [vmem:[%s3 + $0x40] sm:$0xf]
      %v1357 = vld [vmem:[%s3 + $0x44] sm:$0xf]
      %v1358 = vld [vmem:[%s3 + $0x48] sm:$0xf]
      %v1359 = vld [vmem:[%s3 + $0x4c] sm:$0xf]
      %v1364 = vunpack.c.l.b16 %v1356
      %v1365 = vunpack.c.l.b16 %v1357
      %v1366 = vunpack.c.l.b16 %v1358
      %v1367 = vunpack.c.l.b16 %v1359
      %v1368 = vpack.c.b16 %v1365, %v1364
      %v1369 = vpack.c.b16 %v1367, %v1366
      %v1373 = vsel %vm166, %v1349, 0
      %v1376 = vsel %vm166, %v1350, 0
      %v1379 = vsel %vm166, %v1351, 0
      %v1382 = vsel %vm166, %v1352, 0
      %v1385 = vsel %vm166, %v1353, 0
      %v1388 = vsel %vm166, %v1354, 0
      %v1391 = vsel %vm166, %v1355, 0
      %1393 = vmatprep.subr.bf16.mxu0 0
      %1394 = vmatpush1.bf16.msra.mxu0 %v1368
      %1395 = vmatprep.subr.bf16.mxu0 0
      %1396 = vmatpush1.bf16.msra.mxu0 %v1369
      %1397 = vmatprep.subr.bf16.mxu0 0
      %1398 = vmatpush1.bf16.msra.mxu0 0
      %1399 = vmatprep.subr.bf16.mxu0 0
      %1400 = vmatpush1.bf16.msra.mxu0 0
      %1401 = vmatprep.subr.bf16.mxu0 0
      %1402 = vmatpush1.bf16.msra.mxu0 0
      %1403 = vmatprep.subr.bf16.mxu0 0
      %1404 = vmatpush1.bf16.msra.mxu0 0
      %1405 = vmatprep.subr.bf16.mxu0 0
      %1406 = vmatpush1.bf16.msra.mxu0 0
      %1407 = vmatprep.subr.bf16.mxu0 0
      %1408 = vmatpush1.bf16.msra.mxu0 0
      %1409 = vmatprep.subr.bf16.mxu0 0
      %1410 = vmatpush1.bf16.msra.mxu0 0
      %1411 = vmatprep.subr.bf16.mxu0 0
      %1412 = vmatpush1.bf16.msra.mxu0 0
      %1413 = vmatprep.subr.bf16.mxu0 0
      %1414 = vmatpush1.bf16.msra.mxu0 0
      %1415 = vmatprep.subr.bf16.mxu0 0
      %1416 = vmatpush1.bf16.msra.mxu0 0
      %1417 = vmatprep.subr.bf16.mxu0 0
      %1418 = vmatpush1.bf16.msra.mxu0 0
      %1419 = vmatprep.subr.bf16.mxu0 0
      %1420 = vmatpush1.bf16.msra.mxu0 0
      %1421 = vmatprep.subr.bf16.mxu0 0
      %1422 = vmatpush1.bf16.msra.mxu0 0
      %1423 = vmatprep.subr.bf16.mxu0 0
      %1424 = vmatpush1.bf16.msra.mxu0 0
      %1425 = vmatprep.mubr.bf16.mxu0 0
      %1426 = vmatmul.mubr.bf16.gmra.mrb[0].mxu0 %v1373
      %v1427 = vpop.f32.mrb[0].mxu0
      %v1428 = vadd.f32 0.0, %v1427
      %v1429 = vpop.f32.mrb[0].mxu0
      %v1430 = vpop.f32.mrb[0].mxu0
      %v1431 = vadd.f32 0.0, %v1430
      %v1432 = vpop.f32.mrb[0].mxu0
      %1433 = vmatprep.mubr.bf16.mxu0 0
      %1434 = vmatmul.mubr.bf16.gmra.mrb[0].mxu0 %v1376
      %v1435 = vpop.f32.mrb[0].mxu0
      %v1436 = vadd.f32 0.0, %v1435
      %v1437 = vpop.f32.mrb[0].mxu0
      %v1438 = vpop.f32.mrb[0].mxu0
      %v1439 = vadd.f32 0.0, %v1438
      %v1440 = vpop.f32.mrb[0].mxu0
      %1441 = vmatprep.mubr.bf16.mxu0 0
      %1442 = vmatmul.mubr.bf16.gmra.mrb[0].mxu0 %v1379
      %v1443 = vpop.f32.mrb[0].mxu0
      %v1444 = vadd.f32 0.0, %v1443
      %v1445 = vpop.f32.mrb[0].mxu0
      %v1446 = vpop.f32.mrb[0].mxu0
      %v1447 = vadd.f32 0.0, %v1446
      %v1448 = vpop.f32.mrb[0].mxu0
      %1449 = vmatprep.mubr.bf16.mxu0 0
      %1450 = vmatmul.mubr.bf16.gmra.mrb[0].mxu0 %v1382
      %v1451 = vpop.f32.mrb[0].mxu0
      %v1452 = vadd.f32 0.0, %v1451
      %v1453 = vpop.f32.mrb[0].mxu0
      %v1454 = vpop.f32.mrb[0].mxu0
      %v1455 = vadd.f32 0.0, %v1454
      %v1456 = vpop.f32.mrb[0].mxu0
      %1457 = vmatprep.mubr.bf16.mxu0 0
      %1458 = vmatmul.mubr.bf16.gmra.mrb[0].mxu0 %v1385
      %v1459 = vpop.f32.mrb[0].mxu0
      %v1460 = vadd.f32 0.0, %v1459
      %v1461 = vpop.f32.mrb[0].mxu0
      %v1462 = vpop.f32.mrb[0].mxu0
      %v1463 = vadd.f32 0.0, %v1462
      %v1464 = vpop.f32.mrb[0].mxu0
      %1465 = vmatprep.mubr.bf16.mxu0 0
      %1466 = vmatmul.mubr.bf16.gmra.mrb[0].mxu0 %v1388
      %v1467 = vpop.f32.mrb[0].mxu0
      %v1468 = vadd.f32 0.0, %v1467
      %v1469 = vpop.f32.mrb[0].mxu0
      %v1470 = vpop.f32.mrb[0].mxu0
      %v1471 = vadd.f32 0.0, %v1470
      %v1472 = vpop.f32.mrb[0].mxu0
      %1473 = vmatprep.mubr.bf16.mxu0 0
      %1474 = vmatmul.mubr.bf16.gmra.mrb[0].mxu0 %v1391
      %v1475 = vpop.f32.mrb[0].mxu0
      %v1476 = vadd.f32 0.0, %v1475
      %v1477 = vpop.f32.mrb[0].mxu0
      %v1478 = vpop.f32.mrb[0].mxu0
      %v1479 = vadd.f32 0.0, %v1478
      %v1480 = vpop.f32.mrb[0].mxu0
      %1481 = vdwg.mxu0
      %v1482 = vadd.f32 %v1319, %v1428
      %v1483 = vadd.f32 %v1320, %v1431
      %v1484 = vadd.f32 %v1321, %v1436
      %v1485 = vadd.f32 %v1322, %v1439
      %v1486 = vadd.f32 %v1323, %v1444
      %v1487 = vadd.f32 %v1324, %v1447
      %v1488 = vadd.f32 %v1325, %v1452
      %v1489 = vadd.f32 %v1326, %v1455
      %v1490 = vadd.f32 %v1327, %v1460
      %v1491 = vadd.f32 %v1328, %v1463
      %v1492 = vadd.f32 %v1329, %v1468
      %v1493 = vadd.f32 %v1330, %v1471
      %v1494 = vadd.f32 %v1331, %v1476
      %v1495 = vadd.f32 %v1332, %v1479
      %s1496 = sadd.s32 %s673, 30
      %s1497 = scalar_lea.vmem [#allocation3], %s1496
      %v1498 = vld [vmem:[%s1497] sm:$0xff]
      %v1499 = vld [vmem:[%s1497 + $0x8] sm:$0xff]
      %v1500 = vld [vmem:[%s1497 + $0x10] sm:$0xff]
      %v1501 = vld [vmem:[%s1497 + $0x18] sm:$0xff]
      %v1502 = vld [vmem:[%s1497 + $0x20] sm:$0xff]
      %v1503 = vld [vmem:[%s1497 + $0x28] sm:$0xff]
      %v1504 = vld [vmem:[%s1497 + $0x30] sm:$0xff]
      %v1505 = vld [vmem:[%s1497 + $0x38] sm:$0xff]
      %v1506 = vld [vmem:[%s1497 + $0x40] sm:$0xff]
      %v1507 = vld [vmem:[%s1497 + $0x48] sm:$0xff]
      %v1508 = vld [vmem:[%s1497 + $0x50] sm:$0xff]
      %v1509 = vld [vmem:[%s1497 + $0x58] sm:$0xff]
      %v1510 = vld [vmem:[%s1497 + $0x60] sm:$0xff]
      %v1511 = vld [vmem:[%s1497 + $0x68] sm:$0xff]
      %v1512 = vpack.c.bf16 %v1499, %v1498
      %v1513 = vpack.c.bf16 %v1501, %v1500
      %v1514 = vpack.c.bf16 %v1503, %v1502
      %v1515 = vpack.c.bf16 %v1505, %v1504
      %v1516 = vpack.c.bf16 %v1507, %v1506
      %v1517 = vpack.c.bf16 %v1509, %v1508
      %v1518 = vpack.c.bf16 %v1511, %v1510
      %v1519 = vld [vmem:[%s3 + $0x50] sm:$0xf]
      %v1520 = vld [vmem:[%s3 + $0x54] sm:$0xf]
      %v1521 = vld [vmem:[%s3 + $0x58] sm:$0xf]
      %v1522 = vld [vmem:[%s3 + $0x5c] sm:$0xf]
      %v1527 = vunpack.c.l.b16 %v1519
      %v1528 = vunpack.c.l.b16 %v1520
      %v1529 = vunpack.c.l.b16 %v1521
      %v1530 = vunpack.c.l.b16 %v1522
      %v1531 = vpack.c.b16 %v1528, %v1527
      %v1532 = vpack.c.b16 %v1530, %v1529
      %v1536 = vsel %vm166, %v1512, 0
      %v1539 = vsel %vm166, %v1513, 0
      %v1542 = vsel %vm166, %v1514, 0
      %v1545 = vsel %vm166, %v1515, 0
      %v1548 = vsel %vm166, %v1516, 0
      %v1551 = vsel %vm166, %v1517, 0
      %v1554 = vsel %vm166, %v1518, 0
      %1556 = vmatprep.subr.bf16.mxu0 0
      %1557 = vmatpush1.bf16.msra.mxu0 %v1531
      %1558 = vmatprep.subr.bf16.mxu0 0
      %1559 = vmatpush1.bf16.msra.mxu0 %v1532
      %1560 = vmatprep.subr.bf16.mxu0 0
      %1561 = vmatpush1.bf16.msra.mxu0 0
      %1562 = vmatprep.subr.bf16.mxu0 0
      %1563 = vmatpush1.bf16.msra.mxu0 0
      %1564 = vmatprep.subr.bf16.mxu0 0
      %1565 = vmatpush1.bf16.msra.mxu0 0
      %1566 = vmatprep.subr.bf16.mxu0 0
      %1567 = vmatpush1.bf16.msra.mxu0 0
      %1568 = vmatprep.subr.bf16.mxu0 0
      %1569 = vmatpush1.bf16.msra.mxu0 0
      %1570 = vmatprep.subr.bf16.mxu0 0
      %1571 = vmatpush1.bf16.msra.mxu0 0
      %1572 = vmatprep.subr.bf16.mxu0 0
      %1573 = vmatpush1.bf16.msra.mxu0 0
      %1574 = vmatprep.subr.bf16.mxu0 0
      %1575 = vmatpush1.bf16.msra.mxu0 0
      %1576 = vmatprep.subr.bf16.mxu0 0
      %1577 = vmatpush1.bf16.msra.mxu0 0
      %1578 = vmatprep.subr.bf16.mxu0 0
      %1579 = vmatpush1.bf16.msra.mxu0 0
      %1580 = vmatprep.subr.bf16.mxu0 0
      %1581 = vmatpush1.bf16.msra.mxu0 0
      %1582 = vmatprep.subr.bf16.mxu0 0
      %1583 = vmatpush1.bf16.msra.mxu0 0
      %1584 = vmatprep.subr.bf16.mxu0 0
      %1585 = vmatpush1.bf16.msra.mxu0 0
      %1586 = vmatprep.subr.bf16.mxu0 0
      %1587 = vmatpush1.bf16.msra.mxu0 0
      %1588 = vmatprep.mubr.bf16.mxu0 0
      %1589 = vmatmul.mubr.bf16.gmra.mrb[0].mxu0 %v1536
      %v1590 = vpop.f32.mrb[0].mxu0
      %v1591 = vadd.f32 0.0, %v1590
      %v1592 = vpop.f32.mrb[0].mxu0
      %v1593 = vpop.f32.mrb[0].mxu0
      %v1594 = vadd.f32 0.0, %v1593
      %v1595 = vpop.f32.mrb[0].mxu0
      %1596 = vmatprep.mubr.bf16.mxu0 0
      %1597 = vmatmul.mubr.bf16.gmra.mrb[0].mxu0 %v1539
      %v1598 = vpop.f32.mrb[0].mxu0
      %v1599 = vadd.f32 0.0, %v1598
      %v1600 = vpop.f32.mrb[0].mxu0
      %v1601 = vpop.f32.mrb[0].mxu0
      %v1602 = vadd.f32 0.0, %v1601
      %v1603 = vpop.f32.mrb[0].mxu0
      %1604 = vmatprep.mubr.bf16.mxu0 0
      %1605 = vmatmul.mubr.bf16.gmra.mrb[0].mxu0 %v1542
      %v1606 = vpop.f32.mrb[0].mxu0
      %v1607 = vadd.f32 0.0, %v1606
      %v1608 = vpop.f32.mrb[0].mxu0
      %v1609 = vpop.f32.mrb[0].mxu0
      %v1610 = vadd.f32 0.0, %v1609
      %v1611 = vpop.f32.mrb[0].mxu0
      %1612 = vmatprep.mubr.bf16.mxu0 0
      %1613 = vmatmul.mubr.bf16.gmra.mrb[0].mxu0 %v1545
      %v1614 = vpop.f32.mrb[0].mxu0
      %v1615 = vadd.f32 0.0, %v1614
      %v1616 = vpop.f32.mrb[0].mxu0
      %v1617 = vpop.f32.mrb[0].mxu0
      %v1618 = vadd.f32 0.0, %v1617
      %v1619 = vpop.f32.mrb[0].mxu0
      %1620 = vmatprep.mubr.bf16.mxu0 0
      %1621 = vmatmul.mubr.bf16.gmra.mrb[0].mxu0 %v1548
      %v1622 = vpop.f32.mrb[0].mxu0
      %v1623 = vadd.f32 0.0, %v1622
      %v1624 = vpop.f32.mrb[0].mxu0
      %v1625 = vpop.f32.mrb[0].mxu0
      %v1626 = vadd.f32 0.0, %v1625
      %v1627 = vpop.f32.mrb[0].mxu0
      %1628 = vmatprep.mubr.bf16.mxu0 0
      %1629 = vmatmul.mubr.bf16.gmra.mrb[0].mxu0 %v1551
      %v1630 = vpop.f32.mrb[0].mxu0
      %v1631 = vadd.f32 0.0, %v1630
      %v1632 = vpop.f32.mrb[0].mxu0
      %v1633 = vpop.f32.mrb[0].mxu0
      %v1634 = vadd.f32 0.0, %v1633
      %v1635 = vpop.f32.mrb[0].mxu0
      %1636 = vmatprep.mubr.bf16.mxu0 0
      %1637 = vmatmul.mubr.bf16.gmra.mrb[0].mxu0 %v1554
      %v1638 = vpop.f32.mrb[0].mxu0
      %v1639 = vadd.f32 0.0, %v1638
      %v1640 = vpop.f32.mrb[0].mxu0
      %v1641 = vpop.f32.mrb[0].mxu0
      %v1642 = vadd.f32 0.0, %v1641
      %v1643 = vpop.f32.mrb[0].mxu0
      %1644 = vdwg.mxu0
      %v1645 = vadd.f32 %v1482, %v1591
      %v1646 = vadd.f32 %v1483, %v1594
      %v1647 = vadd.f32 %v1484, %v1599
      %v1648 = vadd.f32 %v1485, %v1602
      %v1649 = vadd.f32 %v1486, %v1607
      %v1650 = vadd.f32 %v1487, %v1610
      %v1651 = vadd.f32 %v1488, %v1615
      %v1652 = vadd.f32 %v1489, %v1618
      %v1653 = vadd.f32 %v1490, %v1623
      %v1654 = vadd.f32 %v1491, %v1626
      %v1655 = vadd.f32 %v1492, %v1631
      %v1656 = vadd.f32 %v1493, %v1634
      %v1657 = vadd.f32 %v1494, %v1639
      %v1658 = vadd.f32 %v1495, %v1642
      %s1659 = sadd.s32 %s673, 56
      %s1660 = scalar_lea.vmem [#allocation3], %s1659
      %v1661 = vld [vmem:[%s1660] sm:$0xff]
      %v1662 = vld [vmem:[%s1660 + $0x8] sm:$0xff]
      %v1663 = vld [vmem:[%s1660 + $0x10] sm:$0xff]
      %v1664 = vld [vmem:[%s1660 + $0x18] sm:$0xff]
      %v1665 = vld [vmem:[%s1660 + $0x20] sm:$0xff]
      %v1666 = vld [vmem:[%s1660 + $0x28] sm:$0xff]
      %v1667 = vld [vmem:[%s1660 + $0x30] sm:$0xff]
      %v1668 = vld [vmem:[%s1660 + $0x38] sm:$0xff]
      %v1669 = vld [vmem:[%s1660 + $0x40] sm:$0xff]
      %v1670 = vld [vmem:[%s1660 + $0x48] sm:$0xff]
      %v1671 = vld [vmem:[%s1660 + $0x50] sm:$0xff]
      %v1672 = vld [vmem:[%s1660 + $0x58] sm:$0xff]
      %v1673 = vld [vmem:[%s1660 + $0x60] sm:$0xff]
      %v1674 = vld [vmem:[%s1660 + $0x68] sm:$0xff]
      %v1675 = vpack.c.bf16 %v1662, %v1661
      %v1676 = vpack.c.bf16 %v1664, %v1663
      %v1677 = vpack.c.bf16 %v1666, %v1665
      %v1678 = vpack.c.bf16 %v1668, %v1667
      %v1679 = vpack.c.bf16 %v1670, %v1669
      %v1680 = vpack.c.bf16 %v1672, %v1671
      %v1681 = vpack.c.bf16 %v1674, %v1673
      %v1682 = vld [vmem:[%s3 + $0x60] sm:$0xf]
      %v1683 = vld [vmem:[%s3 + $0x64] sm:$0xf]
      %v1684 = vld [vmem:[%s3 + $0x68] sm:$0xf]
      %v1685 = vld [vmem:[%s3 + $0x6c] sm:$0xf]
      %v1690 = vunpack.c.l.b16 %v1682
      %v1691 = vunpack.c.l.b16 %v1683
      %v1692 = vunpack.c.l.b16 %v1684
      %v1693 = vunpack.c.l.b16 %v1685
      %v1694 = vpack.c.b16 %v1691, %v1690
      %v1695 = vpack.c.b16 %v1693, %v1692
      %v1699 = vsel %vm166, %v1675, 0
      %v1702 = vsel %vm166, %v1676, 0
      %v1705 = vsel %vm166, %v1677, 0
      %v1708 = vsel %vm166, %v1678, 0
      %v1711 = vsel %vm166, %v1679, 0
      %v1714 = vsel %vm166, %v1680, 0
      %v1717 = vsel %vm166, %v1681, 0
      %1719 = vmatprep.subr.bf16.mxu0 0
      %1720 = vmatpush1.bf16.msra.mxu0 %v1694
      %1721 = vmatprep.subr.bf16.mxu0 0
      %1722 = vmatpush1.bf16.msra.mxu0 %v1695
      %1723 = vmatprep.subr.bf16.mxu0 0
      %1724 = vmatpush1.bf16.msra.mxu0 0
      %1725 = vmatprep.subr.bf16.mxu0 0
      %1726 = vmatpush1.bf16.msra.mxu0 0
      %1727 = vmatprep.subr.bf16.mxu0 0
      %1728 = vmatpush1.bf16.msra.mxu0 0
      %1729 = vmatprep.subr.bf16.mxu0 0
      %1730 = vmatpush1.bf16.msra.mxu0 0
      %1731 = vmatprep.subr.bf16.mxu0 0
      %1732 = vmatpush1.bf16.msra.mxu0 0
      %1733 = vmatprep.subr.bf16.mxu0 0
      %1734 = vmatpush1.bf16.msra.mxu0 0
      %1735 = vmatprep.subr.bf16.mxu0 0
      %1736 = vmatpush1.bf16.msra.mxu0 0
      %1737 = vmatprep.subr.bf16.mxu0 0
      %1738 = vmatpush1.bf16.msra.mxu0 0
      %1739 = vmatprep.subr.bf16.mxu0 0
      %1740 = vmatpush1.bf16.msra.mxu0 0
      %1741 = vmatprep.subr.bf16.mxu0 0
      %1742 = vmatpush1.bf16.msra.mxu0 0
      %1743 = vmatprep.subr.bf16.mxu0 0
      %1744 = vmatpush1.bf16.msra.mxu0 0
      %1745 = vmatprep.subr.bf16.mxu0 0
      %1746 = vmatpush1.bf16.msra.mxu0 0
      %1747 = vmatprep.subr.bf16.mxu0 0
      %1748 = vmatpush1.bf16.msra.mxu0 0
      %1749 = vmatprep.subr.bf16.mxu0 0
      %1750 = vmatpush1.bf16.msra.mxu0 0
      %1751 = vmatprep.mubr.bf16.mxu0 0
      %1752 = vmatmul.mubr.bf16.gmra.mrb[0].mxu0 %v1699
      %v1753 = vpop.f32.mrb[0].mxu0
      %v1754 = vadd.f32 0.0, %v1753
      %v1755 = vpop.f32.mrb[0].mxu0
      %v1756 = vpop.f32.mrb[0].mxu0
      %v1757 = vadd.f32 0.0, %v1756
      %v1758 = vpop.f32.mrb[0].mxu0
      %1759 = vmatprep.mubr.bf16.mxu0 0
      %1760 = vmatmul.mubr.bf16.gmra.mrb[0].mxu0 %v1702
      %v1761 = vpop.f32.mrb[0].mxu0
      %v1762 = vadd.f32 0.0, %v1761
      %v1763 = vpop.f32.mrb[0].mxu0
      %v1764 = vpop.f32.mrb[0].mxu0
      %v1765 = vadd.f32 0.0, %v1764
      %v1766 = vpop.f32.mrb[0].mxu0
      %1767 = vmatprep.mubr.bf16.mxu0 0
      %1768 = vmatmul.mubr.bf16.gmra.mrb[0].mxu0 %v1705
      %v1769 = vpop.f32.mrb[0].mxu0
      %v1770 = vadd.f32 0.0, %v1769
      %v1771 = vpop.f32.mrb[0].mxu0
      %v1772 = vpop.f32.mrb[0].mxu0
      %v1773 = vadd.f32 0.0, %v1772
      %v1774 = vpop.f32.mrb[0].mxu0
      %1775 = vmatprep.mubr.bf16.mxu0 0
      %1776 = vmatmul.mubr.bf16.gmra.mrb[0].mxu0 %v1708
      %v1777 = vpop.f32.mrb[0].mxu0
      %v1778 = vadd.f32 0.0, %v1777
      %v1779 = vpop.f32.mrb[0].mxu0
      %v1780 = vpop.f32.mrb[0].mxu0
      %v1781 = vadd.f32 0.0, %v1780
      %v1782 = vpop.f32.mrb[0].mxu0
      %1783 = vmatprep.mubr.bf16.mxu0 0
      %1784 = vmatmul.mubr.bf16.gmra.mrb[0].mxu0 %v1711
      %v1785 = vpop.f32.mrb[0].mxu0
      %v1786 = vadd.f32 0.0, %v1785
      %v1787 = vpop.f32.mrb[0].mxu0
      %v1788 = vpop.f32.mrb[0].mxu0
      %v1789 = vadd.f32 0.0, %v1788
      %v1790 = vpop.f32.mrb[0].mxu0
      %1791 = vmatprep.mubr.bf16.mxu0 0
      %1792 = vmatmul.mubr.bf16.gmra.mrb[0].mxu0 %v1714
      %v1793 = vpop.f32.mrb[0].mxu0
      %v1794 = vadd.f32 0.0, %v1793
      %v1795 = vpop.f32.mrb[0].mxu0
      %v1796 = vpop.f32.mrb[0].mxu0
      %v1797 = vadd.f32 0.0, %v1796
      %v1798 = vpop.f32.mrb[0].mxu0
      %1799 = vmatprep.mubr.bf16.mxu0 0
      %1800 = vmatmul.mubr.bf16.gmra.mrb[0].mxu0 %v1717
      %v1801 = vpop.f32.mrb[0].mxu0
      %v1802 = vadd.f32 0.0, %v1801
      %v1803 = vpop.f32.mrb[0].mxu0
      %v1804 = vpop.f32.mrb[0].mxu0
      %v1805 = vadd.f32 0.0, %v1804
      %v1806 = vpop.f32.mrb[0].mxu0
      %1807 = vdwg.mxu0
      %v1808 = vadd.f32 %v1645, %v1754
      %v1809 = vadd.f32 %v1646, %v1757
      %v1810 = vadd.f32 %v1647, %v1762
      %v1811 = vadd.f32 %v1648, %v1765
      %v1812 = vadd.f32 %v1649, %v1770
      %v1813 = vadd.f32 %v1650, %v1773
      %v1814 = vadd.f32 %v1651, %v1778
      %v1815 = vadd.f32 %v1652, %v1781
      %v1816 = vadd.f32 %v1653, %v1786
      %v1817 = vadd.f32 %v1654, %v1789
      %v1818 = vadd.f32 %v1655, %v1794
      %v1819 = vadd.f32 %v1656, %v1797
      %v1820 = vadd.f32 %v1657, %v1802
      %v1821 = vadd.f32 %v1658, %v1805
      %s1822 = sadd.s32 %s673, 57
      %s1823 = scalar_lea.vmem [#allocation3], %s1822
      %v1824 = vld [vmem:[%s1823] sm:$0xff]
      %v1825 = vld [vmem:[%s1823 + $0x8] sm:$0xff]
      %v1826 = vld [vmem:[%s1823 + $0x10] sm:$0xff]
      %v1827 = vld [vmem:[%s1823 + $0x18] sm:$0xff]
      %v1828 = vld [vmem:[%s1823 + $0x20] sm:$0xff]
      %v1829 = vld [vmem:[%s1823 + $0x28] sm:$0xff]
      %v1830 = vld [vmem:[%s1823 + $0x30] sm:$0xff]
      %v1831 = vld [vmem:[%s1823 + $0x38] sm:$0xff]
      %v1832 = vld [vmem:[%s1823 + $0x40] sm:$0xff]
      %v1833 = vld [vmem:[%s1823 + $0x48] sm:$0xff]
      %v1834 = vld [vmem:[%s1823 + $0x50] sm:$0xff]
      %v1835 = vld [vmem:[%s1823 + $0x58] sm:$0xff]
      %v1836 = vld [vmem:[%s1823 + $0x60] sm:$0xff]
      %v1837 = vld [vmem:[%s1823 + $0x68] sm:$0xff]
      %v1838 = vpack.c.bf16 %v1825, %v1824
      %v1839 = vpack.c.bf16 %v1827, %v1826
      %v1840 = vpack.c.bf16 %v1829, %v1828
      %v1841 = vpack.c.bf16 %v1831, %v1830
      %v1842 = vpack.c.bf16 %v1833, %v1832
      %v1843 = vpack.c.bf16 %v1835, %v1834
      %v1844 = vpack.c.bf16 %v1837, %v1836
      %v1845 = vld [vmem:[%s3 + $0x70] sm:$0xf]
      %v1846 = vld [vmem:[%s3 + $0x74] sm:$0xf]
      %v1847 = vld [vmem:[%s3 + $0x78] sm:$0xf]
      %v1848 = vld [vmem:[%s3 + $0x7c] sm:$0xf]
      %v1853 = vunpack.c.l.b16 %v1845
      %v1854 = vunpack.c.l.b16 %v1846
      %v1855 = vunpack.c.l.b16 %v1847
      %v1856 = vunpack.c.l.b16 %v1848
      %v1857 = vpack.c.b16 %v1854, %v1853
      %v1858 = vpack.c.b16 %v1856, %v1855
      %v1862 = vsel %vm166, %v1838, 0
      %v1865 = vsel %vm166, %v1839, 0
      %v1868 = vsel %vm166, %v1840, 0
      %v1871 = vsel %vm166, %v1841, 0
      %v1874 = vsel %vm166, %v1842, 0
      %v1877 = vsel %vm166, %v1843, 0
      %v1880 = vsel %vm166, %v1844, 0
      %1882 = vmatprep.subr.bf16.mxu0 0
      %1883 = vmatpush1.bf16.msra.mxu0 %v1857
      %1884 = vmatprep.subr.bf16.mxu0 0
      %1885 = vmatpush1.bf16.msra.mxu0 %v1858
      %1886 = vmatprep.subr.bf16.mxu0 0
      %1887 = vmatpush1.bf16.msra.mxu0 0
      %1888 = vmatprep.subr.bf16.mxu0 0
      %1889 = vmatpush1.bf16.msra.mxu0 0
      %1890 = vmatprep.subr.bf16.mxu0 0
      %1891 = vmatpush1.bf16.msra.mxu0 0
      %1892 = vmatprep.subr.bf16.mxu0 0
      %1893 = vmatpush1.bf16.msra.mxu0 0
      %1894 = vmatprep.subr.bf16.mxu0 0
      %1895 = vmatpush1.bf16.msra.mxu0 0
      %1896 = vmatprep.subr.bf16.mxu0 0
      %1897 = vmatpush1.bf16.msra.mxu0 0
      %1898 = vmatprep.subr.bf16.mxu0 0
      %1899 = vmatpush1.bf16.msra.mxu0 0
      %1900 = vmatprep.subr.bf16.mxu0 0
      %1901 = vmatpush1.bf16.msra.mxu0 0
      %1902 = vmatprep.subr.bf16.mxu0 0
      %1903 = vmatpush1.bf16.msra.mxu0 0
      %1904 = vmatprep.subr.bf16.mxu0 0
      %1905 = vmatpush1.bf16.msra.mxu0 0
      %1906 = vmatprep.subr.bf16.mxu0 0
      %1907 = vmatpush1.bf16.msra.mxu0 0
      %1908 = vmatprep.subr.bf16.mxu0 0
      %1909 = vmatpush1.bf16.msra.mxu0 0
      %1910 = vmatprep.subr.bf16.mxu0 0
      %1911 = vmatpush1.bf16.msra.mxu0 0
      %1912 = vmatprep.subr.bf16.mxu0 0
      %1913 = vmatpush1.bf16.msra.mxu0 0
      %1914 = vmatprep.mubr.bf16.mxu0 0
      %1915 = vmatmul.mubr.bf16.gmra.mrb[0].mxu0 %v1862
      %v1916 = vpop.f32.mrb[0].mxu0
      %v1917 = vadd.f32 0.0, %v1916
      %v1918 = vpop.f32.mrb[0].mxu0
      %v1919 = vpop.f32.mrb[0].mxu0
      %v1920 = vadd.f32 0.0, %v1919
      %v1921 = vpop.f32.mrb[0].mxu0
      %1922 = vmatprep.mubr.bf16.mxu0 0
      %1923 = vmatmul.mubr.bf16.gmra.mrb[0].mxu0 %v1865
      %v1924 = vpop.f32.mrb[0].mxu0
      %v1925 = vadd.f32 0.0, %v1924
      %v1926 = vpop.f32.mrb[0].mxu0
      %v1927 = vpop.f32.mrb[0].mxu0
      %v1928 = vadd.f32 0.0, %v1927
      %v1929 = vpop.f32.mrb[0].mxu0
      %1930 = vmatprep.mubr.bf16.mxu0 0
      %1931 = vmatmul.mubr.bf16.gmra.mrb[0].mxu0 %v1868
      %v1932 = vpop.f32.mrb[0].mxu0
      %v1933 = vadd.f32 0.0, %v1932
      %v1934 = vpop.f32.mrb[0].mxu0
      %v1935 = vpop.f32.mrb[0].mxu0
      %v1936 = vadd.f32 0.0, %v1935
      %v1937 = vpop.f32.mrb[0].mxu0
      %1938 = vmatprep.mubr.bf16.mxu0 0
      %1939 = vmatmul.mubr.bf16.gmra.mrb[0].mxu0 %v1871
      %v1940 = vpop.f32.mrb[0].mxu0
      %v1941 = vadd.f32 0.0, %v1940
      %v1942 = vpop.f32.mrb[0].mxu0
      %v1943 = vpop.f32.mrb[0].mxu0
      %v1944 = vadd.f32 0.0, %v1943
      %v1945 = vpop.f32.mrb[0].mxu0
      %1946 = vmatprep.mubr.bf16.mxu0 0
      %1947 = vmatmul.mubr.bf16.gmra.mrb[0].mxu0 %v1874
      %v1948 = vpop.f32.mrb[0].mxu0
      %v1949 = vadd.f32 0.0, %v1948
      %v1950 = vpop.f32.mrb[0].mxu0
      %v1951 = vpop.f32.mrb[0].mxu0
      %v1952 = vadd.f32 0.0, %v1951
      %v1953 = vpop.f32.mrb[0].mxu0
      %1954 = vmatprep.mubr.bf16.mxu0 0
      %1955 = vmatmul.mubr.bf16.gmra.mrb[0].mxu0 %v1877
      %v1956 = vpop.f32.mrb[0].mxu0
      %v1957 = vadd.f32 0.0, %v1956
      %v1958 = vpop.f32.mrb[0].mxu0
      %v1959 = vpop.f32.mrb[0].mxu0
      %v1960 = vadd.f32 0.0, %v1959
      %v1961 = vpop.f32.mrb[0].mxu0
      %1962 = vmatprep.mubr.bf16.mxu0 0
      %1963 = vmatmul.mubr.bf16.gmra.mrb[0].mxu0 %v1880
      %v1964 = vpop.f32.mrb[0].mxu0
      %v1965 = vadd.f32 0.0, %v1964
      %v1966 = vpop.f32.mrb[0].mxu0
      %v1967 = vpop.f32.mrb[0].mxu0
      %v1968 = vadd.f32 0.0, %v1967
      %v1969 = vpop.f32.mrb[0].mxu0
      %1970 = vdwg.mxu0
      %v1971 = vadd.f32 %v1808, %v1917
      %v1972 = vadd.f32 %v1809, %v1920
      %v1973 = vadd.f32 %v1810, %v1925
      %v1974 = vadd.f32 %v1811, %v1928
      %v1975 = vadd.f32 %v1812, %v1933
      %v1976 = vadd.f32 %v1813, %v1936
      %v1977 = vadd.f32 %v1814, %v1941
      %v1978 = vadd.f32 %v1815, %v1944
      %v1979 = vadd.f32 %v1816, %v1949
      %v1980 = vadd.f32 %v1817, %v1952
      %v1981 = vadd.f32 %v1818, %v1957
      %v1982 = vadd.f32 %v1819, %v1960
      %v1983 = vadd.f32 %v1820, %v1965
      %v1984 = vadd.f32 %v1821, %v1968
      %s1985 = sadd.s32 %s673, 58
      %s1986 = scalar_lea.vmem [#allocation3], %s1985
      %v1987 = vld [vmem:[%s1986] sm:$0xff]
      %v1988 = vld [vmem:[%s1986 + $0x8] sm:$0xff]
      %v1989 = vld [vmem:[%s1986 + $0x10] sm:$0xff]
      %v1990 = vld [vmem:[%s1986 + $0x18] sm:$0xff]
      %v1991 = vld [vmem:[%s1986 + $0x20] sm:$0xff]
      %v1992 = vld [vmem:[%s1986 + $0x28] sm:$0xff]
      %v1993 = vld [vmem:[%s1986 + $0x30] sm:$0xff]
      %v1994 = vld [vmem:[%s1986 + $0x38] sm:$0xff]
      %v1995 = vld [vmem:[%s1986 + $0x40] sm:$0xff]
      %v1996 = vld [vmem:[%s1986 + $0x48] sm:$0xff]
      %v1997 = vld [vmem:[%s1986 + $0x50] sm:$0xff]
      %v1998 = vld [vmem:[%s1986 + $0x58] sm:$0xff]
      %v1999 = vld [vmem:[%s1986 + $0x60] sm:$0xff]
      %v2000 = vld [vmem:[%s1986 + $0x68] sm:$0xff]
      %v2001 = vpack.c.bf16 %v1988, %v1987
      %v2002 = vpack.c.bf16 %v1990, %v1989
      %v2003 = vpack.c.bf16 %v1992, %v1991
      %v2004 = vpack.c.bf16 %v1994, %v1993
      %v2005 = vpack.c.bf16 %v1996, %v1995
      %v2006 = vpack.c.bf16 %v1998, %v1997
      %v2007 = vpack.c.bf16 %v2000, %v1999
      %v2008 = vld [vmem:[%s3 + $0x80] sm:$0xf]
      %v2009 = vld [vmem:[%s3 + $0x84] sm:$0xf]
      %v2010 = vld [vmem:[%s3 + $0x88] sm:$0xf]
      %v2011 = vld [vmem:[%s3 + $0x8c] sm:$0xf]
      %v2016 = vunpack.c.l.b16 %v2008
      %v2017 = vunpack.c.l.b16 %v2009
      %v2018 = vunpack.c.l.b16 %v2010
      %v2019 = vunpack.c.l.b16 %v2011
      %v2020 = vpack.c.b16 %v2017, %v2016
      %v2021 = vpack.c.b16 %v2019, %v2018
      %v2025 = vsel %vm166, %v2001, 0
      %v2028 = vsel %vm166, %v2002, 0
      %v2031 = vsel %vm166, %v2003, 0
      %v2034 = vsel %vm166, %v2004, 0
      %v2037 = vsel %vm166, %v2005, 0
      %v2040 = vsel %vm166, %v2006, 0
      %v2043 = vsel %vm166, %v2007, 0
      %2045 = vmatprep.subr.bf16.mxu0 0
      %2046 = vmatpush1.bf16.msra.mxu0 %v2020
      %2047 = vmatprep.subr.bf16.mxu0 0
      %2048 = vmatpush1.bf16.msra.mxu0 %v2021
      %2049 = vmatprep.subr.bf16.mxu0 0
      %2050 = vmatpush1.bf16.msra.mxu0 0
      %2051 = vmatprep.subr.bf16.mxu0 0
      %2052 = vmatpush1.bf16.msra.mxu0 0
      %2053 = vmatprep.subr.bf16.mxu0 0
      %2054 = vmatpush1.bf16.msra.mxu0 0
      %2055 = vmatprep.subr.bf16.mxu0 0
      %2056 = vmatpush1.bf16.msra.mxu0 0
      %2057 = vmatprep.subr.bf16.mxu0 0
      %2058 = vmatpush1.bf16.msra.mxu0 0
      %2059 = vmatprep.subr.bf16.mxu0 0
      %2060 = vmatpush1.bf16.msra.mxu0 0
      %2061 = vmatprep.subr.bf16.mxu0 0
      %2062 = vmatpush1.bf16.msra.mxu0 0
      %2063 = vmatprep.subr.bf16.mxu0 0
      %2064 = vmatpush1.bf16.msra.mxu0 0
      %2065 = vmatprep.subr.bf16.mxu0 0
      %2066 = vmatpush1.bf16.msra.mxu0 0
      %2067 = vmatprep.subr.bf16.mxu0 0
      %2068 = vmatpush1.bf16.msra.mxu0 0
      %2069 = vmatprep.subr.bf16.mxu0 0
      %2070 = vmatpush1.bf16.msra.mxu0 0
      %2071 = vmatprep.subr.bf16.mxu0 0
      %2072 = vmatpush1.bf16.msra.mxu0 0
      %2073 = vmatprep.subr.bf16.mxu0 0
      %2074 = vmatpush1.bf16.msra.mxu0 0
      %2075 = vmatprep.subr.bf16.mxu0 0
      %2076 = vmatpush1.bf16.msra.mxu0 0
      %2077 = vmatprep.mubr.bf16.mxu0 0
      %2078 = vmatmul.mubr.bf16.gmra.mrb[0].mxu0 %v2025
      %v2079 = vpop.f32.mrb[0].mxu0
      %v2080 = vadd.f32 0.0, %v2079
      %v2081 = vpop.f32.mrb[0].mxu0
      %v2082 = vpop.f32.mrb[0].mxu0
      %v2083 = vadd.f32 0.0, %v2082
      %v2084 = vpop.f32.mrb[0].mxu0
      %2085 = vmatprep.mubr.bf16.mxu0 0
      %2086 = vmatmul.mubr.bf16.gmra.mrb[0].mxu0 %v2028
      %v2087 = vpop.f32.mrb[0].mxu0
      %v2088 = vadd.f32 0.0, %v2087
      %v2089 = vpop.f32.mrb[0].mxu0
      %v2090 = vpop.f32.mrb[0].mxu0
      %v2091 = vadd.f32 0.0, %v2090
      %v2092 = vpop.f32.mrb[0].mxu0
      %2093 = vmatprep.mubr.bf16.mxu0 0
      %2094 = vmatmul.mubr.bf16.gmra.mrb[0].mxu0 %v2031
      %v2095 = vpop.f32.mrb[0].mxu0
      %v2096 = vadd.f32 0.0, %v2095
      %v2097 = vpop.f32.mrb[0].mxu0
      %v2098 = vpop.f32.mrb[0].mxu0
      %v2099 = vadd.f32 0.0, %v2098
      %v2100 = vpop.f32.mrb[0].mxu0
      %2101 = vmatprep.mubr.bf16.mxu0 0
      %2102 = vmatmul.mubr.bf16.gmra.mrb[0].mxu0 %v2034
      %v2103 = vpop.f32.mrb[0].mxu0
      %v2104 = vadd.f32 0.0, %v2103
      %v2105 = vpop.f32.mrb[0].mxu0
      %v2106 = vpop.f32.mrb[0].mxu0
      %v2107 = vadd.f32 0.0, %v2106
      %v2108 = vpop.f32.mrb[0].mxu0
      %2109 = vmatprep.mubr.bf16.mxu0 0
      %2110 = vmatmul.mubr.bf16.gmra.mrb[0].mxu0 %v2037
      %v2111 = vpop.f32.mrb[0].mxu0
      %v2112 = vadd.f32 0.0, %v2111
      %v2113 = vpop.f32.mrb[0].mxu0
      %v2114 = vpop.f32.mrb[0].mxu0
      %v2115 = vadd.f32 0.0, %v2114
      %v2116 = vpop.f32.mrb[0].mxu0
      %2117 = vmatprep.mubr.bf16.mxu0 0
      %2118 = vmatmul.mubr.bf16.gmra.mrb[0].mxu0 %v2040
      %v2119 = vpop.f32.mrb[0].mxu0
      %v2120 = vadd.f32 0.0, %v2119
      %v2121 = vpop.f32.mrb[0].mxu0
      %v2122 = vpop.f32.mrb[0].mxu0
      %v2123 = vadd.f32 0.0, %v2122
      %v2124 = vpop.f32.mrb[0].mxu0
      %2125 = vmatprep.mubr.bf16.mxu0 0
      %2126 = vmatmul.mubr.bf16.gmra.mrb[0].mxu0 %v2043
      %v2127 = vpop.f32.mrb[0].mxu0
      %v2128 = vadd.f32 0.0, %v2127
      %v2129 = vpop.f32.mrb[0].mxu0
      %v2130 = vpop.f32.mrb[0].mxu0
      %v2131 = vadd.f32 0.0, %v2130
      %v2132 = vpop.f32.mrb[0].mxu0
      %2133 = vdwg.mxu0
      %v2134 = vadd.f32 %v1971, %v2080
      %v2135 = vadd.f32 %v1972, %v2083
      %v2136 = vadd.f32 %v1973, %v2088
      %v2137 = vadd.f32 %v1974, %v2091
      %v2138 = vadd.f32 %v1975, %v2096
      %v2139 = vadd.f32 %v1976, %v2099
      %v2140 = vadd.f32 %v1977, %v2104
      %v2141 = vadd.f32 %v1978, %v2107
      %v2142 = vadd.f32 %v1979, %v2112
      %v2143 = vadd.f32 %v1980, %v2115
      %v2144 = vadd.f32 %v1981, %v2120
      %v2145 = vadd.f32 %v1982, %v2123
      %v2146 = vadd.f32 %v1983, %v2128
      %v2147 = vadd.f32 %v1984, %v2131
      %v2148 = vmax.f32 %v2134, 0.0
      %v2149 = vmax.f32 %v2135, 0.0
      %v2150 = vmax.f32 %v2136, 0.0
      %v2151 = vmax.f32 %v2137, 0.0
      %v2152 = vmax.f32 %v2138, 0.0
      %v2153 = vmax.f32 %v2139, 0.0
      %v2154 = vmax.f32 %v2140, 0.0
      %v2155 = vmax.f32 %v2141, 0.0
      %v2156 = vmax.f32 %v2142, 0.0
      %v2157 = vmax.f32 %v2143, 0.0
      %v2158 = vmax.f32 %v2144, 0.0
      %v2159 = vmax.f32 %v2145, 0.0
      %v2160 = vmax.f32 %v2146, 0.0
      %v2161 = vmax.f32 %v2147, 0.0
      %s2162 = scalar_lea.vmem [#allocation4], %s673
      %vm2163 = vcmask 523264
      %2164 = vst.msk [vmem:[%s2162] sm:$0xff] %vm2163, %v2148
      %2165 = vst.msk [vmem:[%s2162 + $0x8] sm:$0xff] %vm2163, %v2149
      %2166 = vst.msk [vmem:[%s2162 + $0x10] sm:$0xff] %vm2163, %v2150
      %2167 = vst.msk [vmem:[%s2162 + $0x18] sm:$0xff] %vm2163, %v2151
      %2168 = vst.msk [vmem:[%s2162 + $0x20] sm:$0xff] %vm2163, %v2152
      %2169 = vst.msk [vmem:[%s2162 + $0x28] sm:$0xff] %vm2163, %v2153
      %2170 = vst.msk [vmem:[%s2162 + $0x30] sm:$0xff] %vm2163, %v2154
      %2171 = vst.msk [vmem:[%s2162 + $0x38] sm:$0xff] %vm2163, %v2155
      %2172 = vst.msk [vmem:[%s2162 + $0x40] sm:$0xff] %vm2163, %v2156
      %2173 = vst.msk [vmem:[%s2162 + $0x48] sm:$0xff] %vm2163, %v2157
      %2174 = vst.msk [vmem:[%s2162 + $0x50] sm:$0xff] %vm2163, %v2158
      %2175 = vst.msk [vmem:[%s2162 + $0x58] sm:$0xff] %vm2163, %v2159
      %2176 = vst.msk [vmem:[%s2162 + $0x60] sm:$0xff] %vm2163, %v2160
      %2177 = vst.msk [vmem:[%s2162 + $0x68] sm:$0xff] %vm2163, %v2161
    $region52: #{mnist_forward.2} parent=1 // loop_footer
      %s672 = sadd.s32 1, %s668
    $region53: #{mnist_forward.2} parent=1 // loop_footer_branch
      %667 = sbr.rel target = $region49
    $region54: #{mnist_forward.2} parent=1 // loop_exit
      _
    %v2178 = vld [vmem:[#allocation4] ss:$2 sm:$0xff]
    %s2179 = scalar_lea.vmem [#allocation4], 16
    %v2180 = vld [vmem:[%s2179] ss:$2 sm:$0xf]
    %s2181 = scalar_lea.vmem [#allocation4], 1
    %v2182 = vld [vmem:[%s2181] ss:$2 sm:$0xff]
    %s2183 = scalar_lea.vmem [#allocation4], 17
    %v2184 = vld [vmem:[%s2183] ss:$2 sm:$0xf]
    %s2185 = scalar_lea.vmem [#allocation4], 28
    %v2186 = vld [vmem:[%s2185] ss:$2 sm:$0xff]
    %s2187 = scalar_lea.vmem [#allocation4], 44
    %v2188 = vld [vmem:[%s2187] ss:$2 sm:$0xf]
    %s2189 = scalar_lea.vmem [#allocation4], 29
    %v2190 = vld [vmem:[%s2189] ss:$2 sm:$0xff]
    %s2191 = scalar_lea.vmem [#allocation4], 45
    %v2192 = vld [vmem:[%s2191] ss:$2 sm:$0xf]
    %v2193 = vmax.f32 %v2178, %v2182
    %v2194 = vmax.f32 %v2180, %v2184
    %v2195 = vmax.f32 %v2186, %v2190
    %v2196 = vmax.f32 %v2188, %v2192
    %v2197 = vmax.f32 %v2193, %v2195
    %v2198 = vmax.f32 %v2194, %v2196
    %v2199 = vpack.c.bf16 %v2198, %v2197
    %v2201 = vunpack.c.l.b16 %v2199
    %v2202 = vunpack.c.h.b16 %v2199
    %v2203 = vpack.c.b16 %v2201, %v2201
    %v2204 = vpack.c.b16 %v2202, %v2202
    %vm2207 = vcmask 519168
    %2208 = vst.msk [vmem:[%s5] sm:$0xf] %vm2207, %v2203
    %vm2209 = vcmask 517120
    %2210 = vst.msk [vmem:[%s5 + $0x4] sm:$0x3] %vm2209, %v2204
    %s2211 = scalar_lea.vmem [#allocation4], 56
    %v2212 = vld [vmem:[%s2211] ss:$2 sm:$0xff]
    %s2213 = scalar_lea.vmem [#allocation4], 72
    %v2214 = vld [vmem:[%s2213] ss:$2 sm:$0xf]
    %s2215 = scalar_lea.vmem [#allocation4], 57
    %v2216 = vld [vmem:[%s2215] ss:$2 sm:$0xff]
    %s2217 = scalar_lea.vmem [#allocation4], 73
    %v2218 = vld [vmem:[%s2217] ss:$2 sm:$0xf]
    %s2219 = scalar_lea.vmem [#allocation4], 84
    %v2220 = vld [vmem:[%s2219] ss:$2 sm:$0xff]
    %s2221 = scalar_lea.vmem [#allocation4], 100
    %v2222 = vld [vmem:[%s2221] ss:$2 sm:$0xf]
    %s2223 = scalar_lea.vmem [#allocation4], 85
    %v2224 = vld [vmem:[%s2223] ss:$2 sm:$0xff]
    %s2225 = scalar_lea.vmem [#allocation4], 101
    %v2226 = vld [vmem:[%s2225] ss:$2 sm:$0xf]
    %v2227 = vmax.f32 %v2212, %v2216
    %v2228 = vmax.f32 %v2214, %v2218
    %v2229 = vmax.f32 %v2220, %v2224
    %v2230 = vmax.f32 %v2222, %v2226
    %v2231 = vmax.f32 %v2227, %v2229
    %v2232 = vmax.f32 %v2228, %v2230
    %v2233 = vpack.c.bf16 %v2232, %v2231
    %v2235 = vunpack.c.l.b16 %v2233
    %v2236 = vunpack.c.h.b16 %v2233
    %v2237 = vpack.c.b16 %v2235, %v2235
    %v2238 = vpack.c.b16 %v2236, %v2236
    %s2241 = scalar_lea.vmem %s5, 8
    %2242 = vst.msk [vmem:[%s2241] sm:$0xf] %vm2207, %v2237
    %2243 = vst.msk [vmem:[%s2241 + $0x4] sm:$0x3] %vm2209, %v2238
    %s2244 = scalar_lea.vmem [#allocation4], 112
    %v2245 = vld [vmem:[%s2244] ss:$2 sm:$0xff]
    %s2246 = scalar_lea.vmem [#allocation4], 128
    %v2247 = vld [vmem:[%s2246] ss:$2 sm:$0xf]
    %s2248 = scalar_lea.vmem [#allocation4], 113
    %v2249 = vld [vmem:[%s2248] ss:$2 sm:$0xff]
    %s2250 = scalar_lea.vmem [#allocation4], 129
    %v2251 = vld [vmem:[%s2250] ss:$2 sm:$0xf]
    %s2252 = scalar_lea.vmem [#allocation4], 140
    %v2253 = vld [vmem:[%s2252] ss:$2 sm:$0xff]
    %s2254 = scalar_lea.vmem [#allocation4], 156
    %v2255 = vld [vmem:[%s2254] ss:$2 sm:$0xf]
    %s2256 = scalar_lea.vmem [#allocation4], 141
    %v2257 = vld [vmem:[%s2256] ss:$2 sm:$0xff]
    %s2258 = scalar_lea.vmem [#allocation4], 157
    %v2259 = vld [vmem:[%s2258] ss:$2 sm:$0xf]
    %v2260 = vmax.f32 %v2245, %v2249
    %v2261 = vmax.f32 %v2247, %v2251
    %v2262 = vmax.f32 %v2253, %v2257
    %v2263 = vmax.f32 %v2255, %v2259
    %v2264 = vmax.f32 %v2260, %v2262
    %v2265 = vmax.f32 %v2261, %v2263
    %v2266 = vpack.c.bf16 %v2265, %v2264
    %v2268 = vunpack.c.l.b16 %v2266
    %v2269 = vunpack.c.h.b16 %v2266
    %v2270 = vpack.c.b16 %v2268, %v2268
    %v2271 = vpack.c.b16 %v2269, %v2269
    %s2274 = scalar_lea.vmem %s5, 16
    %2275 = vst.msk [vmem:[%s2274] sm:$0xf] %vm2207, %v2270
    %2276 = vst.msk [vmem:[%s2274 + $0x4] sm:$0x3] %vm2209, %v2271
    %s2277 = scalar_lea.vmem [#allocation4], 168
    %v2278 = vld [vmem:[%s2277] ss:$2 sm:$0xff]
    %s2279 = scalar_lea.vmem [#allocation4], 184
    %v2280 = vld [vmem:[%s2279] ss:$2 sm:$0xf]
    %s2281 = scalar_lea.vmem [#allocation4], 169
    %v2282 = vld [vmem:[%s2281] ss:$2 sm:$0xff]
    %s2283 = scalar_lea.vmem [#allocation4], 185
    %v2284 = vld [vmem:[%s2283] ss:$2 sm:$0xf]
    %s2285 = scalar_lea.vmem [#allocation4], 196
    %v2286 = vld [vmem:[%s2285] ss:$2 sm:$0xff]
    %s2287 = scalar_lea.vmem [#allocation4], 212
    %v2288 = vld [vmem:[%s2287] ss:$2 sm:$0xf]
    %s2289 = scalar_lea.vmem [#allocation4], 197
    %v2290 = vld [vmem:[%s2289] ss:$2 sm:$0xff]
    %s2291 = scalar_lea.vmem [#allocation4], 213
    %v2292 = vld [vmem:[%s2291] ss:$2 sm:$0xf]
    %v2293 = vmax.f32 %v2278, %v2282
    %v2294 = vmax.f32 %v2280, %v2284
    %v2295 = vmax.f32 %v2286, %v2290
    %v2296 = vmax.f32 %v2288, %v2292
    %v2297 = vmax.f32 %v2293, %v2295
    %v2298 = vmax.f32 %v2294, %v2296
    %v2299 = vpack.c.bf16 %v2298, %v2297
    %v2301 = vunpack.c.l.b16 %v2299
    %v2302 = vunpack.c.h.b16 %v2299
    %v2303 = vpack.c.b16 %v2301, %v2301
    %v2304 = vpack.c.b16 %v2302, %v2302
    %s2307 = scalar_lea.vmem %s5, 24
    %2308 = vst.msk [vmem:[%s2307] sm:$0xf] %vm2207, %v2303
    %2309 = vst.msk [vmem:[%s2307 + $0x4] sm:$0x3] %vm2209, %v2304
    %s2310 = scalar_lea.vmem [#allocation4], 224
    %v2311 = vld [vmem:[%s2310] ss:$2 sm:$0xff]
    %s2312 = scalar_lea.vmem [#allocation4], 240
    %v2313 = vld [vmem:[%s2312] ss:$2 sm:$0xf]
    %s2314 = scalar_lea.vmem [#allocation4], 225
    %v2315 = vld [vmem:[%s2314] ss:$2 sm:$0xff]
    %s2316 = scalar_lea.vmem [#allocation4], 241
    %v2317 = vld [vmem:[%s2316] ss:$2 sm:$0xf]
    %s2318 = scalar_lea.vmem [#allocation4], 252
    %v2319 = vld [vmem:[%s2318] ss:$2 sm:$0xff]
    %s2320 = scalar_lea.vmem [#allocation4], 268
    %v2321 = vld [vmem:[%s2320] ss:$2 sm:$0xf]
    %s2322 = scalar_lea.vmem [#allocation4], 253
    %v2323 = vld [vmem:[%s2322] ss:$2 sm:$0xff]
    %s2324 = scalar_lea.vmem [#allocation4], 269
    %v2325 = vld [vmem:[%s2324] ss:$2 sm:$0xf]
    %v2326 = vmax.f32 %v2311, %v2315
    %v2327 = vmax.f32 %v2313, %v2317
    %v2328 = vmax.f32 %v2319, %v2323
    %v2329 = vmax.f32 %v2321, %v2325
    %v2330 = vmax.f32 %v2326, %v2328
    %v2331 = vmax.f32 %v2327, %v2329
    %v2332 = vpack.c.bf16 %v2331, %v2330
    %v2334 = vunpack.c.l.b16 %v2332
    %v2335 = vunpack.c.h.b16 %v2332
    %v2336 = vpack.c.b16 %v2334, %v2334
    %v2337 = vpack.c.b16 %v2335, %v2335
    %s2340 = scalar_lea.vmem %s5, 32
    %2341 = vst.msk [vmem:[%s2340] sm:$0xf] %vm2207, %v2336
    %2342 = vst.msk [vmem:[%s2340 + $0x4] sm:$0x3] %vm2209, %v2337
    %s2343 = scalar_lea.vmem [#allocation4], 280
    %v2344 = vld [vmem:[%s2343] ss:$2 sm:$0xff]
    %s2345 = scalar_lea.vmem [#allocation4], 296
    %v2346 = vld [vmem:[%s2345] ss:$2 sm:$0xf]
    %s2347 = scalar_lea.vmem [#allocation4], 281
    %v2348 = vld [vmem:[%s2347] ss:$2 sm:$0xff]
    %s2349 = scalar_lea.vmem [#allocation4], 297
    %v2350 = vld [vmem:[%s2349] ss:$2 sm:$0xf]
    %s2351 = scalar_lea.vmem [#allocation4], 308
    %v2352 = vld [vmem:[%s2351] ss:$2 sm:$0xff]
    %s2353 = scalar_lea.vmem [#allocation4], 324
    %v2354 = vld [vmem:[%s2353] ss:$2 sm:$0xf]
    %s2355 = scalar_lea.vmem [#allocation4], 309
    %v2356 = vld [vmem:[%s2355] ss:$2 sm:$0xff]
    %s2357 = scalar_lea.vmem [#allocation4], 325
    %v2358 = vld [vmem:[%s2357] ss:$2 sm:$0xf]
    %v2359 = vmax.f32 %v2344, %v2348
    %v2360 = vmax.f32 %v2346, %v2350
    %v2361 = vmax.f32 %v2352, %v2356
    %v2362 = vmax.f32 %v2354, %v2358
    %v2363 = vmax.f32 %v2359, %v2361
    %v2364 = vmax.f32 %v2360, %v2362
    %v2365 = vpack.c.bf16 %v2364, %v2363
    %v2367 = vunpack.c.l.b16 %v2365
    %v2368 = vunpack.c.h.b16 %v2365
    %v2369 = vpack.c.b16 %v2367, %v2367
    %v2370 = vpack.c.b16 %v2368, %v2368
    %s2373 = scalar_lea.vmem %s5, 40
    %2374 = vst.msk [vmem:[%s2373] sm:$0xf] %vm2207, %v2369
    %2375 = vst.msk [vmem:[%s2373 + $0x4] sm:$0x3] %vm2209, %v2370
    %s2376 = scalar_lea.vmem [#allocation4], 336
    %v2377 = vld [vmem:[%s2376] ss:$2 sm:$0xff]
    %s2378 = scalar_lea.vmem [#allocation4], 352
    %v2379 = vld [vmem:[%s2378] ss:$2 sm:$0xf]
    %s2380 = scalar_lea.vmem [#allocation4], 337
    %v2381 = vld [vmem:[%s2380] ss:$2 sm:$0xff]
    %s2382 = scalar_lea.vmem [#allocation4], 353
    %v2383 = vld [vmem:[%s2382] ss:$2 sm:$0xf]
    %s2384 = scalar_lea.vmem [#allocation4], 364
    %v2385 = vld [vmem:[%s2384] ss:$2 sm:$0xff]
    %s2386 = scalar_lea.vmem [#allocation4], 380
    %v2387 = vld [vmem:[%s2386] ss:$2 sm:$0xf]
    %s2388 = scalar_lea.vmem [#allocation4], 365
    %v2389 = vld [vmem:[%s2388] ss:$2 sm:$0xff]
    %s2390 = scalar_lea.vmem [#allocation4], 381
    %v2391 = vld [vmem:[%s2390] ss:$2 sm:$0xf]
    %v2392 = vmax.f32 %v2377, %v2381
    %v2393 = vmax.f32 %v2379, %v2383
    %v2394 = vmax.f32 %v2385, %v2389
    %v2395 = vmax.f32 %v2387, %v2391
    %v2396 = vmax.f32 %v2392, %v2394
    %v2397 = vmax.f32 %v2393, %v2395
    %v2398 = vpack.c.bf16 %v2397, %v2396
    %v2400 = vunpack.c.l.b16 %v2398
    %v2401 = vunpack.c.h.b16 %v2398
    %v2402 = vpack.c.b16 %v2400, %v2400
    %v2403 = vpack.c.b16 %v2401, %v2401
    %s2406 = scalar_lea.vmem %s5, 48
    %2407 = vst.msk [vmem:[%s2406] sm:$0xf] %vm2207, %v2402
    %2408 = vst.msk [vmem:[%s2406 + $0x4] sm:$0x3] %vm2209, %v2403
    %s2409 = scalar_lea.vmem [#allocation4], 392
    %v2410 = vld [vmem:[%s2409] ss:$2 sm:$0xff]
    %s2411 = scalar_lea.vmem [#allocation4], 408
    %v2412 = vld [vmem:[%s2411] ss:$2 sm:$0xf]
    %s2413 = scalar_lea.vmem [#allocation4], 393
    %v2414 = vld [vmem:[%s2413] ss:$2 sm:$0xff]
    %s2415 = scalar_lea.vmem [#allocation4], 409
    %v2416 = vld [vmem:[%s2415] ss:$2 sm:$0xf]
    %s2417 = scalar_lea.vmem [#allocation4], 420
    %v2418 = vld [vmem:[%s2417] ss:$2 sm:$0xff]
    %s2419 = scalar_lea.vmem [#allocation4], 436
    %v2420 = vld [vmem:[%s2419] ss:$2 sm:$0xf]
    %s2421 = scalar_lea.vmem [#allocation4], 421
    %v2422 = vld [vmem:[%s2421] ss:$2 sm:$0xff]
    %s2423 = scalar_lea.vmem [#allocation4], 437
    %v2424 = vld [vmem:[%s2423] ss:$2 sm:$0xf]
    %v2425 = vmax.f32 %v2410, %v2414
    %v2426 = vmax.f32 %v2412, %v2416
    %v2427 = vmax.f32 %v2418, %v2422
    %v2428 = vmax.f32 %v2420, %v2424
    %v2429 = vmax.f32 %v2425, %v2427
    %v2430 = vmax.f32 %v2426, %v2428
    %v2431 = vpack.c.bf16 %v2430, %v2429
    %v2433 = vunpack.c.l.b16 %v2431
    %v2434 = vunpack.c.h.b16 %v2431
    %v2435 = vpack.c.b16 %v2433, %v2433
    %v2436 = vpack.c.b16 %v2434, %v2434
    %s2439 = scalar_lea.vmem %s5, 56
    %2440 = vst.msk [vmem:[%s2439] sm:$0xf] %vm2207, %v2435
    %2441 = vst.msk [vmem:[%s2439 + $0x4] sm:$0x3] %vm2209, %v2436
    %s2442 = scalar_lea.vmem [#allocation4], 448
    %v2443 = vld [vmem:[%s2442] ss:$2 sm:$0xff]
    %s2444 = scalar_lea.vmem [#allocation4], 464
    %v2445 = vld [vmem:[%s2444] ss:$2 sm:$0xf]
    %s2446 = scalar_lea.vmem [#allocation4], 449
    %v2447 = vld [vmem:[%s2446] ss:$2 sm:$0xff]
    %s2448 = scalar_lea.vmem [#allocation4], 465
    %v2449 = vld [vmem:[%s2448] ss:$2 sm:$0xf]
    %s2450 = scalar_lea.vmem [#allocation4], 476
    %v2451 = vld [vmem:[%s2450] ss:$2 sm:$0xff]
    %s2452 = scalar_lea.vmem [#allocation4], 492
    %v2453 = vld [vmem:[%s2452] ss:$2 sm:$0xf]
    %s2454 = scalar_lea.vmem [#allocation4], 477
    %v2455 = vld [vmem:[%s2454] ss:$2 sm:$0xff]
    %s2456 = scalar_lea.vmem [#allocation4], 493
    %v2457 = vld [vmem:[%s2456] ss:$2 sm:$0xf]
    %v2458 = vmax.f32 %v2443, %v2447
    %v2459 = vmax.f32 %v2445, %v2449
    %v2460 = vmax.f32 %v2451, %v2455
    %v2461 = vmax.f32 %v2453, %v2457
    %v2462 = vmax.f32 %v2458, %v2460
    %v2463 = vmax.f32 %v2459, %v2461
    %v2464 = vpack.c.bf16 %v2463, %v2462
    %v2466 = vunpack.c.l.b16 %v2464
    %v2467 = vunpack.c.h.b16 %v2464
    %v2468 = vpack.c.b16 %v2466, %v2466
    %v2469 = vpack.c.b16 %v2467, %v2467
    %s2472 = scalar_lea.vmem %s5, 64
    %2473 = vst.msk [vmem:[%s2472] sm:$0xf] %vm2207, %v2468
    %2474 = vst.msk [vmem:[%s2472 + $0x4] sm:$0x3] %vm2209, %v2469
    %s2475 = scalar_lea.vmem [#allocation4], 504
    %v2476 = vld [vmem:[%s2475] ss:$2 sm:$0xff]
    %s2477 = scalar_lea.vmem [#allocation4], 520
    %v2478 = vld [vmem:[%s2477] ss:$2 sm:$0xf]
    %s2479 = scalar_lea.vmem [#allocation4], 505
    %v2480 = vld [vmem:[%s2479] ss:$2 sm:$0xff]
    %s2481 = scalar_lea.vmem [#allocation4], 521
    %v2482 = vld [vmem:[%s2481] ss:$2 sm:$0xf]
    %s2483 = scalar_lea.vmem [#allocation4], 532
    %v2484 = vld [vmem:[%s2483] ss:$2 sm:$0xff]
    %s2485 = scalar_lea.vmem [#allocation4], 548
    %v2486 = vld [vmem:[%s2485] ss:$2 sm:$0xf]
    %s2487 = scalar_lea.vmem [#allocation4], 533
    %v2488 = vld [vmem:[%s2487] ss:$2 sm:$0xff]
    %s2489 = scalar_lea.vmem [#allocation4], 549
    %v2490 = vld [vmem:[%s2489] ss:$2 sm:$0xf]
    %v2491 = vmax.f32 %v2476, %v2480
    %v2492 = vmax.f32 %v2478, %v2482
    %v2493 = vmax.f32 %v2484, %v2488
    %v2494 = vmax.f32 %v2486, %v2490
    %v2495 = vmax.f32 %v2491, %v2493
    %v2496 = vmax.f32 %v2492, %v2494
    %v2497 = vpack.c.bf16 %v2496, %v2495
    %v2499 = vunpack.c.l.b16 %v2497
    %v2500 = vunpack.c.h.b16 %v2497
    %v2501 = vpack.c.b16 %v2499, %v2499
    %v2502 = vpack.c.b16 %v2500, %v2500
    %s2505 = scalar_lea.vmem %s5, 72
    %2506 = vst.msk [vmem:[%s2505] sm:$0xf] %vm2207, %v2501
    %2507 = vst.msk [vmem:[%s2505 + $0x4] sm:$0x3] %vm2209, %v2502
    %s2508 = scalar_lea.vmem [#allocation4], 560
    %v2509 = vld [vmem:[%s2508] ss:$2 sm:$0xff]
    %s2510 = scalar_lea.vmem [#allocation4], 576
    %v2511 = vld [vmem:[%s2510] ss:$2 sm:$0xf]
    %s2512 = scalar_lea.vmem [#allocation4], 561
    %v2513 = vld [vmem:[%s2512] ss:$2 sm:$0xff]
    %s2514 = scalar_lea.vmem [#allocation4], 577
    %v2515 = vld [vmem:[%s2514] ss:$2 sm:$0xf]
    %s2516 = scalar_lea.vmem [#allocation4], 588
    %v2517 = vld [vmem:[%s2516] ss:$2 sm:$0xff]
    %s2518 = scalar_lea.vmem [#allocation4], 604
    %v2519 = vld [vmem:[%s2518] ss:$2 sm:$0xf]
    %s2520 = scalar_lea.vmem [#allocation4], 589
    %v2521 = vld [vmem:[%s2520] ss:$2 sm:$0xff]
    %s2522 = scalar_lea.vmem [#allocation4], 605
    %v2523 = vld [vmem:[%s2522] ss:$2 sm:$0xf]
    %v2524 = vmax.f32 %v2509, %v2513
    %v2525 = vmax.f32 %v2511, %v2515
    %v2526 = vmax.f32 %v2517, %v2521
    %v2527 = vmax.f32 %v2519, %v2523
    %v2528 = vmax.f32 %v2524, %v2526
    %v2529 = vmax.f32 %v2525, %v2527
    %v2530 = vpack.c.bf16 %v2529, %v2528
    %v2532 = vunpack.c.l.b16 %v2530
    %v2533 = vunpack.c.h.b16 %v2530
    %v2534 = vpack.c.b16 %v2532, %v2532
    %v2535 = vpack.c.b16 %v2533, %v2533
    %s2538 = scalar_lea.vmem %s5, 80
    %2539 = vst.msk [vmem:[%s2538] sm:$0xf] %vm2207, %v2534
    %2540 = vst.msk [vmem:[%s2538 + $0x4] sm:$0x3] %vm2209, %v2535
    %s2541 = scalar_lea.vmem [#allocation4], 616
    %v2542 = vld [vmem:[%s2541] ss:$2 sm:$0xff]
    %s2543 = scalar_lea.vmem [#allocation4], 632
    %v2544 = vld [vmem:[%s2543] ss:$2 sm:$0xf]
    %s2545 = scalar_lea.vmem [#allocation4], 617
    %v2546 = vld [vmem:[%s2545] ss:$2 sm:$0xff]
    %s2547 = scalar_lea.vmem [#allocation4], 633
    %v2548 = vld [vmem:[%s2547] ss:$2 sm:$0xf]
    %s2549 = scalar_lea.vmem [#allocation4], 644
    %v2550 = vld [vmem:[%s2549] ss:$2 sm:$0xff]
    %s2551 = scalar_lea.vmem [#allocation4], 660
    %v2552 = vld [vmem:[%s2551] ss:$2 sm:$0xf]
    %s2553 = scalar_lea.vmem [#allocation4], 645
    %v2554 = vld [vmem:[%s2553] ss:$2 sm:$0xff]
    %s2555 = scalar_lea.vmem [#allocation4], 661
    %v2556 = vld [vmem:[%s2555] ss:$2 sm:$0xf]
    %v2557 = vmax.f32 %v2542, %v2546
    %v2558 = vmax.f32 %v2544, %v2548
    %v2559 = vmax.f32 %v2550, %v2554
    %v2560 = vmax.f32 %v2552, %v2556
    %v2561 = vmax.f32 %v2557, %v2559
    %v2562 = vmax.f32 %v2558, %v2560
    %v2563 = vpack.c.bf16 %v2562, %v2561
    %v2565 = vunpack.c.l.b16 %v2563
    %v2566 = vunpack.c.h.b16 %v2563
    %v2567 = vpack.c.b16 %v2565, %v2565
    %v2568 = vpack.c.b16 %v2566, %v2566
    %s2571 = scalar_lea.vmem %s5, 88
    %2572 = vst.msk [vmem:[%s2571] sm:$0xf] %vm2207, %v2567
    %2573 = vst.msk [vmem:[%s2571 + $0x4] sm:$0x3] %vm2209, %v2568
    %s2574 = scalar_lea.vmem [#allocation4], 784
    %v2575 = vld [vmem:[%s2574] ss:$2 sm:$0xff]
    %s2576 = scalar_lea.vmem [#allocation4], 800
    %v2577 = vld [vmem:[%s2576] ss:$2 sm:$0xf]
    %s2578 = scalar_lea.vmem [#allocation4], 785
    %v2579 = vld [vmem:[%s2578] ss:$2 sm:$0xff]
    %s2580 = scalar_lea.vmem [#allocation4], 801
    %v2581 = vld [vmem:[%s2580] ss:$2 sm:$0xf]
    %s2582 = scalar_lea.vmem [#allocation4], 812
    %v2583 = vld [vmem:[%s2582] ss:$2 sm:$0xff]
    %s2584 = scalar_lea.vmem [#allocation4], 828
    %v2585 = vld [vmem:[%s2584] ss:$2 sm:$0xf]
    %s2586 = scalar_lea.vmem [#allocation4], 813
    %v2587 = vld [vmem:[%s2586] ss:$2 sm:$0xff]
    %s2588 = scalar_lea.vmem [#allocation4], 829
    %v2589 = vld [vmem:[%s2588] ss:$2 sm:$0xf]
    %v2590 = vmax.f32 %v2575, %v2579
    %v2591 = vmax.f32 %v2577, %v2581
    %v2592 = vmax.f32 %v2583, %v2587
    %v2593 = vmax.f32 %v2585, %v2589
    %v2594 = vmax.f32 %v2590, %v2592
    %v2595 = vmax.f32 %v2591, %v2593
    %v2596 = vpack.c.bf16 %v2595, %v2594
    %v2598 = vunpack.c.l.b16 %v2596
    %v2599 = vunpack.c.h.b16 %v2596
    %v2600 = vpack.c.b16 %v2598, %v2598
    %v2601 = vpack.c.b16 %v2599, %v2599
    %s2604 = scalar_lea.vmem %s5, 96
    %2605 = vst.msk [vmem:[%s2604] sm:$0xf] %vm2207, %v2600
    %2606 = vst.msk [vmem:[%s2604 + $0x4] sm:$0x3] %vm2209, %v2601
    %s2607 = scalar_lea.vmem [#allocation4], 840
    %v2608 = vld [vmem:[%s2607] ss:$2 sm:$0xff]
    %s2609 = scalar_lea.vmem [#allocation4], 856
    %v2610 = vld [vmem:[%s2609] ss:$2 sm:$0xf]
    %s2611 = scalar_lea.vmem [#allocation4], 841
    %v2612 = vld [vmem:[%s2611] ss:$2 sm:$0xff]
    %s2613 = scalar_lea.vmem [#allocation4], 857
    %v2614 = vld [vmem:[%s2613] ss:$2 sm:$0xf]
    %s2615 = scalar_lea.vmem [#allocation4], 868
    %v2616 = vld [vmem:[%s2615] ss:$2 sm:$0xff]
    %s2617 = scalar_lea.vmem [#allocation4], 884
    %v2618 = vld [vmem:[%s2617] ss:$2 sm:$0xf]
    %s2619 = scalar_lea.vmem [#allocation4], 869
    %v2620 = vld [vmem:[%s2619] ss:$2 sm:$0xff]
    %s2621 = scalar_lea.vmem [#allocation4], 885
    %v2622 = vld [vmem:[%s2621] ss:$2 sm:$0xf]
    %v2623 = vmax.f32 %v2608, %v2612
    %v2624 = vmax.f32 %v2610, %v2614
    %v2625 = vmax.f32 %v2616, %v2620
    %v2626 = vmax.f32 %v2618, %v2622
    %v2627 = vmax.f32 %v2623, %v2625
    %v2628 = vmax.f32 %v2624, %v2626
    %v2629 = vpack.c.bf16 %v2628, %v2627
    %v2631 = vunpack.c.l.b16 %v2629
    %v2632 = vunpack.c.h.b16 %v2629
    %v2633 = vpack.c.b16 %v2631, %v2631
    %v2634 = vpack.c.b16 %v2632, %v2632
    %s2637 = scalar_lea.vmem %s5, 104
    %2638 = vst.msk [vmem:[%s2637] sm:$0xf] %vm2207, %v2633
    %2639 = vst.msk [vmem:[%s2637 + $0x4] sm:$0x3] %vm2209, %v2634
    %s2640 = scalar_lea.vmem [#allocation4], 896
    %v2641 = vld [vmem:[%s2640] ss:$2 sm:$0xff]
    %s2642 = scalar_lea.vmem [#allocation4], 912
    %v2643 = vld [vmem:[%s2642] ss:$2 sm:$0xf]
    %s2644 = scalar_lea.vmem [#allocation4], 897
    %v2645 = vld [vmem:[%s2644] ss:$2 sm:$0xff]
    %s2646 = scalar_lea.vmem [#allocation4], 913
    %v2647 = vld [vmem:[%s2646] ss:$2 sm:$0xf]
    %s2648 = scalar_lea.vmem [#allocation4], 924
    %v2649 = vld [vmem:[%s2648] ss:$2 sm:$0xff]
    %s2650 = scalar_lea.vmem [#allocation4], 940
    %v2651 = vld [vmem:[%s2650] ss:$2 sm:$0xf]
    %s2652 = scalar_lea.vmem [#allocation4], 925
    %v2653 = vld [vmem:[%s2652] ss:$2 sm:$0xff]
    %s2654 = scalar_lea.vmem [#allocation4], 941
    %v2655 = vld [vmem:[%s2654] ss:$2 sm:$0xf]
    %v2656 = vmax.f32 %v2641, %v2645
    %v2657 = vmax.f32 %v2643, %v2647
    %v2658 = vmax.f32 %v2649, %v2653
    %v2659 = vmax.f32 %v2651, %v2655
    %v2660 = vmax.f32 %v2656, %v2658
    %v2661 = vmax.f32 %v2657, %v2659
    %v2662 = vpack.c.bf16 %v2661, %v2660
    %v2664 = vunpack.c.l.b16 %v2662
    %v2665 = vunpack.c.h.b16 %v2662
    %v2666 = vpack.c.b16 %v2664, %v2664
    %v2667 = vpack.c.b16 %v2665, %v2665
    %s2670 = scalar_lea.vmem %s5, 112
    %2671 = vst.msk [vmem:[%s2670] sm:$0xf] %vm2207, %v2666
    %2672 = vst.msk [vmem:[%s2670 + $0x4] sm:$0x3] %vm2209, %v2667
    %s2673 = scalar_lea.vmem [#allocation4], 952
    %v2674 = vld [vmem:[%s2673] ss:$2 sm:$0xff]
    %s2675 = scalar_lea.vmem [#allocation4], 968
    %v2676 = vld [vmem:[%s2675] ss:$2 sm:$0xf]
    %s2677 = scalar_lea.vmem [#allocation4], 953
    %v2678 = vld [vmem:[%s2677] ss:$2 sm:$0xff]
    %s2679 = scalar_lea.vmem [#allocation4], 969
    %v2680 = vld [vmem:[%s2679] ss:$2 sm:$0xf]
    %s2681 = scalar_lea.vmem [#allocation4], 980
    %v2682 = vld [vmem:[%s2681] ss:$2 sm:$0xff]
    %s2683 = scalar_lea.vmem [#allocation4], 996
    %v2684 = vld [vmem:[%s2683] ss:$2 sm:$0xf]
    %s2685 = scalar_lea.vmem [#allocation4], 981
    %v2686 = vld [vmem:[%s2685] ss:$2 sm:$0xff]
    %s2687 = scalar_lea.vmem [#allocation4], 997
    %v2688 = vld [vmem:[%s2687] ss:$2 sm:$0xf]
    %v2689 = vmax.f32 %v2674, %v2678
    %v2690 = vmax.f32 %v2676, %v2680
    %v2691 = vmax.f32 %v2682, %v2686
    %v2692 = vmax.f32 %v2684, %v2688
    %v2693 = vmax.f32 %v2689, %v2691
    %v2694 = vmax.f32 %v2690, %v2692
    %v2695 = vpack.c.bf16 %v2694, %v2693
    %v2697 = vunpack.c.l.b16 %v2695
    %v2698 = vunpack.c.h.b16 %v2695
    %v2699 = vpack.c.b16 %v2697, %v2697
    %v2700 = vpack.c.b16 %v2698, %v2698
    %s2703 = scalar_lea.vmem %s5, 120
    %2704 = vst.msk [vmem:[%s2703] sm:$0xf] %vm2207, %v2699
    %2705 = vst.msk [vmem:[%s2703 + $0x4] sm:$0x3] %vm2209, %v2700
    %s2706 = scalar_lea.vmem [#allocation4], 1008
    %v2707 = vld [vmem:[%s2706] ss:$2 sm:$0xff]
    %s2708 = scalar_lea.vmem [#allocation4], 1024
    %v2709 = vld [vmem:[%s2708] ss:$2 sm:$0xf]
    %s2710 = scalar_lea.vmem [#allocation4], 1009
    %v2711 = vld [vmem:[%s2710] ss:$2 sm:$0xff]
    %s2712 = scalar_lea.vmem [#allocation4], 1025
    %v2713 = vld [vmem:[%s2712] ss:$2 sm:$0xf]
    %s2714 = scalar_lea.vmem [#allocation4], 1036
    %v2715 = vld [vmem:[%s2714] ss:$2 sm:$0xff]
    %s2716 = scalar_lea.vmem [#allocation4], 1052
    %v2717 = vld [vmem:[%s2716] ss:$2 sm:$0xf]
    %s2718 = scalar_lea.vmem [#allocation4], 1037
    %v2719 = vld [vmem:[%s2718] ss:$2 sm:$0xff]
    %s2720 = scalar_lea.vmem [#allocation4], 1053
    %v2721 = vld [vmem:[%s2720] ss:$2 sm:$0xf]
    %v2722 = vmax.f32 %v2707, %v2711
    %v2723 = vmax.f32 %v2709, %v2713
    %v2724 = vmax.f32 %v2715, %v2719
    %v2725 = vmax.f32 %v2717, %v2721
    %v2726 = vmax.f32 %v2722, %v2724
    %v2727 = vmax.f32 %v2723, %v2725
    %v2728 = vpack.c.bf16 %v2727, %v2726
    %v2730 = vunpack.c.l.b16 %v2728
    %v2731 = vunpack.c.h.b16 %v2728
    %v2732 = vpack.c.b16 %v2730, %v2730
    %v2733 = vpack.c.b16 %v2731, %v2731
    %s2736 = scalar_lea.vmem %s5, 128
    %2737 = vst.msk [vmem:[%s2736] sm:$0xf] %vm2207, %v2732
    %2738 = vst.msk [vmem:[%s2736 + $0x4] sm:$0x3] %vm2209, %v2733
    %s2739 = scalar_lea.vmem [#allocation4], 1064
    %v2740 = vld [vmem:[%s2739] ss:$2 sm:$0xff]
    %s2741 = scalar_lea.vmem [#allocation4], 1080
    %v2742 = vld [vmem:[%s2741] ss:$2 sm:$0xf]
    %s2743 = scalar_lea.vmem [#allocation4], 1065
    %v2744 = vld [vmem:[%s2743] ss:$2 sm:$0xff]
    %s2745 = scalar_lea.vmem [#allocation4], 1081
    %v2746 = vld [vmem:[%s2745] ss:$2 sm:$0xf]
    %s2747 = scalar_lea.vmem [#allocation4], 1092
    %v2748 = vld [vmem:[%s2747] ss:$2 sm:$0xff]
    %s2749 = scalar_lea.vmem [#allocation4], 1108
    %v2750 = vld [vmem:[%s2749] ss:$2 sm:$0xf]
    %s2751 = scalar_lea.vmem [#allocation4], 1093
    %v2752 = vld [vmem:[%s2751] ss:$2 sm:$0xff]
    %s2753 = scalar_lea.vmem [#allocation4], 1109
    %v2754 = vld [vmem:[%s2753] ss:$2 sm:$0xf]
    %v2755 = vmax.f32 %v2740, %v2744
    %v2756 = vmax.f32 %v2742, %v2746
    %v2757 = vmax.f32 %v2748, %v2752
    %v2758 = vmax.f32 %v2750, %v2754
    %v2759 = vmax.f32 %v2755, %v2757
    %v2760 = vmax.f32 %v2756, %v2758
    %v2761 = vpack.c.bf16 %v2760, %v2759
    %v2763 = vunpack.c.l.b16 %v2761
    %v2764 = vunpack.c.h.b16 %v2761
    %v2765 = vpack.c.b16 %v2763, %v2763
    %v2766 = vpack.c.b16 %v2764, %v2764
    %s2769 = scalar_lea.vmem %s5, 136
    %2770 = vst.msk [vmem:[%s2769] sm:$0xf] %vm2207, %v2765
    %2771 = vst.msk [vmem:[%s2769 + $0x4] sm:$0x3] %vm2209, %v2766
    %s2772 = scalar_lea.vmem [#allocation4], 1120
    %v2773 = vld [vmem:[%s2772] ss:$2 sm:$0xff]
    %s2774 = scalar_lea.vmem [#allocation4], 1136
    %v2775 = vld [vmem:[%s2774] ss:$2 sm:$0xf]
    %s2776 = scalar_lea.vmem [#allocation4], 1121
    %v2777 = vld [vmem:[%s2776] ss:$2 sm:$0xff]
    %s2778 = scalar_lea.vmem [#allocation4], 1137
    %v2779 = vld [vmem:[%s2778] ss:$2 sm:$0xf]
    %s2780 = scalar_lea.vmem [#allocation4], 1148
    %v2781 = vld [vmem:[%s2780] ss:$2 sm:$0xff]
    %s2782 = scalar_lea.vmem [#allocation4], 1164
    %v2783 = vld [vmem:[%s2782] ss:$2 sm:$0xf]
    %s2784 = scalar_lea.vmem [#allocation4], 1149
    %v2785 = vld [vmem:[%s2784] ss:$2 sm:$0xff]
    %s2786 = scalar_lea.vmem [#allocation4], 1165
    %v2787 = vld [vmem:[%s2786] ss:$2 sm:$0xf]
    %v2788 = vmax.f32 %v2773, %v2777
    %v2789 = vmax.f32 %v2775, %v2779
    %v2790 = vmax.f32 %v2781, %v2785
    %v2791 = vmax.f32 %v2783, %v2787
    %v2792 = vmax.f32 %v2788, %v2790
    %v2793 = vmax.f32 %v2789, %v2791
    %v2794 = vpack.c.bf16 %v2793, %v2792
    %v2796 = vunpack.c.l.b16 %v2794
    %v2797 = vunpack.c.h.b16 %v2794
    %v2798 = vpack.c.b16 %v2796, %v2796
    %v2799 = vpack.c.b16 %v2797, %v2797
    %s2802 = scalar_lea.vmem %s5, 144
    %2803 = vst.msk [vmem:[%s2802] sm:$0xf] %vm2207, %v2798
    %2804 = vst.msk [vmem:[%s2802 + $0x4] sm:$0x3] %vm2209, %v2799
    %s2805 = scalar_lea.vmem [#allocation4], 1176
    %v2806 = vld [vmem:[%s2805] ss:$2 sm:$0xff]
    %s2807 = scalar_lea.vmem [#allocation4], 1192
    %v2808 = vld [vmem:[%s2807] ss:$2 sm:$0xf]
    %s2809 = scalar_lea.vmem [#allocation4], 1177
    %v2810 = vld [vmem:[%s2809] ss:$2 sm:$0xff]
    %s2811 = scalar_lea.vmem [#allocation4], 1193
    %v2812 = vld [vmem:[%s2811] ss:$2 sm:$0xf]
    %s2813 = scalar_lea.vmem [#allocation4], 1204
    %v2814 = vld [vmem:[%s2813] ss:$2 sm:$0xff]
    %s2815 = scalar_lea.vmem [#allocation4], 1220
    %v2816 = vld [vmem:[%s2815] ss:$2 sm:$0xf]
    %s2817 = scalar_lea.vmem [#allocation4], 1205
    %v2818 = vld [vmem:[%s2817] ss:$2 sm:$0xff]
    %s2819 = scalar_lea.vmem [#allocation4], 1221
    %v2820 = vld [vmem:[%s2819] ss:$2 sm:$0xf]
    %v2821 = vmax.f32 %v2806, %v2810
    %v2822 = vmax.f32 %v2808, %v2812
    %v2823 = vmax.f32 %v2814, %v2818
    %v2824 = vmax.f32 %v2816, %v2820
    %v2825 = vmax.f32 %v2821, %v2823
    %v2826 = vmax.f32 %v2822, %v2824
    %v2827 = vpack.c.bf16 %v2826, %v2825
    %v2829 = vunpack.c.l.b16 %v2827
    %v2830 = vunpack.c.h.b16 %v2827
    %v2831 = vpack.c.b16 %v2829, %v2829
    %v2832 = vpack.c.b16 %v2830, %v2830
    %s2835 = scalar_lea.vmem %s5, 152
    %2836 = vst.msk [vmem:[%s2835] sm:$0xf] %vm2207, %v2831
    %2837 = vst.msk [vmem:[%s2835 + $0x4] sm:$0x3] %vm2209, %v2832
    %s2838 = scalar_lea.vmem [#allocation4], 1232
    %v2839 = vld [vmem:[%s2838] ss:$2 sm:$0xff]
    %s2840 = scalar_lea.vmem [#allocation4], 1248
    %v2841 = vld [vmem:[%s2840] ss:$2 sm:$0xf]
    %s2842 = scalar_lea.vmem [#allocation4], 1233
    %v2843 = vld [vmem:[%s2842] ss:$2 sm:$0xff]
    %s2844 = scalar_lea.vmem [#allocation4], 1249
    %v2845 = vld [vmem:[%s2844] ss:$2 sm:$0xf]
    %s2846 = scalar_lea.vmem [#allocation4], 1260
    %v2847 = vld [vmem:[%s2846] ss:$2 sm:$0xff]
    %s2848 = scalar_lea.vmem [#allocation4], 1276
    %v2849 = vld [vmem:[%s2848] ss:$2 sm:$0xf]
    %s2850 = scalar_lea.vmem [#allocation4], 1261
    %v2851 = vld [vmem:[%s2850] ss:$2 sm:$0xff]
    %s2852 = scalar_lea.vmem [#allocation4], 1277
    %v2853 = vld [vmem:[%s2852] ss:$2 sm:$0xf]
    %v2854 = vmax.f32 %v2839, %v2843
    %v2855 = vmax.f32 %v2841, %v2845
    %v2856 = vmax.f32 %v2847, %v2851
    %v2857 = vmax.f32 %v2849, %v2853
    %v2858 = vmax.f32 %v2854, %v2856
    %v2859 = vmax.f32 %v2855, %v2857
    %v2860 = vpack.c.bf16 %v2859, %v2858
    %v2862 = vunpack.c.l.b16 %v2860
    %v2863 = vunpack.c.h.b16 %v2860
    %v2864 = vpack.c.b16 %v2862, %v2862
    %v2865 = vpack.c.b16 %v2863, %v2863
    %s2868 = scalar_lea.vmem %s5, 160
    %2869 = vst.msk [vmem:[%s2868] sm:$0xf] %vm2207, %v2864
    %2870 = vst.msk [vmem:[%s2868 + $0x4] sm:$0x3] %vm2209, %v2865
    %s2871 = scalar_lea.vmem [#allocation4], 1288
    %v2872 = vld [vmem:[%s2871] ss:$2 sm:$0xff]
    %s2873 = scalar_lea.vmem [#allocation4], 1304
    %v2874 = vld [vmem:[%s2873] ss:$2 sm:$0xf]
    %s2875 = scalar_lea.vmem [#allocation4], 1289
    %v2876 = vld [vmem:[%s2875] ss:$2 sm:$0xff]
    %s2877 = scalar_lea.vmem [#allocation4], 1305
    %v2878 = vld [vmem:[%s2877] ss:$2 sm:$0xf]
    %s2879 = scalar_lea.vmem [#allocation4], 1316
    %v2880 = vld [vmem:[%s2879] ss:$2 sm:$0xff]
    %s2881 = scalar_lea.vmem [#allocation4], 1332
    %v2882 = vld [vmem:[%s2881] ss:$2 sm:$0xf]
    %s2883 = scalar_lea.vmem [#allocation4], 1317
    %v2884 = vld [vmem:[%s2883] ss:$2 sm:$0xff]
    %s2885 = scalar_lea.vmem [#allocation4], 1333
    %v2886 = vld [vmem:[%s2885] ss:$2 sm:$0xf]
    %v2887 = vmax.f32 %v2872, %v2876
    %v2888 = vmax.f32 %v2874, %v2878
    %v2889 = vmax.f32 %v2880, %v2884
    %v2890 = vmax.f32 %v2882, %v2886
    %v2891 = vmax.f32 %v2887, %v2889
    %v2892 = vmax.f32 %v2888, %v2890
    %v2893 = vpack.c.bf16 %v2892, %v2891
    %v2895 = vunpack.c.l.b16 %v2893
    %v2896 = vunpack.c.h.b16 %v2893
    %v2897 = vpack.c.b16 %v2895, %v2895
    %v2898 = vpack.c.b16 %v2896, %v2896
    %s2901 = scalar_lea.vmem %s5, 168
    %2902 = vst.msk [vmem:[%s2901] sm:$0xf] %vm2207, %v2897
    %2903 = vst.msk [vmem:[%s2901 + $0x4] sm:$0x3] %vm2209, %v2898
    %s2904 = scalar_lea.vmem [#allocation4], 1344
    %v2905 = vld [vmem:[%s2904] ss:$2 sm:$0xff]
    %s2906 = scalar_lea.vmem [#allocation4], 1360
    %v2907 = vld [vmem:[%s2906] ss:$2 sm:$0xf]
    %s2908 = scalar_lea.vmem [#allocation4], 1345
    %v2909 = vld [vmem:[%s2908] ss:$2 sm:$0xff]
    %s2910 = scalar_lea.vmem [#allocation4], 1361
    %v2911 = vld [vmem:[%s2910] ss:$2 sm:$0xf]
    %s2912 = scalar_lea.vmem [#allocation4], 1372
    %v2913 = vld [vmem:[%s2912] ss:$2 sm:$0xff]
    %s2914 = scalar_lea.vmem [#allocation4], 1388
    %v2915 = vld [vmem:[%s2914] ss:$2 sm:$0xf]
    %s2916 = scalar_lea.vmem [#allocation4], 1373
    %v2917 = vld [vmem:[%s2916] ss:$2 sm:$0xff]
    %s2918 = scalar_lea.vmem [#allocation4], 1389
    %v2919 = vld [vmem:[%s2918] ss:$2 sm:$0xf]
    %v2920 = vmax.f32 %v2905, %v2909
    %v2921 = vmax.f32 %v2907, %v2911
    %v2922 = vmax.f32 %v2913, %v2917
    %v2923 = vmax.f32 %v2915, %v2919
    %v2924 = vmax.f32 %v2920, %v2922
    %v2925 = vmax.f32 %v2921, %v2923
    %v2926 = vpack.c.bf16 %v2925, %v2924
    %v2928 = vunpack.c.l.b16 %v2926
    %v2929 = vunpack.c.h.b16 %v2926
    %v2930 = vpack.c.b16 %v2928, %v2928
    %v2931 = vpack.c.b16 %v2929, %v2929
    %s2934 = scalar_lea.vmem %s5, 176
    %2935 = vst.msk [vmem:[%s2934] sm:$0xf] %vm2207, %v2930
    %2936 = vst.msk [vmem:[%s2934 + $0x4] sm:$0x3] %vm2209, %v2931
    %s2937 = scalar_lea.vmem [#allocation4], 1400
    %v2938 = vld [vmem:[%s2937] ss:$2 sm:$0xff]
    %s2939 = scalar_lea.vmem [#allocation4], 1416
    %v2940 = vld [vmem:[%s2939] ss:$2 sm:$0xf]
    %s2941 = scalar_lea.vmem [#allocation4], 1401
    %v2942 = vld [vmem:[%s2941] ss:$2 sm:$0xff]
    %s2943 = scalar_lea.vmem [#allocation4], 1417
    %v2944 = vld [vmem:[%s2943] ss:$2 sm:$0xf]
    %s2945 = scalar_lea.vmem [#allocation4], 1428
    %v2946 = vld [vmem:[%s2945] ss:$2 sm:$0xff]
    %s2947 = scalar_lea.vmem [#allocation4], 1444
    %v2948 = vld [vmem:[%s2947] ss:$2 sm:$0xf]
    %s2949 = scalar_lea.vmem [#allocation4], 1429
    %v2950 = vld [vmem:[%s2949] ss:$2 sm:$0xff]
    %s2951 = scalar_lea.vmem [#allocation4], 1445
    %v2952 = vld [vmem:[%s2951] ss:$2 sm:$0xf]
    %v2953 = vmax.f32 %v2938, %v2942
    %v2954 = vmax.f32 %v2940, %v2944
    %v2955 = vmax.f32 %v2946, %v2950
    %v2956 = vmax.f32 %v2948, %v2952
    %v2957 = vmax.f32 %v2953, %v2955
    %v2958 = vmax.f32 %v2954, %v2956
    %v2959 = vpack.c.bf16 %v2958, %v2957
    %v2961 = vunpack.c.l.b16 %v2959
    %v2962 = vunpack.c.h.b16 %v2959
    %v2963 = vpack.c.b16 %v2961, %v2961
    %v2964 = vpack.c.b16 %v2962, %v2962
    %s2967 = scalar_lea.vmem %s5, 184
    %2968 = vst.msk [vmem:[%s2967] sm:$0xf] %vm2207, %v2963
    %2969 = vst.msk [vmem:[%s2967 + $0x4] sm:$0x3] %vm2209, %v2964
    // Predicated region
    $region55: #{mnist_forward.2} parent=1 // pred_check
      _
    $region56: #{mnist_forward.2} parent=1 // pred_check_branch
      %2971 = sbr.rel (0) target = $region58
    $region57: #{mnist_forward.2} parent=1 // pred_region
      _
    $region58: #{mnist_forward.2} parent=1 // pred_fallthru
      _
    // Predicated region
    $region59: #{mnist_forward.2} parent=1 // pred_check
      _
    $region60: #{mnist_forward.2} parent=1 // pred_check_branch
      %2973 = sbr.rel (0) target = $region62
    $region61: #{mnist_forward.2} parent=1 // pred_region
      _
    $region62: #{mnist_forward.2} parent=1 // pred_fallthru
      _
    %2974 = vsyncpa [#allocation6], 1
    %2975 = vsyncpa [#allocation8], 1

</llo_original>
